<compile_context>
chip_gen: v7x
topology: tpu7x:2x2x1
jax: 0.10.0
libtpu: 0.0.40
codegen_flags: <defaults>
</compile_context>

<pallas_src>
import math
import functools

import jax
import jax.numpy as jnp
from jax.experimental import pallas as pl
from jax.experimental.pallas import tpu as pltpu


_LANE = 128


def _round_up(v, m):
    return -(-v // m) * m


# ----------------------------------------------------------------------------
# Fused kernel.
# Grid: (node_slabs, num_edge_tiles) -> ("parallel", "arbitrary").
# ----------------------------------------------------------------------------
def dss_conf_kernel(eps_ref, x_ref, edges_ref,
                    mw1_ref, mb1_ref, mw2_ref, mb2_ref,
                    l1w_ref, l2w_ref, l2b_ref, lw_ref, lb_ref,
                    cnb_ref, gidx_ref, eemb_ref,
                    gw1_ref, gb1_ref, gbn1g_ref, gbn1b_ref,
                    gw2_ref, gb2_ref, bng_ref, bnb_ref,
                    out_ref, xl_scr, acc_scr,
                    *, cutoff, residual, use_conf, use_graph, num_graph_nodes):
    i = pl.program_id(0)                         # node slab
    k = pl.program_id(1)                         # edge tile (reduction axis)
    n_nodes, h_pad = x_ref.shape
    tn = out_ref.shape[0]
    row0 = pl.multiple_of(i * tn, 8)             # slab row offset (tn % 8 == 0 or i == 0)

    if use_conf:
        te, p_cols = edges_ref.shape

        @pl.when(k == 0)
        def _init():
            # lin1 (no bias), cached in bf16 for the bf16 gather matmuls below.
            xl_scr[...] = jnp.dot(
                x_ref[...].astype(jnp.bfloat16),
                l1w_ref[...].astype(jnp.bfloat16),
                preferred_element_type=jnp.float32).astype(jnp.bfloat16)
            acc_scr[...] = jnp.zeros_like(acc_scr)

        edges = edges_ref[...]                                   # [TE, P] f32
        ew = edges[:, p_cols - 3:p_cols - 2]                     # [TE, 1]
        src = edges[:, p_cols - 2:p_cols - 1].astype(jnp.int32)  # [TE, 1] exact ints
        dst = edges[:, p_cols - 1:p_cols].astype(jnp.int32)      # [TE, 1] (-1 = padded edge)

        # cosine cutoff (matches PyG CFConv; no explicit ew<cutoff mask, by spec)
        C = 0.5 * (jnp.cos(ew * (math.pi / cutoff)) + 1.0)

        # filter MLP directly on the packed tile: rows >= num_gaussians of
        # mw1 are zero, so the ew/src/dst columns do not contaminate the dot.
        t = jnp.dot(edges, mw1_ref[...],
                    preferred_element_type=jnp.float32) + mb1_ref[...]
        t = jnp.maximum(t, 0.0)
        W = (jnp.dot(t, mw2_ref[...],
                     preferred_element_type=jnp.float32) + mb2_ref[...]) * C   # [TE, F]

        # gather x_j = lin1(x)[src] via in-register bf16 one-hot (MXU)
        lane_n = jax.lax.broadcasted_iota(jnp.int32, (te, n_nodes), 1)
        src_oh = (lane_n == src).astype(jnp.bfloat16)                           # [TE, N]
        xj = jnp.dot(src_oh, xl_scr[...],
                     preferred_element_type=jnp.float32)                        # [TE, F] f32

        msg = (xj * W).astype(jnp.bfloat16)                                     # bf16 for MXU

        # scatter-add restricted to this slab's node rows; contracting dim 0 of
        # the one-hot (trans-LHS) is MXU-native -> no XLU transpose.
        lane_tn = jax.lax.broadcasted_iota(jnp.int32, (te, tn), 1) + i * tn
        dst_oh = (lane_tn == dst).astype(jnp.bfloat16)                          # [TE, TN]
        acc_scr[...] += jax.lax.dot_general(
            dst_oh, msg, (((0,), (0,)), ((), ())),
            preferred_element_type=jnp.float32)                                  # [TN, F]

    @pl.when(k == pl.num_programs(1) - 1)
    def _finalize():
        x_slab = x_ref[pl.ds(row0, tn), :]                                      # [TN, H]
        if residual:
            result = x_slab
        else:
            result = jnp.zeros((tn, h_pad), jnp.float32)

        if use_conf:
            # CFConv.lin2 -> F.relu -> self.lin, fused with the residual add
            h = jnp.dot(acc_scr[...], l2w_ref[...],
                        preferred_element_type=jnp.float32) + l2b_ref[...]
            h = jnp.maximum(h, 0.0)
            h = jnp.dot(h, lw_ref[...],
                        preferred_element_type=jnp.float32) + lb_ref[...]
            result = result + h

        if use_graph:
            m = num_graph_nodes
            NEG = jnp.float32(-1e30)
            x_full = x_ref[...]
            cnb_full = cnb_ref[...]                                             # [N, 1] int32

            # scatter-max onto graph nodes: short loop over tiny M, 2-D masked
            # maxes only (no [N, M, H] broadcast intermediate).
            rows = []
            for g in range(m):
                sel = cnb_full == g                                             # [N, 1]
                seg_max = jnp.max(jnp.where(sel, x_full, NEG),
                                  axis=0, keepdims=True)                        # [1, H]
                cnt = jnp.sum(sel.astype(jnp.float32), axis=0, keepdims=True)   # [1, 1]
                rows.append(jnp.where(cnt > 0.0, seg_max, 0.0))  # PyG: empty segment -> 0
            x_agg = jnp.concatenate(rows, axis=0)                               # [M, H]

            # GINConv message / aggregate with in-register edge one-hots (tiny)
            srcg = gidx_ref[:, 0:1]
            dstg = gidx_ref[:, 1:2]
            n_eg = gidx_ref.shape[0]
            lane_m = jax.lax.broadcasted_iota(jnp.int32, (n_eg, m), 1)
            srcg_oh = (lane_m == srcg).astype(jnp.float32)                      # [Eg, M]
            dstg_oh = (lane_m == dstg).astype(jnp.float32)                      # [Eg, M]

            xjg = jnp.dot(srcg_oh, x_agg, preferred_element_type=jnp.float32)
            msgg = jnp.maximum(xjg + eemb_ref[...], 0.0)
            agg = jax.lax.dot_general(dstg_oh, msgg, (((0,), (0,)), ((), ())),
                                      preferred_element_type=jnp.float32)       # [M, H]

            eps = eps_ref[0, 0]                                                 # SMEM scalar
            gin_in = (1.0 + eps) * x_agg + agg

            # GIN mlp: Linear -> BatchNorm1d (batch stats) -> ReLU -> Linear
            hg = jnp.dot(gin_in, gw1_ref[...],
                         preferred_element_type=jnp.float32) + gb1_ref[...]
            mu = jnp.mean(hg, axis=0, keepdims=True)
            var = jnp.mean((hg - mu) ** 2, axis=0, keepdims=True)
            hg = (hg - mu) * jax.lax.rsqrt(var + 1e-5) * gbn1g_ref[...] + gbn1b_ref[...]
            hg = jnp.maximum(hg, 0.0)
            hg = jnp.dot(hg, gw2_ref[...],
                         preferred_element_type=jnp.float32) + gb2_ref[...]

            # outer BatchNorm1d (batch stats)
            mu2 = jnp.mean(hg, axis=0, keepdims=True)
            var2 = jnp.mean((hg - mu2) ** 2, axis=0, keepdims=True)
            hg = (hg - mu2) * jax.lax.rsqrt(var2 + 1e-5) * bng_ref[...] + bnb_ref[...]

            # x_agg[conf_node_batch] for this slab's rows, fused with the add
            cnb_slab = cnb_ref[pl.ds(row0, tn), :]                              # [TN, 1]
            lane_m2 = jax.lax.broadcasted_iota(jnp.int32, (tn, m), 1)
            mask_tm = (lane_m2 == cnb_slab).astype(jnp.float32)                 # [TN, M]
            result = result + jnp.dot(mask_tm, hg,
                                      preferred_element_type=jnp.float32)

        out_ref[...] = result


# ----------------------------------------------------------------------------
# Wrapper / parameter setup (plain-JAX glue)
# ----------------------------------------------------------------------------
def _linear_params(key, n_in, n_out, bias=True):
    kw, kb = jax.random.split(key)
    w = jax.random.normal(kw, (n_in, n_out), jnp.float32) * (1.0 / math.sqrt(n_in))
    b = (jax.random.normal(kb, (1, n_out), jnp.float32) * 0.01) if bias else None
    return w, b


def init_params(key, hidden, num_gaussians, num_filters, bond_vocab=(5, 6, 2)):
    keys = jax.random.split(key, 12)
    p = {}
    # conf branch (CFConv + lin)
    p["mlp_w1"], p["mlp_b1"] = _linear_params(keys[0], num_gaussians, num_filters)
    p["mlp_w2"], p["mlp_b2"] = _linear_params(keys[1], num_filters, num_filters)
    p["lin1_w"], _ = _linear_params(keys[2], hidden, num_filters, bias=False)
    p["lin2_w"], p["lin2_b"] = _linear_params(keys[3], num_filters, hidden)
    p["lin_w"], p["lin_b"] = _linear_params(keys[4], hidden, hidden)
    # graph branch (GINConv + BN)
    p["gin_eps"] = jnp.zeros((1, 1), jnp.float32)
    p["gin_w1"], p["gin_b1"] = _linear_params(keys[5], hidden, hidden)
    p["gin_bn_g"] = jnp.ones((1, hidden), jnp.float32)
    p["gin_bn_b"] = jnp.zeros((1, hidden), jnp.float32)
    p["gin_w2"], p["gin_b2"] = _linear_params(keys[6], hidden, hidden)
    p["bn_g"] = jnp.ones((1, hidden), jnp.float32)
    p["bn_b"] = jnp.zeros((1, hidden), jnp.float32)
    # BondEncoder embedding tables (sum of per-feature embeddings)
    p["bond_tables"] = [
        jax.random.normal(k, (v, hidden), jnp.float32) * 0.1
        for k, v in zip(jax.random.split(keys[7], len(bond_vocab)), bond_vocab)
    ]
    return p


def _pad2(a, rows, cols):
    a = a.astype(jnp.float32)
    return jnp.pad(a, ((0, rows - a.shape[0]), (0, cols - a.shape[1])))


def _auto_edge_tile(requested, n_edges, n_nodes, packed_cols, f_pad,
                    budget_bytes=24 * 1024 * 1024):
    # Rough per-edge-row VMEM cost: double-buffered packed input, two bf16
    # one-hot intermediates and a few f32 [TE, F] temporaries.
    per_edge = 8 * packed_cols + 4 * n_nodes + 16 * f_pad + 64
    cap = max(8, (budget_bytes // per_edge) // 8 * 8)
    te = min(max(8, (requested // 8) * 8), cap, _round_up(n_edges, 8))
    return max(8, te)


def dss_conf_forward(params, x, conf_node_batch, edge_index_conf, edge_weight_conf,
                     edge_attr_conf, edge_index_graph, edge_attr_graph, *,
                     cutoff, num_graph_nodes, edge_tile=512, node_slabs=1,
                     use_conf=True, use_graph=True, residual=True):
    N, H = x.shape
    F = params["lin1_w"].shape[1]
    G = params["mlp_w1"].shape[0]
    H_pad = _round_up(H, _LANE)
    F_pad = _round_up(F, _LANE)
    P = _round_up(G + 3, 8)                      # packed edge columns: [ea | 0 | ew src dst]
    M = int(num_graph_nodes)
    Eg = int(edge_index_graph.shape[1])

    # node-slab ("parallel") axis: only if N splits into equal 8-row-aligned slabs
    if node_slabs < 1 or N % node_slabs != 0 or (N // node_slabs) % 8 != 0:
        node_slabs = 1
    TN = N // node_slabs

    # ---- conf-branch edge packing (single wide DMA per grid step) ----
    if use_conf:
        E = int(edge_index_conf.shape[1])
        TE = _auto_edge_tile(edge_tile, E, N, P, F_pad)
        num_tiles = -(-E // TE)
        E_pad = num_tiles * TE
        cols = [edge_attr_conf.astype(jnp.float32)]
        if P - 3 - G > 0:
            cols.append(jnp.zeros((E, P - 3 - G), jnp.float32))
        cols += [edge_weight_conf.astype(jnp.float32)[:, None],
                 edge_index_conf[0].astype(jnp.float32)[:, None],   # src (exact in f32)
                 edge_index_conf[1].astype(jnp.float32)[:, None]]   # dst
        packed = jnp.concatenate(cols, axis=1)
        if E_pad > E:
            pad_rows = jnp.zeros((E_pad - E, P), jnp.float32).at[:, P - 1].set(-1.0)
            packed = jnp.concatenate([packed, pad_rows], axis=0)    # padded edges: dst = -1
    else:
        TE, num_tiles, E_pad = 8, 1, 8
        packed = jnp.zeros((E_pad, P), jnp.float32).at[:, P - 1].set(-1.0)

    # ---- zero-pad features / weights to lane-dense widths ----
    x_p = _pad2(x, N, H_pad)
    mw1 = _pad2(params["mlp_w1"], P, F_pad)          # pad rows make packed cols inert
    mb1 = _pad2(params["mlp_b1"], 1, F_pad)
    mw2 = _pad2(params["mlp_w2"], F_pad, F_pad)
    mb2 = _pad2(params["mlp_b2"], 1, F_pad)
    l1w = _pad2(params["lin1_w"], H_pad, F_pad)
    l2w = _pad2(params["lin2_w"], F_pad, H_pad)
    l2b = _pad2(params["lin2_b"], 1, H_pad)
    lw = _pad2(params["lin_w"], H_pad, H_pad)
    lb = _pad2(params["lin_b"], 1, H_pad)

    cnb = conf_node_batch.astype(jnp.int32).reshape(N, 1)
    gidx = jnp.stack([edge_index_graph[0], edge_index_graph[1]],
                     axis=1).astype(jnp.int32)                       # [Eg, 2]
    # BondEncoder: sum of per-feature embedding lookups (wrapper glue)
    edge_emb = sum(jnp.take(tbl, edge_attr_graph[:, f], axis=0)
                   for f, tbl in enumerate(params["bond_tables"]))   # [Eg, H]
    eemb = _pad2(edge_emb, Eg, H_pad)
    gw1 = _pad2(params["gin_w1"], H_pad, H_pad)
    gb1 = _pad2(params["gin_b1"], 1, H_pad)
    gbn1g = _pad2(params["gin_bn_g"], 1, H_pad)
    gbn1b = _pad2(params["gin_bn_b"], 1, H_pad)
    gw2 = _pad2(params["gin_w2"], H_pad, H_pad)
    gb2 = _pad2(params["gin_b2"], 1, H_pad)
    bng = _pad2(params["bn_g"], 1, H_pad)
    bnb = _pad2(params["bn_b"], 1, H_pad)
    eps = params["gin_eps"].astype(jnp.float32).reshape(1, 1)

    # ---- VMEM budget / cost estimate from actual shapes ----
    weight_elems = (P * F_pad + F_pad * F_pad + H_pad * F_pad + F_pad * H_pad
                    + 3 * H_pad * H_pad + Eg * H_pad + Eg * 2 + N + 10 * H_pad + 2 * F_pad)
    vmem_est = (2 * N * H_pad * 4 + 2 * TE * P * 4 + 2 * TN * H_pad * 4
                + N * F_pad * 2 + TN * F_pad * 4
                + 2 * weight_elems * 4
                + TE * N * 2 * 2 + TE * TN * 2 + 3 * TE * F_pad * 4)
    vmem_limit = int(min(120 * 1024 * 1024, max(32 * 1024 * 1024, 2 * vmem_est)))

    flops = int(node_slabs * (2 * N * H_pad * F_pad
                              + E_pad * (2 * P * F_pad + 2 * F_pad * F_pad
                                         + 2 * N * F_pad + 2 * TN * F_pad)
                              + 2 * TN * F_pad * H_pad + 2 * TN * H_pad * H_pad))
    bytes_accessed = int(4 * (2 * N * H_pad + E_pad * P + weight_elems))
    transcendentals = int(node_slabs * E_pad)

    def _res(shape):
        return pl.BlockSpec(shape, lambda i, k: (0, 0))

    in_specs = [
        pl.BlockSpec(memory_space=pltpu.MemorySpace.SMEM),          # gin eps scalar
        _res((N, H_pad)),                                           # x (resident)
        pl.BlockSpec((TE, P), lambda i, k: (k, 0)),                 # packed edge tile
        _res(mw1.shape), _res(mb1.shape), _res(mw2.shape), _res(mb2.shape),
        _res(l1w.shape), _res(l2w.shape), _res(l2b.shape),
        _res(lw.shape), _res(lb.shape),
        _res((N, 1)),                                               # conf_node_batch
        _res((Eg, 2)),                                              # graph edge index
        _res((Eg, H_pad)),                                          # bond embeddings
        _res(gw1.shape), _res(gb1.shape), _res(gbn1g.shape), _res(gbn1b.shape),
        _res(gw2.shape), _res(gb2.shape), _res(bng.shape), _res(bnb.shape),
    ]

    out_pad = pl.pallas_call(
        functools.partial(dss_conf_kernel,
                          cutoff=float(cutoff), residual=bool(residual),
                          use_conf=bool(use_conf), use_graph=bool(use_graph),
                          num_graph_nodes=M),
        out_shape=jax.ShapeDtypeStruct((N, H_pad), jnp.float32),
        grid=(node_slabs, num_tiles),
        in_specs=in_specs,
        out_specs=pl.BlockSpec((TN, H_pad), lambda i, k: (i, 0)),
        scratch_shapes=[pltpu.VMEM((N, F_pad), jnp.bfloat16),       # lin1(x) cache (bf16)
                        pltpu.VMEM((TN, F_pad), jnp.float32)],      # per-slab scatter acc
        compiler_params=pltpu.CompilerParams(
            dimension_semantics=("parallel", "arbitrary"),
            vmem_limit_bytes=vmem_limit),
        cost_estimate=pl.CostEstimate(flops=flops,
                                      transcendentals=transcendentals,
                                      bytes_accessed=bytes_accessed),
    )(eps, x_p, packed, mw1, mb1, mw2, mb2, l1w, l2w, l2b, lw, lb,
      cnb, gidx, eemb, gw1, gb1, gbn1g, gbn1b, gw2, gb2, bng, bnb)

    return out_pad[:, :H]


# ----------------------------------------------------------------------------
# Pure-JAX reference (forward-pass semantics of the PyTorch module)
# ----------------------------------------------------------------------------
def dss_conf_reference(params, x, cnb, eic, ewc, eac, eig, eag, *,
                       cutoff, num_graph_nodes, use_conf=True, use_graph=True,
                       residual=True):
    N, H = x.shape
    M = int(num_graph_nodes)
    out = x if residual else jnp.zeros_like(x)
    if use_conf:
        src, dst = eic[0], eic[1]
        C = 0.5 * (jnp.cos(ewc * (math.pi / cutoff)) + 1.0)
        t = jnp.maximum(eac @ params["mlp_w1"] + params["mlp_b1"], 0.0)
        W = (t @ params["mlp_w2"] + params["mlp_b2"]) * C[:, None]
        xl = x @ params["lin1_w"]
        msg = xl[src] * W
        agg = jnp.zeros((N, xl.shape[1]), jnp.float32).at[dst].add(msg)
        h = agg @ params["lin2_w"] + params["lin2_b"]
        h = jnp.maximum(h, 0.0)
        h = h @ params["lin_w"] + params["lin_b"]
        out = out + h
    if use_graph:
        x_agg = jnp.full((M, H), -jnp.inf, jnp.float32).at[cnb].max(x)
        x_agg = jnp.where(jnp.isfinite(x_agg), x_agg, 0.0)
        edge_emb = sum(jnp.take(tbl, eag[:, f], axis=0)
                       for f, tbl in enumerate(params["bond_tables"]))
        srcg, dstg = eig[0], eig[1]
        msgg = jnp.maximum(x_agg[srcg] + edge_emb, 0.0)
        aggg = jnp.zeros((M, H), jnp.float32).at[dstg].add(msgg)
        gin_in = (1.0 + params["gin_eps"][0, 0]) * x_agg + aggg
        hg = gin_in @ params["gin_w1"] + params["gin_b1"]
        mu = hg.mean(0, keepdims=True)
        var = ((hg - mu) ** 2).mean(0, keepdims=True)
        hg = (hg - mu) / jnp.sqrt(var + 1e-5) * params["gin_bn_g"] + params["gin_bn_b"]
        hg = jnp.maximum(hg, 0.0)
        hg = hg @ params["gin_w2"] + params["gin_b2"]
        mu2 = hg.mean(0, keepdims=True)
        var2 = ((hg - mu2) ** 2).mean(0, keepdims=True)
        hg = (hg - mu2) / jnp.sqrt(var2 + 1e-5) * params["bn_g"] + params["bn_b"]
        out = out + hg[cnb]
    return out


# ----------------------------------------------------------------------------
if __name__ == "__main__":
    hidden = 32
    num_gaussians = 16
    num_filters = 32
    cutoff = 10.0

    N = 16          # conformer nodes
    M = 4           # graph nodes
    E_c = 40        # conf edges (pads to 48 with edge_tile=16 -> 3 edge tiles)
    E_g = 8         # graph edges

    key = jax.random.PRNGKey(0)
    kp, kx, ke1, ke2, kw, ka, kg1, kg2, kb = jax.random.split(key, 9)

    params = init_params(kp, hidden, num_gaussians, num_filters)

    x = jax.random.normal(kx, (N, hidden), jnp.float32)
    conf_node_batch = jnp.repeat(jnp.arange(M, dtype=jnp.int32), N // M)        # [N]
    edge_index_conf = jnp.stack([
        jax.random.randint(ke1, (E_c,), 0, N, dtype=jnp.int32),
        jax.random.randint(ke2, (E_c,), 0, N, dtype=jnp.int32)])                # [2, Ec]
    edge_weight_conf = jax.random.uniform(kw, (E_c,), jnp.float32,
                                          minval=0.1, maxval=cutoff)            # [Ec]
    edge_attr_conf = jax.random.normal(ka, (E_c, num_gaussians), jnp.float32)   # [Ec, G]
    edge_index_graph = jnp.stack([
        jax.random.randint(kg1, (E_g,), 0, M, dtype=jnp.int32),
        jax.random.randint(kg2, (E_g,), 0, M, dtype=jnp.int32)])                # [2, Eg]
    edge_attr_graph = jnp.stack([
        jax.random.randint(jax.random.fold_in(kb, f), (E_g,), 0, v, dtype=jnp.int32)
        for f, v in enumerate((5, 6, 2))], axis=1)                              # [Eg, 3]

    out = dss_conf_forward(
        params, x, conf_node_batch, edge_index_conf, edge_weight_conf,
        edge_attr_conf, edge_index_graph, edge_attr_graph,
        cutoff=cutoff, num_graph_nodes=M, edge_tile=16, node_slabs=2,
        use_conf=True, use_graph=True, residual=True)
    jax.block_until_ready(out)

    ref = dss_conf_reference(
        params, x, conf_node_batch, edge_index_conf, edge_weight_conf,
        edge_attr_conf, edge_index_graph, edge_attr_graph,
        cutoff=cutoff, num_graph_nodes=M,
        use_conf=True, use_graph=True, residual=True)

    assert out.shape == (N, hidden) and out.dtype == jnp.float32
    assert bool(jnp.all(jnp.isfinite(out)))
    err = float(jnp.max(jnp.abs(out - ref)))
    assert err < 1e-1, f"max |pallas - reference| = {err}"
    print("KERNEL_OK")
</pallas_src>

<mosaic_0001>
module attributes {stable_mosaic.version = 11 : i64} {
  func.func @dss_conf_kernel(%arg0: i32, %arg1: i32, %arg2: memref<1x1xf32, #tpu.memory_space<smem>>, %arg3: memref<16x128xf32, #tpu.memory_space<vmem>>, %arg4: memref<16x24xf32, #tpu.memory_space<vmem>>, %arg5: memref<24x128xf32, #tpu.memory_space<vmem>>, %arg6: memref<1x128xf32, #tpu.memory_space<vmem>>, %arg7: memref<128x128xf32, #tpu.memory_space<vmem>>, %arg8: memref<1x128xf32, #tpu.memory_space<vmem>>, %arg9: memref<128x128xf32, #tpu.memory_space<vmem>>, %arg10: memref<128x128xf32, #tpu.memory_space<vmem>>, %arg11: memref<1x128xf32, #tpu.memory_space<vmem>>, %arg12: memref<128x128xf32, #tpu.memory_space<vmem>>, %arg13: memref<1x128xf32, #tpu.memory_space<vmem>>, %arg14: memref<16x1xi32, #tpu.memory_space<vmem>>, %arg15: memref<8x2xi32, #tpu.memory_space<vmem>>, %arg16: memref<8x128xf32, #tpu.memory_space<vmem>>, %arg17: memref<128x128xf32, #tpu.memory_space<vmem>>, %arg18: memref<1x128xf32, #tpu.memory_space<vmem>>, %arg19: memref<1x128xf32, #tpu.memory_space<vmem>>, %arg20: memref<1x128xf32, #tpu.memory_space<vmem>>, %arg21: memref<128x128xf32, #tpu.memory_space<vmem>>, %arg22: memref<1x128xf32, #tpu.memory_space<vmem>>, %arg23: memref<1x128xf32, #tpu.memory_space<vmem>>, %arg24: memref<1x128xf32, #tpu.memory_space<vmem>>, %arg25: memref<8x128xf32, #tpu.memory_space<vmem>>, %arg26: memref<16x128xbf16, #tpu.memory_space<vmem>>, %arg27: memref<8x128xf32, #tpu.memory_space<vmem>>) attributes {dimension_semantics = [#tpu.dimension_semantics<parallel>, #tpu.dimension_semantics<arbitrary>], iteration_bounds = array<i64: 2, 3>, scalar_prefetch = 0 : i64, scratch_operands = 2 : i64, tpu.core_type = #tpu.core_type<tc>, window_params = [{transform_indices = @transform_0, window_bounds = array<i64: 1, 1>}, {pipeline_mode = #tpu.pipeline_mode<synchronous>, transform_indices = @transform_1, window_bounds = array<i64: 16, 128>}, {transform_indices = @transform_2, window_bounds = array<i64: 16, 24>}, {pipeline_mode = #tpu.pipeline_mode<synchronous>, transform_indices = @transform_3, window_bounds = array<i64: 24, 128>}, {pipeline_mode = #tpu.pipeline_mode<synchronous>, transform_indices = @transform_4, window_bounds = array<i64: 1, 128>}, {pipeline_mode = #tpu.pipeline_mode<synchronous>, transform_indices = @transform_5, window_bounds = array<i64: 128, 128>}, {pipeline_mode = #tpu.pipeline_mode<synchronous>, transform_indices = @transform_6, window_bounds = array<i64: 1, 128>}, {pipeline_mode = #tpu.pipeline_mode<synchronous>, transform_indices = @transform_7, window_bounds = array<i64: 128, 128>}, {pipeline_mode = #tpu.pipeline_mode<synchronous>, transform_indices = @transform_8, window_bounds = array<i64: 128, 128>}, {pipeline_mode = #tpu.pipeline_mode<synchronous>, transform_indices = @transform_9, window_bounds = array<i64: 1, 128>}, {pipeline_mode = #tpu.pipeline_mode<synchronous>, transform_indices = @transform_10, window_bounds = array<i64: 128, 128>}, {pipeline_mode = #tpu.pipeline_mode<synchronous>, transform_indices = @transform_11, window_bounds = array<i64: 1, 128>}, {pipeline_mode = #tpu.pipeline_mode<synchronous>, transform_indices = @transform_12, window_bounds = array<i64: 16, 1>}, {pipeline_mode = #tpu.pipeline_mode<synchronous>, transform_indices = @transform_13, window_bounds = array<i64: 8, 2>}, {pipeline_mode = #tpu.pipeline_mode<synchronous>, transform_indices = @transform_14, window_bounds = array<i64: 8, 128>}, {pipeline_mode = #tpu.pipeline_mode<synchronous>, transform_indices = @transform_15, window_bounds = array<i64: 128, 128>}, {pipeline_mode = #tpu.pipeline_mode<synchronous>, transform_indices = @transform_16, window_bounds = array<i64: 1, 128>}, {pipeline_mode = #tpu.pipeline_mode<synchronous>, transform_indices = @transform_17, window_bounds = array<i64: 1, 128>}, {pipeline_mode = #tpu.pipeline_mode<synchronous>, transform_indices = @transform_18, window_bounds = array<i64: 1, 128>}, {pipeline_mode = #tpu.pipeline_mode<synchronous>, transform_indices = @transform_19, window_bounds = array<i64: 128, 128>}, {pipeline_mode = #tpu.pipeline_mode<synchronous>, transform_indices = @transform_20, window_bounds = array<i64: 1, 128>}, {pipeline_mode = #tpu.pipeline_mode<synchronous>, transform_indices = @transform_21, window_bounds = array<i64: 1, 128>}, {pipeline_mode = #tpu.pipeline_mode<synchronous>, transform_indices = @transform_22, window_bounds = array<i64: 1, 128>}, {transform_indices = @transform_23, window_bounds = array<i64: 8, 128>}]} {
    %c8_i32 = arith.constant 8 : i32
    %0 = arith.muli %arg0, %c8_i32 : i32
    %1 = tpu.assume_multiple %0, 8 : i32
    %c0_i32 = arith.constant 0 : i32
    %2 = arith.cmpi eq, %arg1, %c0_i32 : i32
    %3 = arith.extui %2 : i1 to i32
    %c0_i32_0 = arith.constant 0 : i32
    %4 = arith.cmpi ne, %3, %c0_i32_0 : i32
    scf.if %4 {
      %c0_25 = arith.constant 0 : index
      %c0_26 = arith.constant 0 : index
      %58 = vector.load %arg3[%c0_25, %c0_26] : memref<16x128xf32, #tpu.memory_space<vmem>>, vector<16x128xf32>
      %59 = arith.truncf %58 : vector<16x128xf32> to vector<16x128xbf16>
      %c0_27 = arith.constant 0 : index
      %c0_28 = arith.constant 0 : index
      %60 = vector.load %arg9[%c0_27, %c0_28] : memref<128x128xf32, #tpu.memory_space<vmem>>, vector<128x128xf32>
      %61 = arith.truncf %60 : vector<128x128xf32> to vector<128x128xbf16>
      %cst_29 = arith.constant dense<0.000000e+00> : vector<16x128xf32>
      %62 = tpu.matmul %59, %61, %cst_29 {dimension_numbers = #tpu.dot_dimension_numbers<[1], [0], [0], [1], [0, 0, 1, 1], [], []>} : vector<16x128xbf16>, vector<128x128xbf16>, vector<16x128xf32> -> vector<16x128xf32>
      %63 = arith.truncf %62 : vector<16x128xf32> to vector<16x128xbf16>
      %c0_30 = arith.constant 0 : index
      %c0_31 = arith.constant 0 : index
      %64 = vector.load %arg26[%c0_30, %c0_31] : memref<16x128xbf16, #tpu.memory_space<vmem>>, vector<16x128xbf16>
      tpu.vector_store %arg26[%c0_30, %c0_31], %63 {strides = array<i32>} : memref<16x128xbf16, #tpu.memory_space<vmem>>, vector<16x128xbf16>,
      %cst_32 = arith.constant 0.000000e+00 : f32
      %65 = vector.broadcast %cst_32 : f32 to vector<8x128xf32>
      %c0_33 = arith.constant 0 : index
      %c0_34 = arith.constant 0 : index
      %66 = vector.load %arg27[%c0_33, %c0_34] : memref<8x128xf32, #tpu.memory_space<vmem>>, vector<8x128xf32>
      tpu.vector_store %arg27[%c0_33, %c0_34], %65 {strides = array<i32>} : memref<8x128xf32, #tpu.memory_space<vmem>>, vector<8x128xf32>,
    } else {
    }
    %c0 = arith.constant 0 : index
    %c0_1 = arith.constant 0 : index
    %5 = vector.load %arg4[%c0, %c0_1] : memref<16x24xf32, #tpu.memory_space<vmem>>, vector<16x24xf32>
    %6 = vector.extract_strided_slice %5 {offsets = [0, 21], sizes = [16, 1], strides = [1, 1]} : vector<16x24xf32> to vector<16x1xf32>
    %7 = vector.extract_strided_slice %5 {offsets = [0, 22], sizes = [16, 1], strides = [1, 1]} : vector<16x24xf32> to vector<16x1xf32>
    %8 = arith.fptosi %7 : vector<16x1xf32> to vector<16x1xi32>
    %9 = vector.extract_strided_slice %5 {offsets = [0, 23], sizes = [16, 1], strides = [1, 1]} : vector<16x24xf32> to vector<16x1xf32>
    %10 = arith.fptosi %9 : vector<16x1xf32> to vector<16x1xi32>
    %cst = arith.constant 0.314159274 : f32
    %11 = vector.broadcast %cst : f32 to vector<16x1xf32>
    %12 = arith.mulf %6, %11 : vector<16x1xf32>
    %13 = math.cos %12 : vector<16x1xf32>
    %cst_2 = arith.constant 1.000000e+00 : f32
    %14 = vector.broadcast %cst_2 : f32 to vector<16x1xf32>
    %15 = arith.addf %13, %14 : vector<16x1xf32>
    %cst_3 = arith.constant 5.000000e-01 : f32
    %16 = vector.broadcast %cst_3 : f32 to vector<16x1xf32>
    %17 = arith.mulf %16, %15 : vector<16x1xf32>
    %c0_4 = arith.constant 0 : index
    %c0_5 = arith.constant 0 : index
    %18 = vector.load %arg5[%c0_4, %c0_5] : memref<24x128xf32, #tpu.memory_space<vmem>>, vector<24x128xf32>
    %cst_6 = arith.constant dense<0.000000e+00> : vector<16x128xf32>
    %19 = tpu.matmul %5, %18, %cst_6 {dimension_numbers = #tpu.dot_dimension_numbers<[1], [0], [0], [1], [0, 0, 1, 1], [], []>} : vector<16x24xf32>, vector<24x128xf32>, vector<16x128xf32> -> vector<16x128xf32>
    %c0_7 = arith.constant 0 : index
    %c0_8 = arith.constant 0 : index
    %20 = vector.load %arg6[%c0_7, %c0_8] : memref<1x128xf32, #tpu.memory_space<vmem>>, vector<1x128xf32>
    %21 = vector.broadcast %20 : vector<1x128xf32> to vector<16x128xf32>
    %22 = arith.addf %19, %21 : vector<16x128xf32>
    %cst_9 = arith.constant 0.000000e+00 : f32
    %23 = vector.broadcast %cst_9 : f32 to vector<16x128xf32>
    %24 = arith.maximumf %22, %23 : vector<16x128xf32>
    %c0_10 = arith.constant 0 : index
    %c0_11 = arith.constant 0 : index
    %25 = vector.load %arg7[%c0_10, %c0_11] : memref<128x128xf32, #tpu.memory_space<vmem>>, vector<128x128xf32>
    %cst_12 = arith.constant dense<0.000000e+00> : vector<16x128xf32>
    %26 = tpu.matmul %24, %25, %cst_12 {dimension_numbers = #tpu.dot_dimension_numbers<[1], [0], [0], [1], [0, 0, 1, 1], [], []>} : vector<16x128xf32>, vector<128x128xf32>, vector<16x128xf32> -> vector<16x128xf32>
    %c0_13 = arith.constant 0 : index
    %c0_14 = arith.constant 0 : index
    %27 = vector.load %arg8[%c0_13, %c0_14] : memref<1x128xf32, #tpu.memory_space<vmem>>, vector<1x128xf32>
    %28 = vector.broadcast %27 : vector<1x128xf32> to vector<16x128xf32>
    %29 = arith.addf %26, %28 : vector<16x128xf32>
    %30 = vector.broadcast %17 : vector<16x1xf32> to vector<16x128xf32>
    %31 = arith.mulf %29, %30 : vector<16x128xf32>
    %32 = tpu.iota {dimensions = array<i32: 1>} : vector<16x16xi32>
    %33 = vector.broadcast %8 : vector<16x1xi32> to vector<16x16xi32>
    %34 = arith.cmpi eq, %32, %33 : vector<16x16xi32>
    %35 = arith.extui %34 : vector<16x16xi1> to vector<16x16xi32>
    %36 = arith.sitofp %35 : vector<16x16xi32> to vector<16x16xf32>
    %37 = arith.truncf %36 : vector<16x16xf32> to vector<16x16xbf16>
    %c0_15 = arith.constant 0 : index
    %c0_16 = arith.constant 0 : index
    %38 = vector.load %arg26[%c0_15, %c0_16] : memref<16x128xbf16, #tpu.memory_space<vmem>>, vector<16x128xbf16>
    %cst_17 = arith.constant dense<0.000000e+00> : vector<16x128xf32>
    %39 = tpu.matmul %37, %38, %cst_17 {dimension_numbers = #tpu.dot_dimension_numbers<[1], [0], [0], [1], [0, 0, 1, 1], [], []>} : vector<16x16xbf16>, vector<16x128xbf16>, vector<16x128xf32> -> vector<16x128xf32>
    %40 = arith.mulf %39, %31 : vector<16x128xf32>
    %41 = arith.truncf %40 : vector<16x128xf32> to vector<16x128xbf16>
    %42 = tpu.iota {dimensions = array<i32: 1>} : vector<16x8xi32>
    %c8_i32_18 = arith.constant 8 : i32
    %43 = arith.muli %arg0, %c8_i32_18 : i32
    %44 = vector.broadcast %43 : i32 to vector<16x8xi32>
    %45 = arith.addi %42, %44 : vector<16x8xi32>
    %46 = vector.broadcast %10 : vector<16x1xi32> to vector<16x8xi32>
    %47 = arith.cmpi eq, %45, %46 : vector<16x8xi32>
    %48 = arith.extui %47 : vector<16x8xi1> to vector<16x8xi32>
    %49 = arith.sitofp %48 : vector<16x8xi32> to vector<16x8xf32>
    %50 = arith.truncf %49 : vector<16x8xf32> to vector<16x8xbf16>
    %c0_19 = arith.constant 0 : index
    %c0_20 = arith.constant 0 : index
    %51 = vector.load %arg27[%c0_19, %c0_20] : memref<8x128xf32, #tpu.memory_space<vmem>>, vector<8x128xf32>
    %cst_21 = arith.constant dense<0.000000e+00> : vector<8x128xf32>
    %52 = tpu.matmul %50, %41, %cst_21 {dimension_numbers = #tpu.dot_dimension_numbers<[0], [0], [1], [1], [0, 1, 1, 1], [], []>} : vector<16x8xbf16>, vector<16x128xbf16>, vector<8x128xf32> -> vector<8x128xf32>
    %53 = arith.addf %51, %52 : vector<8x128xf32>
    %c0_22 = arith.constant 0 : index
    %c0_23 = arith.constant 0 : index
    %54 = vector.load %arg27[%c0_22, %c0_23] : memref<8x128xf32, #tpu.memory_space<vmem>>, vector<8x128xf32>
    tpu.vector_store %arg27[%c0_22, %c0_23], %53 {strides = array<i32>} : memref<8x128xf32, #tpu.memory_space<vmem>>, vector<8x128xf32>,
    %c2_i32 = arith.constant 2 : i32
    %55 = arith.cmpi eq, %arg1, %c2_i32 : i32
    %56 = arith.extui %55 : i1 to i32
    %c0_i32_24 = arith.constant 0 : i32
    %57 = arith.cmpi ne, %56, %c0_i32_24 : i32
    scf.if %57 {
      %58 = arith.index_cast %1 : i32 to index
      %c0_25 = arith.constant 0 : index
      %59 = vector.load %arg3[%58, %c0_25] : memref<16x128xf32, #tpu.memory_space<vmem>>, vector<8x128xf32>
      %c0_26 = arith.constant 0 : index
      %c0_27 = arith.constant 0 : index
      %60 = vector.load %arg27[%c0_26, %c0_27] : memref<8x128xf32, #tpu.memory_space<vmem>>, vector<8x128xf32>
      %c0_28 = arith.constant 0 : index
      %c0_29 = arith.constant 0 : index
      %61 = vector.load %arg10[%c0_28, %c0_29] : memref<128x128xf32, #tpu.memory_space<vmem>>, vector<128x128xf32>
      %cst_30 = arith.constant dense<0.000000e+00> : vector<8x128xf32>
      %62 = tpu.matmul %60, %61, %cst_30 {dimension_numbers = #tpu.dot_dimension_numbers<[1], [0], [0], [1], [0, 0, 1, 1], [], []>} : vector<8x128xf32>, vector<128x128xf32>, vector<8x128xf32> -> vector<8x128xf32>
      %c0_31 = arith.constant 0 : index
      %c0_32 = arith.constant 0 : index
      %63 = vector.load %arg11[%c0_31, %c0_32] : memref<1x128xf32, #tpu.memory_space<vmem>>, vector<1x128xf32>
      %64 = vector.broadcast %63 : vector<1x128xf32> to vector<8x128xf32>
      %65 = arith.addf %62, %64 : vector<8x128xf32>
      %cst_33 = arith.constant 0.000000e+00 : f32
      %66 = vector.broadcast %cst_33 : f32 to vector<8x128xf32>
      %67 = arith.maximumf %65, %66 : vector<8x128xf32>
      %c0_34 = arith.constant 0 : index
      %c0_35 = arith.constant 0 : index
      %68 = vector.load %arg12[%c0_34, %c0_35] : memref<128x128xf32, #tpu.memory_space<vmem>>, vector<128x128xf32>
      %cst_36 = arith.constant dense<0.000000e+00> : vector<8x128xf32>
      %69 = tpu.matmul %67, %68, %cst_36 {dimension_numbers = #tpu.dot_dimension_numbers<[1], [0], [0], [1], [0, 0, 1, 1], [], []>} : vector<8x128xf32>, vector<128x128xf32>, vector<8x128xf32> -> vector<8x128xf32>
      %c0_37 = arith.constant 0 : index
      %c0_38 = arith.constant 0 : index
      %70 = vector.load %arg13[%c0_37, %c0_38] : memref<1x128xf32, #tpu.memory_space<vmem>>, vector<1x128xf32>
      %71 = vector.broadcast %70 : vector<1x128xf32> to vector<8x128xf32>
      %72 = arith.addf %69, %71 : vector<8x128xf32>
      %73 = arith.addf %59, %72 : vector<8x128xf32>
      %c0_39 = arith.constant 0 : index
      %c0_40 = arith.constant 0 : index
      %74 = vector.load %arg3[%c0_39, %c0_40] : memref<16x128xf32, #tpu.memory_space<vmem>>, vector<16x128xf32>
      %c0_41 = arith.constant 0 : index
      %c0_42 = arith.constant 0 : index
      %75 = vector.load %arg14[%c0_41, %c0_42] : memref<16x1xi32, #tpu.memory_space<vmem>>, vector<16x1xi32>
      %c0_i32_43 = arith.constant 0 : i32
      %76 = vector.broadcast %c0_i32_43 : i32 to vector<16x1xi32>
      %77 = arith.cmpi eq, %75, %76 : vector<16x1xi32>
      %cst_44 = arith.constant -1.000000e+30 : f32
      %78 = vector.shape_cast %77 : vector<16x1xi1> to vector<16x1xi1>
      %79 = vector.broadcast %78 : vector<16x1xi1> to vector<16x128xi1>
      %80 = vector.broadcast %cst_44 : f32 to vector<16x128xf32>
      %81 = arith.select %79, %74, %80 : vector<16x128xi1>, vector<16x128xf32>
      %cst_45 = arith.constant dense<0xFF800000> : vector<128xf32>
      %82 = vector.multi_reduction <maximumf>, %81, %cst_45 [0] : vector<16x128xf32> to vector<128xf32>
      %83 = vector.shape_cast %82 : vector<128xf32> to vector<1x128xf32>
      %84 = arith.extui %77 : vector<16x1xi1> to vector<16x1xi32>
      %85 = arith.sitofp %84 : vector<16x1xi32> to vector<16x1xf32>
      %cst_46 = arith.constant dense<0.000000e+00> : vector<1xf32>
      %86 = vector.multi_reduction <add>, %85, %cst_46 [0] : vector<16x1xf32> to vector<1xf32>
      %87 = vector.shape_cast %86 : vector<1xf32> to vector<1x1xf32>
      %cst_47 = arith.constant 0.000000e+00 : f32
      %88 = vector.broadcast %cst_47 : f32 to vector<1x1xf32>
      %89 = arith.cmpf ogt, %87, %88 : vector<1x1xf32>
      %cst_48 = arith.constant 0.000000e+00 : f32
      %90 = vector.shape_cast %89 : vector<1x1xi1> to vector<1x1xi1>
      %91 = vector.broadcast %90 : vector<1x1xi1> to vector<1x128xi1>
      %92 = vector.broadcast %cst_48 : f32 to vector<1x128xf32>
      %93 = arith.select %91, %83, %92 : vector<1x128xi1>, vector<1x128xf32>
      %c1_i32 = arith.constant 1 : i32
      %94 = vector.broadcast %c1_i32 : i32 to vector<16x1xi32>
      %95 = arith.cmpi eq, %75, %94 : vector<16x1xi32>
      %cst_49 = arith.constant -1.000000e+30 : f32
      %96 = vector.shape_cast %95 : vector<16x1xi1> to vector<16x1xi1>
      %97 = vector.broadcast %96 : vector<16x1xi1> to vector<16x128xi1>
      %98 = vector.broadcast %cst_49 : f32 to vector<16x128xf32>
      %99 = arith.select %97, %74, %98 : vector<16x128xi1>, vector<16x128xf32>
      %cst_50 = arith.constant dense<0xFF800000> : vector<128xf32>
      %100 = vector.multi_reduction <maximumf>, %99, %cst_50 [0] : vector<16x128xf32> to vector<128xf32>
      %101 = vector.shape_cast %100 : vector<128xf32> to vector<1x128xf32>
      %102 = arith.extui %95 : vector<16x1xi1> to vector<16x1xi32>
      %103 = arith.sitofp %102 : vector<16x1xi32> to vector<16x1xf32>
      %cst_51 = arith.constant dense<0.000000e+00> : vector<1xf32>
      %104 = vector.multi_reduction <add>, %103, %cst_51 [0] : vector<16x1xf32> to vector<1xf32>
      %105 = vector.shape_cast %104 : vector<1xf32> to vector<1x1xf32>
      %cst_52 = arith.constant 0.000000e+00 : f32
      %106 = vector.broadcast %cst_52 : f32 to vector<1x1xf32>
      %107 = arith.cmpf ogt, %105, %106 : vector<1x1xf32>
      %cst_53 = arith.constant 0.000000e+00 : f32
      %108 = vector.shape_cast %107 : vector<1x1xi1> to vector<1x1xi1>
      %109 = vector.broadcast %108 : vector<1x1xi1> to vector<1x128xi1>
      %110 = vector.broadcast %cst_53 : f32 to vector<1x128xf32>
      %111 = arith.select %109, %101, %110 : vector<1x128xi1>, vector<1x128xf32>
      %c2_i32_54 = arith.constant 2 : i32
      %112 = vector.broadcast %c2_i32_54 : i32 to vector<16x1xi32>
      %113 = arith.cmpi eq, %75, %112 : vector<16x1xi32>
      %cst_55 = arith.constant -1.000000e+30 : f32
      %114 = vector.shape_cast %113 : vector<16x1xi1> to vector<16x1xi1>
      %115 = vector.broadcast %114 : vector<16x1xi1> to vector<16x128xi1>
      %116 = vector.broadcast %cst_55 : f32 to vector<16x128xf32>
      %117 = arith.select %115, %74, %116 : vector<16x128xi1>, vector<16x128xf32>
      %cst_56 = arith.constant dense<0xFF800000> : vector<128xf32>
      %118 = vector.multi_reduction <maximumf>, %117, %cst_56 [0] : vector<16x128xf32> to vector<128xf32>
      %119 = vector.shape_cast %118 : vector<128xf32> to vector<1x128xf32>
      %120 = arith.extui %113 : vector<16x1xi1> to vector<16x1xi32>
      %121 = arith.sitofp %120 : vector<16x1xi32> to vector<16x1xf32>
      %cst_57 = arith.constant dense<0.000000e+00> : vector<1xf32>
      %122 = vector.multi_reduction <add>, %121, %cst_57 [0] : vector<16x1xf32> to vector<1xf32>
      %123 = vector.shape_cast %122 : vector<1xf32> to vector<1x1xf32>
      %cst_58 = arith.constant 0.000000e+00 : f32
      %124 = vector.broadcast %cst_58 : f32 to vector<1x1xf32>
      %125 = arith.cmpf ogt, %123, %124 : vector<1x1xf32>
      %cst_59 = arith.constant 0.000000e+00 : f32
      %126 = vector.shape_cast %125 : vector<1x1xi1> to vector<1x1xi1>
      %127 = vector.broadcast %126 : vector<1x1xi1> to vector<1x128xi1>
      %128 = vector.broadcast %cst_59 : f32 to vector<1x128xf32>
      %129 = arith.select %127, %119, %128 : vector<1x128xi1>, vector<1x128xf32>
      %c3_i32 = arith.constant 3 : i32
      %130 = vector.broadcast %c3_i32 : i32 to vector<16x1xi32>
      %131 = arith.cmpi eq, %75, %130 : vector<16x1xi32>
      %cst_60 = arith.constant -1.000000e+30 : f32
      %132 = vector.shape_cast %131 : vector<16x1xi1> to vector<16x1xi1>
      %133 = vector.broadcast %132 : vector<16x1xi1> to vector<16x128xi1>
      %134 = vector.broadcast %cst_60 : f32 to vector<16x128xf32>
      %135 = arith.select %133, %74, %134 : vector<16x128xi1>, vector<16x128xf32>
      %cst_61 = arith.constant dense<0xFF800000> : vector<128xf32>
      %136 = vector.multi_reduction <maximumf>, %135, %cst_61 [0] : vector<16x128xf32> to vector<128xf32>
      %137 = vector.shape_cast %136 : vector<128xf32> to vector<1x128xf32>
      %138 = arith.extui %131 : vector<16x1xi1> to vector<16x1xi32>
      %139 = arith.sitofp %138 : vector<16x1xi32> to vector<16x1xf32>
      %cst_62 = arith.constant dense<0.000000e+00> : vector<1xf32>
      %140 = vector.multi_reduction <add>, %139, %cst_62 [0] : vector<16x1xf32> to vector<1xf32>
      %141 = vector.shape_cast %140 : vector<1xf32> to vector<1x1xf32>
      %cst_63 = arith.constant 0.000000e+00 : f32
      %142 = vector.broadcast %cst_63 : f32 to vector<1x1xf32>
      %143 = arith.cmpf ogt, %141, %142 : vector<1x1xf32>
      %cst_64 = arith.constant 0.000000e+00 : f32
      %144 = vector.shape_cast %143 : vector<1x1xi1> to vector<1x1xi1>
      %145 = vector.broadcast %144 : vector<1x1xi1> to vector<1x128xi1>
      %146 = vector.broadcast %cst_64 : f32 to vector<1x128xf32>
      %147 = arith.select %145, %137, %146 : vector<1x128xi1>, vector<1x128xf32>
      %148 = tpu.concatenate %93, %111, %129, %147 in 0 : vector<1x128xf32>, vector<1x128xf32>, vector<1x128xf32>, vector<1x128xf32> -> vector<4x128xf32>
      %c0_65 = arith.constant 0 : index
      %c0_66 = arith.constant 0 : index
      %149 = vector.load %arg15[%c0_65, %c0_66] : memref<8x2xi32, #tpu.memory_space<vmem>>, vector<8x1xi32>
      %c0_67 = arith.constant 0 : index
      %c1 = arith.constant 1 : index
      %150 = vector.load %arg15[%c0_67, %c1] : memref<8x2xi32, #tpu.memory_space<vmem>>, vector<8x1xi32>
      %151 = tpu.iota {dimensions = array<i32: 1>} : vector<8x4xi32>
      %152 = vector.broadcast %149 : vector<8x1xi32> to vector<8x4xi32>
      %153 = arith.cmpi eq, %151, %152 : vector<8x4xi32>
      %154 = arith.extui %153 : vector<8x4xi1> to vector<8x4xi32>
      %155 = arith.sitofp %154 : vector<8x4xi32> to vector<8x4xf32>
      %156 = vector.broadcast %150 : vector<8x1xi32> to vector<8x4xi32>
      %157 = arith.cmpi eq, %151, %156 : vector<8x4xi32>
      %158 = arith.extui %157 : vector<8x4xi1> to vector<8x4xi32>
      %159 = arith.sitofp %158 : vector<8x4xi32> to vector<8x4xf32>
      %cst_68 = arith.constant dense<0.000000e+00> : vector<8x128xf32>
      %160 = tpu.matmul %155, %148, %cst_68 {dimension_numbers = #tpu.dot_dimension_numbers<[1], [0], [0], [1], [0, 0, 1, 1], [], []>} : vector<8x4xf32>, vector<4x128xf32>, vector<8x128xf32> -> vector<8x128xf32>
      %c0_69 = arith.constant 0 : index
      %c0_70 = arith.constant 0 : index
      %161 = vector.load %arg16[%c0_69, %c0_70] : memref<8x128xf32, #tpu.memory_space<vmem>>, vector<8x128xf32>
      %162 = arith.addf %160, %161 : vector<8x128xf32>
      %cst_71 = arith.constant 0.000000e+00 : f32
      %163 = vector.broadcast %cst_71 : f32 to vector<8x128xf32>
      %164 = arith.maximumf %162, %163 : vector<8x128xf32>
      %cst_72 = arith.constant dense<0.000000e+00> : vector<4x128xf32>
      %165 = tpu.matmul %159, %164, %cst_72 {dimension_numbers = #tpu.dot_dimension_numbers<[0], [0], [1], [1], [0, 1, 1, 1], [], []>} : vector<8x4xf32>, vector<8x128xf32>, vector<4x128xf32> -> vector<4x128xf32>
      %c0_73 = arith.constant 0 : index
      %c0_74 = arith.constant 0 : index
      %166 = memref.load %arg2[%c0_73, %c0_74] : memref<1x1xf32, #tpu.memory_space<smem>>
      %cst_75 = arith.constant 1.000000e+00 : f32
      %167 = arith.addf %cst_75, %166 : f32
      %168 = vector.broadcast %167 : f32 to vector<4x128xf32>
      %169 = arith.mulf %168, %148 : vector<4x128xf32>
      %170 = arith.addf %169, %165 : vector<4x128xf32>
      %c0_76 = arith.constant 0 : index
      %c0_77 = arith.constant 0 : index
      %171 = vector.load %arg17[%c0_76, %c0_77] : memref<128x128xf32, #tpu.memory_space<vmem>>, vector<128x128xf32>
      %cst_78 = arith.constant dense<0.000000e+00> : vector<4x128xf32>
      %172 = tpu.matmul %170, %171, %cst_78 {dimension_numbers = #tpu.dot_dimension_numbers<[1], [0], [0], [1], [0, 0, 1, 1], [], []>} : vector<4x128xf32>, vector<128x128xf32>, vector<4x128xf32> -> vector<4x128xf32>
      %c0_79 = arith.constant 0 : index
      %c0_80 = arith.constant 0 : index
      %173 = vector.load %arg18[%c0_79, %c0_80] : memref<1x128xf32, #tpu.memory_space<vmem>>, vector<1x128xf32>
      %174 = vector.broadcast %173 : vector<1x128xf32> to vector<4x128xf32>
      %175 = arith.addf %172, %174 : vector<4x128xf32>
      %cst_81 = arith.constant dense<0.000000e+00> : vector<128xf32>
      %176 = vector.multi_reduction <add>, %175, %cst_81 [0] : vector<4x128xf32> to vector<128xf32>
      %177 = vector.shape_cast %176 : vector<128xf32> to vector<1x128xf32>
      %cst_82 = arith.constant 4.000000e+00 : f32
      %178 = vector.broadcast %cst_82 : f32 to vector<1x128xf32>
      %179 = arith.divf %177, %178 : vector<1x128xf32>
      %180 = vector.broadcast %179 : vector<1x128xf32> to vector<4x128xf32>
      %181 = arith.subf %175, %180 : vector<4x128xf32>
      %182 = arith.mulf %181, %181 : vector<4x128xf32>
      %cst_83 = arith.constant dense<0.000000e+00> : vector<128xf32>
      %183 = vector.multi_reduction <add>, %182, %cst_83 [0] : vector<4x128xf32> to vector<128xf32>
      %184 = vector.shape_cast %183 : vector<128xf32> to vector<1x128xf32>
      %cst_84 = arith.constant 4.000000e+00 : f32
      %185 = vector.broadcast %cst_84 : f32 to vector<1x128xf32>
      %186 = arith.divf %184, %185 : vector<1x128xf32>
      %187 = vector.broadcast %179 : vector<1x128xf32> to vector<4x128xf32>
      %188 = arith.subf %175, %187 : vector<4x128xf32>
      %cst_85 = arith.constant 9.99999974E-6 : f32
      %189 = vector.broadcast %cst_85 : f32 to vector<1x128xf32>
      %190 = arith.addf %186, %189 : vector<1x128xf32>
      %191 = math.rsqrt %190 : vector<1x128xf32>
      %192 = vector.broadcast %191 : vector<1x128xf32> to vector<4x128xf32>
      %193 = arith.mulf %188, %192 : vector<4x128xf32>
      %c0_86 = arith.constant 0 : index
      %c0_87 = arith.constant 0 : index
      %194 = vector.load %arg19[%c0_86, %c0_87] : memref<1x128xf32, #tpu.memory_space<vmem>>, vector<1x128xf32>
      %195 = vector.broadcast %194 : vector<1x128xf32> to vector<4x128xf32>
      %196 = arith.mulf %193, %195 : vector<4x128xf32>
      %c0_88 = arith.constant 0 : index
      %c0_89 = arith.constant 0 : index
      %197 = vector.load %arg20[%c0_88, %c0_89] : memref<1x128xf32, #tpu.memory_space<vmem>>, vector<1x128xf32>
      %198 = vector.broadcast %197 : vector<1x128xf32> to vector<4x128xf32>
      %199 = arith.addf %196, %198 : vector<4x128xf32>
      %cst_90 = arith.constant 0.000000e+00 : f32
      %200 = vector.broadcast %cst_90 : f32 to vector<4x128xf32>
      %201 = arith.maximumf %199, %200 : vector<4x128xf32>
      %c0_91 = arith.constant 0 : index
      %c0_92 = arith.constant 0 : index
      %202 = vector.load %arg21[%c0_91, %c0_92] : memref<128x128xf32, #tpu.memory_space<vmem>>, vector<128x128xf32>
      %cst_93 = arith.constant dense<0.000000e+00> : vector<4x128xf32>
      %203 = tpu.matmul %201, %202, %cst_93 {dimension_numbers = #tpu.dot_dimension_numbers<[1], [0], [0], [1], [0, 0, 1, 1], [], []>} : vector<4x128xf32>, vector<128x128xf32>, vector<4x128xf32> -> vector<4x128xf32>
      %c0_94 = arith.constant 0 : index
      %c0_95 = arith.constant 0 : index
      %204 = vector.load %arg22[%c0_94, %c0_95] : memref<1x128xf32, #tpu.memory_space<vmem>>, vector<1x128xf32>
      %205 = vector.broadcast %204 : vector<1x128xf32> to vector<4x128xf32>
      %206 = arith.addf %203, %205 : vector<4x128xf32>
      %cst_96 = arith.constant dense<0.000000e+00> : vector<128xf32>
      %207 = vector.multi_reduction <add>, %206, %cst_96 [0] : vector<4x128xf32> to vector<128xf32>
      %208 = vector.shape_cast %207 : vector<128xf32> to vector<1x128xf32>
      %cst_97 = arith.constant 4.000000e+00 : f32
      %209 = vector.broadcast %cst_97 : f32 to vector<1x128xf32>
      %210 = arith.divf %208, %209 : vector<1x128xf32>
      %211 = vector.broadcast %210 : vector<1x128xf32> to vector<4x128xf32>
      %212 = arith.subf %206, %211 : vector<4x128xf32>
      %213 = arith.mulf %212, %212 : vector<4x128xf32>
      %cst_98 = arith.constant dense<0.000000e+00> : vector<128xf32>
      %214 = vector.multi_reduction <add>, %213, %cst_98 [0] : vector<4x128xf32> to vector<128xf32>
      %215 = vector.shape_cast %214 : vector<128xf32> to vector<1x128xf32>
      %cst_99 = arith.constant 4.000000e+00 : f32
      %216 = vector.broadcast %cst_99 : f32 to vector<1x128xf32>
      %217 = arith.divf %215, %216 : vector<1x128xf32>
      %218 = vector.broadcast %210 : vector<1x128xf32> to vector<4x128xf32>
      %219 = arith.subf %206, %218 : vector<4x128xf32>
      %cst_100 = arith.constant 9.99999974E-6 : f32
      %220 = vector.broadcast %cst_100 : f32 to vector<1x128xf32>
      %221 = arith.addf %217, %220 : vector<1x128xf32>
      %222 = math.rsqrt %221 : vector<1x128xf32>
      %223 = vector.broadcast %222 : vector<1x128xf32> to vector<4x128xf32>
      %224 = arith.mulf %219, %223 : vector<4x128xf32>
      %c0_101 = arith.constant 0 : index
      %c0_102 = arith.constant 0 : index
      %225 = vector.load %arg23[%c0_101, %c0_102] : memref<1x128xf32, #tpu.memory_space<vmem>>, vector<1x128xf32>
      %226 = vector.broadcast %225 : vector<1x128xf32> to vector<4x128xf32>
      %227 = arith.mulf %224, %226 : vector<4x128xf32>
      %c0_103 = arith.constant 0 : index
      %c0_104 = arith.constant 0 : index
      %228 = vector.load %arg24[%c0_103, %c0_104] : memref<1x128xf32, #tpu.memory_space<vmem>>, vector<1x128xf32>
      %229 = vector.broadcast %228 : vector<1x128xf32> to vector<4x128xf32>
      %230 = arith.addf %227, %229 : vector<4x128xf32>
      %231 = arith.index_cast %1 : i32 to index
      %c0_105 = arith.constant 0 : index
      %232 = vector.load %arg14[%231, %c0_105] : memref<16x1xi32, #tpu.memory_space<vmem>>, vector<8x1xi32>
      %233 = tpu.iota {dimensions = array<i32: 1>} : vector<8x4xi32>
      %234 = vector.broadcast %232 : vector<8x1xi32> to vector<8x4xi32>
      %235 = arith.cmpi eq, %233, %234 : vector<8x4xi32>
      %236 = arith.extui %235 : vector<8x4xi1> to vector<8x4xi32>
      %237 = arith.sitofp %236 : vector<8x4xi32> to vector<8x4xf32>
      %cst_106 = arith.constant dense<0.000000e+00> : vector<8x128xf32>
      %238 = tpu.matmul %237, %230, %cst_106 {dimension_numbers = #tpu.dot_dimension_numbers<[1], [0], [0], [1], [0, 0, 1, 1], [], []>} : vector<8x4xf32>, vector<4x128xf32>, vector<8x128xf32> -> vector<8x128xf32>
      %239 = arith.addf %73, %238 : vector<8x128xf32>
      %c0_107 = arith.constant 0 : index
      %c0_108 = arith.constant 0 : index
      %240 = vector.load %arg25[%c0_107, %c0_108] : memref<8x128xf32, #tpu.memory_space<vmem>>, vector<8x128xf32>
      tpu.vector_store %arg25[%c0_107, %c0_108], %239 {strides = array<i32>} : memref<8x128xf32, #tpu.memory_space<vmem>>, vector<8x128xf32>,
    } else {
    }
    return
  }
  func.func @transform_0(%arg0: i32, %arg1: i32) -> (i32, i32) {
    %c0_i32 = arith.constant 0 : i32
    %c0_i32_0 = arith.constant 0 : i32
    %c0_i32_1 = arith.constant 0 : i32
    return %c0_i32, %c0_i32_0 : i32, i32
  }
  func.func @transform_1(%arg0: i32, %arg1: i32) -> (i32, i32) {
    %c0_i32 = arith.constant 0 : i32
    %c0_i32_0 = arith.constant 0 : i32
    %c0_i32_1 = arith.constant 0 : i32
    return %c0_i32, %c0_i32_0 : i32, i32
  }
  func.func @transform_2(%arg0: i32, %arg1: i32) -> (i32, i32) {
    %c0_i32 = arith.constant 0 : i32
    %c0_i32_0 = arith.constant 0 : i32
    return %arg1, %c0_i32 : i32, i32
  }
  func.func @transform_3(%arg0: i32, %arg1: i32) -> (i32, i32) {
    %c0_i32 = arith.constant 0 : i32
    %c0_i32_0 = arith.constant 0 : i32
    %c0_i32_1 = arith.constant 0 : i32
    return %c0_i32, %c0_i32_0 : i32, i32
  }
  func.func @transform_4(%arg0: i32, %arg1: i32) -> (i32, i32) {
    %c0_i32 = arith.constant 0 : i32
    %c0_i32_0 = arith.constant 0 : i32
    %c0_i32_1 = arith.constant 0 : i32
    return %c0_i32, %c0_i32_0 : i32, i32
  }
  func.func @transform_5(%arg0: i32, %arg1: i32) -> (i32, i32) {
    %c0_i32 = arith.constant 0 : i32
    %c0_i32_0 = arith.constant 0 : i32
    %c0_i32_1 = arith.constant 0 : i32
    return %c0_i32, %c0_i32_0 : i32, i32
  }
  func.func @transform_6(%arg0: i32, %arg1: i32) -> (i32, i32) {
    %c0_i32 = arith.constant 0 : i32
    %c0_i32_0 = arith.constant 0 : i32
    %c0_i32_1 = arith.constant 0 : i32
    return %c0_i32, %c0_i32_0 : i32, i32
  }
  func.func @transform_7(%arg0: i32, %arg1: i32) -> (i32, i32) {
    %c0_i32 = arith.constant 0 : i32
    %c0_i32_0 = arith.constant 0 : i32
    %c0_i32_1 = arith.constant 0 : i32
    return %c0_i32, %c0_i32_0 : i32, i32
  }
  func.func @transform_8(%arg0: i32, %arg1: i32) -> (i32, i32) {
    %c0_i32 = arith.constant 0 : i32
    %c0_i32_0 = arith.constant 0 : i32
    %c0_i32_1 = arith.constant 0 : i32
    return %c0_i32, %c0_i32_0 : i32, i32
  }
  func.func @transform_9(%arg0: i32, %arg1: i32) -> (i32, i32) {
    %c0_i32 = arith.constant 0 : i32
    %c0_i32_0 = arith.constant 0 : i32
    %c0_i32_1 = arith.constant 0 : i32
    return %c0_i32, %c0_i32_0 : i32, i32
  }
  func.func @transform_10(%arg0: i32, %arg1: i32) -> (i32, i32) {
    %c0_i32 = arith.constant 0 : i32
    %c0_i32_0 = arith.constant 0 : i32
    %c0_i32_1 = arith.constant 0 : i32
    return %c0_i32, %c0_i32_0 : i32, i32
  }
  func.func @transform_11(%arg0: i32, %arg1: i32) -> (i32, i32) {
    %c0_i32 = arith.constant 0 : i32
    %c0_i32_0 = arith.constant 0 : i32
    %c0_i32_1 = arith.constant 0 : i32
    return %c0_i32, %c0_i32_0 : i32, i32
  }
  func.func @transform_12(%arg0: i32, %arg1: i32) -> (i32, i32) {
    %c0_i32 = arith.constant 0 : i32
    %c0_i32_0 = arith.constant 0 : i32
    %c0_i32_1 = arith.constant 0 : i32
    return %c0_i32, %c0_i32_0 : i32, i32
  }
  func.func @transform_13(%arg0: i32, %arg1: i32) -> (i32, i32) {
    %c0_i32 = arith.constant 0 : i32
    %c0_i32_0 = arith.constant 0 : i32
    %c0_i32_1 = arith.constant 0 : i32
    return %c0_i32, %c0_i32_0 : i32, i32
  }
  func.func @transform_14(%arg0: i32, %arg1: i32) -> (i32, i32) {
    %c0_i32 = arith.constant 0 : i32
    %c0_i32_0 = arith.constant 0 : i32
    %c0_i32_1 = arith.constant 0 : i32
    return %c0_i32, %c0_i32_0 : i32, i32
  }
  func.func @transform_15(%arg0: i32, %arg1: i32) -> (i32, i32) {
    %c0_i32 = arith.constant 0 : i32
    %c0_i32_0 = arith.constant 0 : i32
    %c0_i32_1 = arith.constant 0 : i32
    return %c0_i32, %c0_i32_0 : i32, i32
  }
  func.func @transform_16(%arg0: i32, %arg1: i32) -> (i32, i32) {
    %c0_i32 = arith.constant 0 : i32
    %c0_i32_0 = arith.constant 0 : i32
    %c0_i32_1 = arith.constant 0 : i32
    return %c0_i32, %c0_i32_0 : i32, i32
  }
  func.func @transform_17(%arg0: i32, %arg1: i32) -> (i32, i32) {
    %c0_i32 = arith.constant 0 : i32
    %c0_i32_0 = arith.constant 0 : i32
    %c0_i32_1 = arith.constant 0 : i32
    return %c0_i32, %c0_i32_0 : i32, i32
  }
  func.func @transform_18(%arg0: i32, %arg1: i32) -> (i32, i32) {
    %c0_i32 = arith.constant 0 : i32
    %c0_i32_0 = arith.constant 0 : i32
    %c0_i32_1 = arith.constant 0 : i32
    return %c0_i32, %c0_i32_0 : i32, i32
  }
  func.func @transform_19(%arg0: i32, %arg1: i32) -> (i32, i32) {
    %c0_i32 = arith.constant 0 : i32
    %c0_i32_0 = arith.constant 0 : i32
    %c0_i32_1 = arith.constant 0 : i32
    return %c0_i32, %c0_i32_0 : i32, i32
  }
  func.func @transform_20(%arg0: i32, %arg1: i32) -> (i32, i32) {
    %c0_i32 = arith.constant 0 : i32
    %c0_i32_0 = arith.constant 0 : i32
    %c0_i32_1 = arith.constant 0 : i32
    return %c0_i32, %c0_i32_0 : i32, i32
  }
  func.func @transform_21(%arg0: i32, %arg1: i32) -> (i32, i32) {
    %c0_i32 = arith.constant 0 : i32
    %c0_i32_0 = arith.constant 0 : i32
    %c0_i32_1 = arith.constant 0 : i32
    return %c0_i32, %c0_i32_0 : i32, i32
  }
  func.func @transform_22(%arg0: i32, %arg1: i32) -> (i32, i32) {
    %c0_i32 = arith.constant 0 : i32
    %c0_i32_0 = arith.constant 0 : i32
    %c0_i32_1 = arith.constant 0 : i32
    return %c0_i32, %c0_i32_0 : i32, i32
  }
  func.func @transform_23(%arg0: i32, %arg1: i32) -> (i32, i32) {
    %c0_i32 = arith.constant 0 : i32
    %c0_i32_0 = arith.constant 0 : i32
    return %arg0, %c0_i32 : i32, i32
  }
}

</mosaic_0001>

<llo_original>
// kernel: tpu_custom_call.1
$region0: #{tpu_custom_call.1}
  #allocation0 [shape = 'u32[]', space=smem, size = 0x4, offset = 0x4, fixed_abs, tag = 'smem constant byte address 0x4 - core index']
  #allocation1 [shape = 'u32[144,128]{1,0:T(1,128)}', space=vmem, size = 0x12000, scoped, tag = 'internal scratch']
  #allocation2 [shape = 'bf16[16,128]{1,0:T(16,128)(2,1)}', space=vmem, size = 0x1000, scoped, tag = 'scratch operand']
  #allocation3 [shape = 'f32[8,128]{1,0:T(8,128)}', space=vmem, size = 0x1000, scoped, tag = 'scratch operand']
  #allocation4 [shape = 'f32[1,1]{1,0:T(1,128)S(6)}', space=smem, size = 0x200, scoped, tag = 'scoped memory for tpu_custom_call.1']
  %s0 = inlined_call_operand.<no memory space> [shape: f32[1,1], index: 0, kind: input, shape index: {}]
  %s1 = inlined_call_operand.hbm [shape: f32[16,128], index: 1, kind: input, shape index: {}]
  %s2 = inlined_call_operand.vmem [shape: f32[48,24], index: 2, kind: input, shape index: {}]
  %s3 = inlined_call_operand.hbm [shape: f32[24,128], index: 3, kind: input, shape index: {}]
  %s4 = inlined_call_operand.hbm [shape: f32[1,128], index: 4, kind: input, shape index: {}]
  %s5 = inlined_call_operand.hbm [shape: f32[128,128], index: 5, kind: input, shape index: {}]
  %s6 = inlined_call_operand.hbm [shape: f32[1,128], index: 6, kind: input, shape index: {}]
  %s7 = inlined_call_operand.hbm [shape: f32[128,128], index: 7, kind: input, shape index: {}]
  %s8 = inlined_call_operand.vmem [shape: f32[128,128], index: 8, kind: input, shape index: {}]
  %s9 = inlined_call_operand.hbm [shape: f32[1,128], index: 9, kind: input, shape index: {}]
  %s10 = inlined_call_operand.hbm [shape: f32[128,128], index: 10, kind: input, shape index: {}]
  %s11 = inlined_call_operand.vmem [shape: f32[1,128], index: 11, kind: input, shape index: {}]
  %s12 = inlined_call_operand.vmem [shape: s32[16,1], index: 12, kind: input, shape index: {}]
  %s13 = inlined_call_operand.vmem [shape: s32[8,2], index: 13, kind: input, shape index: {}]
  %s14 = inlined_call_operand.vmem [shape: f32[8,128], index: 14, kind: input, shape index: {}]
  %s15 = inlined_call_operand.hbm [shape: f32[128,128], index: 15, kind: input, shape index: {}]
  %s16 = inlined_call_operand.vmem [shape: f32[1,128], index: 16, kind: input, shape index: {}]
  %s17 = inlined_call_operand.vmem [shape: f32[1,128], index: 17, kind: input, shape index: {}]
  %s18 = inlined_call_operand.vmem [shape: f32[1,128], index: 18, kind: input, shape index: {}]
  %s19 = inlined_call_operand.hbm [shape: f32[128,128], index: 19, kind: input, shape index: {}]
  %s20 = inlined_call_operand.vmem [shape: f32[1,128], index: 20, kind: input, shape index: {}]
  %s21 = inlined_call_operand.vmem [shape: f32[1,128], index: 21, kind: input, shape index: {}]
  %s22 = inlined_call_operand.vmem [shape: f32[1,128], index: 22, kind: input, shape index: {}]
  %s23 = inlined_call_operand.hbm [shape: f32[16,128], index: 23, kind: output, shape index: {}]
  %s24 = sld [smem:[#allocation0]]
  $region173: #{tpu_custom_call.1} parent=0
    _
  %s26 = ssub.s32 1, %s24
  %s27 = scalar_select 0, %s26, %s24
  %28 = sst [smem:[#allocation4]] %s0
  $region1: #{tpu_custom_call.1} parent=0
    #allocation5 [shape = 'u8[8192]{0}', space=vmem, size = 0x2000, scoped, tag = 'input window, operand 1, single buffered']
    #allocation6 [shape = 's32[2]{0}', space=sflag, size = 0x8, scoped, tag = 'scoped memory for tpu_custom_call.1']
    #allocation7 [shape = 's32[2]{0}', space=sflag, size = 0x8, scoped, tag = 'scoped memory for tpu_custom_call.1']
    #allocation8 [shape = 'u8[12288]{0}', space=vmem, size = 0x3000, scoped, tag = 'input window, operand 3, single buffered']
    #allocation9 [shape = 's32[1]{0}', space=sflag, size = 0x4, scoped, tag = 'scoped memory for tpu_custom_call.1']
    #allocation10 [shape = 'u8[512]{0}', space=vmem, size = 0x400, scoped, tag = 'input window, operand 4, single buffered']
    #allocation11 [shape = 'u8[65536]{0}', space=vmem, size = 0x10000, scoped, tag = 'input window, operand 5, single buffered']
    #allocation12 [shape = 's32[1]{0}', space=sflag, size = 0x4, scoped, tag = 'scoped memory for tpu_custom_call.1']
    #allocation13 [shape = 'u8[512]{0}', space=vmem, size = 0x400, scoped, tag = 'input window, operand 6, single buffered']
    #allocation14 [shape = 'u8[65536]{0}', space=vmem, size = 0x10000, scoped, tag = 'input window, operand 7, single buffered']
    #allocation15 [shape = 's32[1]{0}', space=sflag, size = 0x4, scoped, tag = 'scoped memory for tpu_custom_call.1']
    #allocation16 [shape = 'u8[512]{0}', space=vmem, size = 0x400, scoped, tag = 'input window, operand 9, single buffered']
    #allocation17 [shape = 'u8[65536]{0}', space=vmem, size = 0x10000, scoped, tag = 'input window, operand 10, single buffered']
    #allocation18 [shape = 's32[1]{0}', space=sflag, size = 0x4, scoped, tag = 'scoped memory for tpu_custom_call.1']
    #allocation19 [shape = 'u8[65536]{0}', space=vmem, size = 0x10000, scoped, tag = 'input window, operand 15, single buffered']
    #allocation20 [shape = 'u8[65536]{0}', space=vmem, size = 0x10000, scoped, tag = 'input window, operand 19, single buffered']
    #allocation21 [shape = 's32[1]{0}', space=sflag, size = 0x4, scoped, tag = 'scoped memory for tpu_custom_call.1']
    #allocation22 [shape = 'u8[8192]{0}', space=vmem, size = 0x2000, scoped, tag = 'output window, operand 0']
    %29 = vsyncpa [#allocation6], 0
    %30 = vsyncpa [#allocation9], 0
    %31 = vsyncpa [#allocation12], 0
    %32 = vsyncpa [#allocation15], 0
    %33 = vsyncpa [#allocation18], 0
    %34 = vsyncpa [#allocation21], 0
    %35 = vsyncpa [#allocation7], 0
    %s36 = scalar_lea.sflag [#allocation7], 1
    %37 = vsyncpa %s36, 0
    loop: start=0, step=1, limit=8
    $region2: #{tpu_custom_call.1} parent=1 // loop_pre_header
      _
    $region3: #{tpu_custom_call.1} parent=1 // loop_header
      %s39 = sphi 0, %s43
      %p40 = scmp.ge.s32.totalorder %s39, 8
      %s46 = sphi 0, %s58
      %s47 = sphi 0, %s54
      %s48 = sphi 0, %s46
      %s49 = sphi 0, %s47
      %s50 = sphi 0, %s48
      %s51 = sphi 0, %s49
      %s59 = sphi 0, %s59
      %s61 = sphi 0, %s59
      %s62 = sphi 0, %s61
      %s76 = sphi 0, %s62
      %s80 = sphi 0, %s80
      %s82 = sphi 0, %s80
      %s83 = sphi 0, %s82
      %s97 = sphi 0, %s83
      %s103 = sphi 0, %s105
      %s106 = sphi 0, %s103
      %s107 = sphi 0, %s106
      %s123 = sphi 0, %s107
      %s127 = sphi 0, %s127
      %s129 = sphi 0, %s127
      %s130 = sphi 0, %s129
      %s144 = sphi 0, %s130
      %s148 = sphi 0, %s148
      %s150 = sphi 0, %s148
      %s151 = sphi 0, %s150
      %s165 = sphi 0, %s151
      %s169 = sphi 0, %s169
      %s171 = sphi 0, %s169
      %s172 = sphi 0, %s171
      %s186 = sphi 0, %s172
      %s190 = sphi 0, %s190
      %s192 = sphi 0, %s190
      %s193 = sphi 0, %s192
      %s207 = sphi 0, %s193
      %s211 = sphi 0, %s211
      %s213 = sphi 0, %s211
      %s214 = sphi 0, %s213
      %s228 = sphi 0, %s214
      %s232 = sphi 0, %s232
      %s234 = sphi 0, %s232
      %s235 = sphi 0, %s234
      %s249 = sphi 0, %s235
      %s253 = sphi 0, %s253
      %s255 = sphi 0, %s253
      %s256 = sphi 0, %s255
      %s270 = sphi 0, %s256
      %s274 = sphi 0, %s274
      %s276 = sphi 0, %s274
      %s277 = sphi 0, %s276
      %s291 = sphi 0, %s277
      %s295 = sphi 0, %s295
      %s297 = sphi 0, %s295
      %s298 = sphi 0, %s297
      %s312 = sphi 0, %s298
      %s316 = sphi 0, %s316
      %s318 = sphi 0, %s316
      %s319 = sphi 0, %s318
      %s333 = sphi 0, %s319
      %s337 = sphi 0, %s337
      %s339 = sphi 0, %s337
      %s340 = sphi 0, %s339
      %s354 = sphi 0, %s340
      %s358 = sphi 0, %s358
      %s360 = sphi 0, %s358
      %s361 = sphi 0, %s360
      %s375 = sphi 0, %s361
      %s379 = sphi 0, %s379
      %s381 = sphi 0, %s379
      %s382 = sphi 0, %s381
      %s396 = sphi 0, %s382
      %s400 = sphi 0, %s400
      %s402 = sphi 0, %s400
      %s403 = sphi 0, %s402
      %s417 = sphi 0, %s403
      %s421 = sphi 0, %s421
      %s423 = sphi 0, %s421
      %s424 = sphi 0, %s423
      %s438 = sphi 0, %s424
      %s442 = sphi 0, %s442
      %s444 = sphi 0, %s442
      %s445 = sphi 0, %s444
      %s459 = sphi 0, %s445
      %s463 = sphi 0, %s463
      %s465 = sphi 0, %s463
      %s466 = sphi 0, %s465
      %s480 = sphi 0, %s466
      %s484 = sphi 0, %s484
      %s486 = sphi 0, %s484
      %s487 = sphi 0, %s486
      %s501 = sphi 0, %s487
      %s505 = sphi 0, %s505
      %s507 = sphi 0, %s505
      %s508 = sphi 0, %s507
      %s522 = sphi 0, %s508
      %s526 = sphi 0, %s526
      %s528 = sphi 0, %s526
      %s529 = sphi 0, %s528
      %s543 = sphi 0, %s529
      %s549 = sphi 0, %s551
      %s552 = sphi 0, %s549
      %s553 = sphi 0, %s552
      %s569 = sphi 0, %s553
    $region4: #{tpu_custom_call.1} parent=1 // loop_header_branch
      %42 = sbr.rel (%p40) target = $region8
    $region5: #{tpu_custom_call.1} parent=1 // loop_body
      %s44 = ssub.s32 %s39, 1
      %s45 = ssub.s32 %s39, 2
      %s52 = sadd.s32 1, %s47
      %p53 = scmp.ge.s32.totalorder %s52, 3
      %s54 = scalar_select %p53, 0, %s52
      %s55 = sadd.s32 1, %s46
      %s56 = scalar_select %p53, %s55, %s46
      %p57 = scmp.ge.s32.totalorder %s56, 2
      %s58 = scalar_select %p57, 0, %s56
      %s60 = sadd.s32 %s59, 1
      %p63 = scmp.eq.s32.totalorder %s39, 5
      %p64 = scmp.ne.s32.totalorder %s59, %s61
      %p65 = scmp.eq.s32.totalorder %s39, 0
      %p66 = por %p64, %p65
      %p67 = scmp.ne.s32.totalorder %s59, %s61
      %p68 = scmp.eq.s32.totalorder %s44, 5
      %p69 = por %p67, %p68
      %p70 = scmp.ne.s32.totalorder %s61, %s62
      %p71 = scmp.eq.s32.totalorder %s44, 0
      %p72 = por %p70, %p71
      %p73 = scmp.ne.s32.totalorder %s61, %s62
      %p74 = scmp.eq.s32.totalorder %s45, 5
      %p75 = por %p73, %p74
      %p77 = scmp.ne.s32.totalorder %s62, %s76
      %p78 = scmp.eq.s32.totalorder %s45, 0
      %p79 = por %p77, %p78
      %s81 = sadd.s32 %s80, 1
      %p84 = scmp.eq.s32.totalorder %s39, 5
      %p85 = scmp.ne.s32.totalorder %s80, %s82
      %p86 = scmp.eq.s32.totalorder %s39, 0
      %p87 = por %p85, %p86
      %p88 = scmp.ne.s32.totalorder %s80, %s82
      %p89 = scmp.eq.s32.totalorder %s44, 5
      %p90 = por %p88, %p89
      %p91 = scmp.ne.s32.totalorder %s82, %s83
      %p92 = scmp.eq.s32.totalorder %s44, 0
      %p93 = por %p91, %p92
      %p94 = scmp.ne.s32.totalorder %s82, %s83
      %p95 = scmp.eq.s32.totalorder %s45, 5
      %p96 = por %p94, %p95
      %p98 = scmp.ne.s32.totalorder %s83, %s97
      %p99 = scmp.eq.s32.totalorder %s45, 0
      %p100 = por %p98, %p99
      %s101 = ssub.s32 %s47, %s54
      %p102 = scmp.eq.s32.totalorder %s101, 0
      %s104 = sadd.s32 %s103, 1
      %s105 = scalar_select %p102, %s103, %s104
      %p108 = pneg %p102
      %p109 = scmp.eq.s32.totalorder %s39, 5
      %p110 = por %p108, %p109
      %p111 = scmp.ne.s32.totalorder %s103, %s106
      %p112 = scmp.eq.s32.totalorder %s39, 0
      %p113 = por %p111, %p112
      %p114 = scmp.ne.s32.totalorder %s103, %s106
      %p115 = scmp.eq.s32.totalorder %s44, 5
      %p116 = por %p114, %p115
      %p117 = scmp.ne.s32.totalorder %s106, %s107
      %p118 = scmp.eq.s32.totalorder %s44, 0
      %p119 = por %p117, %p118
      %p120 = scmp.ne.s32.totalorder %s106, %s107
      %p121 = scmp.eq.s32.totalorder %s45, 5
      %p122 = por %p120, %p121
      %p124 = scmp.ne.s32.totalorder %s107, %s123
      %p125 = scmp.eq.s32.totalorder %s45, 0
      %p126 = por %p124, %p125
      %s128 = sadd.s32 %s127, 1
      %p131 = scmp.eq.s32.totalorder %s39, 5
      %p132 = scmp.ne.s32.totalorder %s127, %s129
      %p133 = scmp.eq.s32.totalorder %s39, 0
      %p134 = por %p132, %p133
      %p135 = scmp.ne.s32.totalorder %s127, %s129
      %p136 = scmp.eq.s32.totalorder %s44, 5
      %p137 = por %p135, %p136
      %p138 = scmp.ne.s32.totalorder %s129, %s130
      %p139 = scmp.eq.s32.totalorder %s44, 0
      %p140 = por %p138, %p139
      %p141 = scmp.ne.s32.totalorder %s129, %s130
      %p142 = scmp.eq.s32.totalorder %s45, 5
      %p143 = por %p141, %p142
      %p145 = scmp.ne.s32.totalorder %s130, %s144
      %p146 = scmp.eq.s32.totalorder %s45, 0
      %p147 = por %p145, %p146
      %s149 = sadd.s32 %s148, 1
      %p152 = scmp.eq.s32.totalorder %s39, 5
      %p153 = scmp.ne.s32.totalorder %s148, %s150
      %p154 = scmp.eq.s32.totalorder %s39, 0
      %p155 = por %p153, %p154
      %p156 = scmp.ne.s32.totalorder %s148, %s150
      %p157 = scmp.eq.s32.totalorder %s44, 5
      %p158 = por %p156, %p157
      %p159 = scmp.ne.s32.totalorder %s150, %s151
      %p160 = scmp.eq.s32.totalorder %s44, 0
      %p161 = por %p159, %p160
      %p162 = scmp.ne.s32.totalorder %s150, %s151
      %p163 = scmp.eq.s32.totalorder %s45, 5
      %p164 = por %p162, %p163
      %p166 = scmp.ne.s32.totalorder %s151, %s165
      %p167 = scmp.eq.s32.totalorder %s45, 0
      %p168 = por %p166, %p167
      %s170 = sadd.s32 %s169, 1
      %p173 = scmp.eq.s32.totalorder %s39, 5
      %p174 = scmp.ne.s32.totalorder %s169, %s171
      %p175 = scmp.eq.s32.totalorder %s39, 0
      %p176 = por %p174, %p175
      %p177 = scmp.ne.s32.totalorder %s169, %s171
      %p178 = scmp.eq.s32.totalorder %s44, 5
      %p179 = por %p177, %p178
      %p180 = scmp.ne.s32.totalorder %s171, %s172
      %p181 = scmp.eq.s32.totalorder %s44, 0
      %p182 = por %p180, %p181
      %p183 = scmp.ne.s32.totalorder %s171, %s172
      %p184 = scmp.eq.s32.totalorder %s45, 5
      %p185 = por %p183, %p184
      %p187 = scmp.ne.s32.totalorder %s172, %s186
      %p188 = scmp.eq.s32.totalorder %s45, 0
      %p189 = por %p187, %p188
      %s191 = sadd.s32 %s190, 1
      %p194 = scmp.eq.s32.totalorder %s39, 5
      %p195 = scmp.ne.s32.totalorder %s190, %s192
      %p196 = scmp.eq.s32.totalorder %s39, 0
      %p197 = por %p195, %p196
      %p198 = scmp.ne.s32.totalorder %s190, %s192
      %p199 = scmp.eq.s32.totalorder %s44, 5
      %p200 = por %p198, %p199
      %p201 = scmp.ne.s32.totalorder %s192, %s193
      %p202 = scmp.eq.s32.totalorder %s44, 0
      %p203 = por %p201, %p202
      %p204 = scmp.ne.s32.totalorder %s192, %s193
      %p205 = scmp.eq.s32.totalorder %s45, 5
      %p206 = por %p204, %p205
      %p208 = scmp.ne.s32.totalorder %s193, %s207
      %p209 = scmp.eq.s32.totalorder %s45, 0
      %p210 = por %p208, %p209
      %s212 = sadd.s32 %s211, 1
      %p215 = scmp.eq.s32.totalorder %s39, 5
      %p216 = scmp.ne.s32.totalorder %s211, %s213
      %p217 = scmp.eq.s32.totalorder %s39, 0
      %p218 = por %p216, %p217
      %p219 = scmp.ne.s32.totalorder %s211, %s213
      %p220 = scmp.eq.s32.totalorder %s44, 5
      %p221 = por %p219, %p220
      %p222 = scmp.ne.s32.totalorder %s213, %s214
      %p223 = scmp.eq.s32.totalorder %s44, 0
      %p224 = por %p222, %p223
      %p225 = scmp.ne.s32.totalorder %s213, %s214
      %p226 = scmp.eq.s32.totalorder %s45, 5
      %p227 = por %p225, %p226
      %p229 = scmp.ne.s32.totalorder %s214, %s228
      %p230 = scmp.eq.s32.totalorder %s45, 0
      %p231 = por %p229, %p230
      %s233 = sadd.s32 %s232, 1
      %p236 = scmp.eq.s32.totalorder %s39, 5
      %p237 = scmp.ne.s32.totalorder %s232, %s234
      %p238 = scmp.eq.s32.totalorder %s39, 0
      %p239 = por %p237, %p238
      %p240 = scmp.ne.s32.totalorder %s232, %s234
      %p241 = scmp.eq.s32.totalorder %s44, 5
      %p242 = por %p240, %p241
      %p243 = scmp.ne.s32.totalorder %s234, %s235
      %p244 = scmp.eq.s32.totalorder %s44, 0
      %p245 = por %p243, %p244
      %p246 = scmp.ne.s32.totalorder %s234, %s235
      %p247 = scmp.eq.s32.totalorder %s45, 5
      %p248 = por %p246, %p247
      %p250 = scmp.ne.s32.totalorder %s235, %s249
      %p251 = scmp.eq.s32.totalorder %s45, 0
      %p252 = por %p250, %p251
      %s254 = sadd.s32 %s253, 1
      %p257 = scmp.eq.s32.totalorder %s39, 5
      %p258 = scmp.ne.s32.totalorder %s253, %s255
      %p259 = scmp.eq.s32.totalorder %s39, 0
      %p260 = por %p258, %p259
      %p261 = scmp.ne.s32.totalorder %s253, %s255
      %p262 = scmp.eq.s32.totalorder %s44, 5
      %p263 = por %p261, %p262
      %p264 = scmp.ne.s32.totalorder %s255, %s256
      %p265 = scmp.eq.s32.totalorder %s44, 0
      %p266 = por %p264, %p265
      %p267 = scmp.ne.s32.totalorder %s255, %s256
      %p268 = scmp.eq.s32.totalorder %s45, 5
      %p269 = por %p267, %p268
      %p271 = scmp.ne.s32.totalorder %s256, %s270
      %p272 = scmp.eq.s32.totalorder %s45, 0
      %p273 = por %p271, %p272
      %s275 = sadd.s32 %s274, 1
      %p278 = scmp.eq.s32.totalorder %s39, 5
      %p279 = scmp.ne.s32.totalorder %s274, %s276
      %p280 = scmp.eq.s32.totalorder %s39, 0
      %p281 = por %p279, %p280
      %p282 = scmp.ne.s32.totalorder %s274, %s276
      %p283 = scmp.eq.s32.totalorder %s44, 5
      %p284 = por %p282, %p283
      %p285 = scmp.ne.s32.totalorder %s276, %s277
      %p286 = scmp.eq.s32.totalorder %s44, 0
      %p287 = por %p285, %p286
      %p288 = scmp.ne.s32.totalorder %s276, %s277
      %p289 = scmp.eq.s32.totalorder %s45, 5
      %p290 = por %p288, %p289
      %p292 = scmp.ne.s32.totalorder %s277, %s291
      %p293 = scmp.eq.s32.totalorder %s45, 0
      %p294 = por %p292, %p293
      %s296 = sadd.s32 %s295, 1
      %p299 = scmp.eq.s32.totalorder %s39, 5
      %p300 = scmp.ne.s32.totalorder %s295, %s297
      %p301 = scmp.eq.s32.totalorder %s39, 0
      %p302 = por %p300, %p301
      %p303 = scmp.ne.s32.totalorder %s295, %s297
      %p304 = scmp.eq.s32.totalorder %s44, 5
      %p305 = por %p303, %p304
      %p306 = scmp.ne.s32.totalorder %s297, %s298
      %p307 = scmp.eq.s32.totalorder %s44, 0
      %p308 = por %p306, %p307
      %p309 = scmp.ne.s32.totalorder %s297, %s298
      %p310 = scmp.eq.s32.totalorder %s45, 5
      %p311 = por %p309, %p310
      %p313 = scmp.ne.s32.totalorder %s298, %s312
      %p314 = scmp.eq.s32.totalorder %s45, 0
      %p315 = por %p313, %p314
      %s317 = sadd.s32 %s316, 1
      %p320 = scmp.eq.s32.totalorder %s39, 5
      %p321 = scmp.ne.s32.totalorder %s316, %s318
      %p322 = scmp.eq.s32.totalorder %s39, 0
      %p323 = por %p321, %p322
      %p324 = scmp.ne.s32.totalorder %s316, %s318
      %p325 = scmp.eq.s32.totalorder %s44, 5
      %p326 = por %p324, %p325
      %p327 = scmp.ne.s32.totalorder %s318, %s319
      %p328 = scmp.eq.s32.totalorder %s44, 0
      %p329 = por %p327, %p328
      %p330 = scmp.ne.s32.totalorder %s318, %s319
      %p331 = scmp.eq.s32.totalorder %s45, 5
      %p332 = por %p330, %p331
      %p334 = scmp.ne.s32.totalorder %s319, %s333
      %p335 = scmp.eq.s32.totalorder %s45, 0
      %p336 = por %p334, %p335
      %s338 = sadd.s32 %s337, 1
      %p341 = scmp.eq.s32.totalorder %s39, 5
      %p342 = scmp.ne.s32.totalorder %s337, %s339
      %p343 = scmp.eq.s32.totalorder %s39, 0
      %p344 = por %p342, %p343
      %p345 = scmp.ne.s32.totalorder %s337, %s339
      %p346 = scmp.eq.s32.totalorder %s44, 5
      %p347 = por %p345, %p346
      %p348 = scmp.ne.s32.totalorder %s339, %s340
      %p349 = scmp.eq.s32.totalorder %s44, 0
      %p350 = por %p348, %p349
      %p351 = scmp.ne.s32.totalorder %s339, %s340
      %p352 = scmp.eq.s32.totalorder %s45, 5
      %p353 = por %p351, %p352
      %p355 = scmp.ne.s32.totalorder %s340, %s354
      %p356 = scmp.eq.s32.totalorder %s45, 0
      %p357 = por %p355, %p356
      %s359 = sadd.s32 %s358, 1
      %p362 = scmp.eq.s32.totalorder %s39, 5
      %p363 = scmp.ne.s32.totalorder %s358, %s360
      %p364 = scmp.eq.s32.totalorder %s39, 0
      %p365 = por %p363, %p364
      %p366 = scmp.ne.s32.totalorder %s358, %s360
      %p367 = scmp.eq.s32.totalorder %s44, 5
      %p368 = por %p366, %p367
      %p369 = scmp.ne.s32.totalorder %s360, %s361
      %p370 = scmp.eq.s32.totalorder %s44, 0
      %p371 = por %p369, %p370
      %p372 = scmp.ne.s32.totalorder %s360, %s361
      %p373 = scmp.eq.s32.totalorder %s45, 5
      %p374 = por %p372, %p373
      %p376 = scmp.ne.s32.totalorder %s361, %s375
      %p377 = scmp.eq.s32.totalorder %s45, 0
      %p378 = por %p376, %p377
      %s380 = sadd.s32 %s379, 1
      %p383 = scmp.eq.s32.totalorder %s39, 5
      %p384 = scmp.ne.s32.totalorder %s379, %s381
      %p385 = scmp.eq.s32.totalorder %s39, 0
      %p386 = por %p384, %p385
      %p387 = scmp.ne.s32.totalorder %s379, %s381
      %p388 = scmp.eq.s32.totalorder %s44, 5
      %p389 = por %p387, %p388
      %p390 = scmp.ne.s32.totalorder %s381, %s382
      %p391 = scmp.eq.s32.totalorder %s44, 0
      %p392 = por %p390, %p391
      %p393 = scmp.ne.s32.totalorder %s381, %s382
      %p394 = scmp.eq.s32.totalorder %s45, 5
      %p395 = por %p393, %p394
      %p397 = scmp.ne.s32.totalorder %s382, %s396
      %p398 = scmp.eq.s32.totalorder %s45, 0
      %p399 = por %p397, %p398
      %s401 = sadd.s32 %s400, 1
      %p404 = scmp.eq.s32.totalorder %s39, 5
      %p405 = scmp.ne.s32.totalorder %s400, %s402
      %p406 = scmp.eq.s32.totalorder %s39, 0
      %p407 = por %p405, %p406
      %p408 = scmp.ne.s32.totalorder %s400, %s402
      %p409 = scmp.eq.s32.totalorder %s44, 5
      %p410 = por %p408, %p409
      %p411 = scmp.ne.s32.totalorder %s402, %s403
      %p412 = scmp.eq.s32.totalorder %s44, 0
      %p413 = por %p411, %p412
      %p414 = scmp.ne.s32.totalorder %s402, %s403
      %p415 = scmp.eq.s32.totalorder %s45, 5
      %p416 = por %p414, %p415
      %p418 = scmp.ne.s32.totalorder %s403, %s417
      %p419 = scmp.eq.s32.totalorder %s45, 0
      %p420 = por %p418, %p419
      %s422 = sadd.s32 %s421, 1
      %p425 = scmp.eq.s32.totalorder %s39, 5
      %p426 = scmp.ne.s32.totalorder %s421, %s423
      %p427 = scmp.eq.s32.totalorder %s39, 0
      %p428 = por %p426, %p427
      %p429 = scmp.ne.s32.totalorder %s421, %s423
      %p430 = scmp.eq.s32.totalorder %s44, 5
      %p431 = por %p429, %p430
      %p432 = scmp.ne.s32.totalorder %s423, %s424
      %p433 = scmp.eq.s32.totalorder %s44, 0
      %p434 = por %p432, %p433
      %p435 = scmp.ne.s32.totalorder %s423, %s424
      %p436 = scmp.eq.s32.totalorder %s45, 5
      %p437 = por %p435, %p436
      %p439 = scmp.ne.s32.totalorder %s424, %s438
      %p440 = scmp.eq.s32.totalorder %s45, 0
      %p441 = por %p439, %p440
      %s443 = sadd.s32 %s442, 1
      %p446 = scmp.eq.s32.totalorder %s39, 5
      %p447 = scmp.ne.s32.totalorder %s442, %s444
      %p448 = scmp.eq.s32.totalorder %s39, 0
      %p449 = por %p447, %p448
      %p450 = scmp.ne.s32.totalorder %s442, %s444
      %p451 = scmp.eq.s32.totalorder %s44, 5
      %p452 = por %p450, %p451
      %p453 = scmp.ne.s32.totalorder %s444, %s445
      %p454 = scmp.eq.s32.totalorder %s44, 0
      %p455 = por %p453, %p454
      %p456 = scmp.ne.s32.totalorder %s444, %s445
      %p457 = scmp.eq.s32.totalorder %s45, 5
      %p458 = por %p456, %p457
      %p460 = scmp.ne.s32.totalorder %s445, %s459
      %p461 = scmp.eq.s32.totalorder %s45, 0
      %p462 = por %p460, %p461
      %s464 = sadd.s32 %s463, 1
      %p467 = scmp.eq.s32.totalorder %s39, 5
      %p468 = scmp.ne.s32.totalorder %s463, %s465
      %p469 = scmp.eq.s32.totalorder %s39, 0
      %p470 = por %p468, %p469
      %p471 = scmp.ne.s32.totalorder %s463, %s465
      %p472 = scmp.eq.s32.totalorder %s44, 5
      %p473 = por %p471, %p472
      %p474 = scmp.ne.s32.totalorder %s465, %s466
      %p475 = scmp.eq.s32.totalorder %s44, 0
      %p476 = por %p474, %p475
      %p477 = scmp.ne.s32.totalorder %s465, %s466
      %p478 = scmp.eq.s32.totalorder %s45, 5
      %p479 = por %p477, %p478
      %p481 = scmp.ne.s32.totalorder %s466, %s480
      %p482 = scmp.eq.s32.totalorder %s45, 0
      %p483 = por %p481, %p482
      %s485 = sadd.s32 %s484, 1
      %p488 = scmp.eq.s32.totalorder %s39, 5
      %p489 = scmp.ne.s32.totalorder %s484, %s486
      %p490 = scmp.eq.s32.totalorder %s39, 0
      %p491 = por %p489, %p490
      %p492 = scmp.ne.s32.totalorder %s484, %s486
      %p493 = scmp.eq.s32.totalorder %s44, 5
      %p494 = por %p492, %p493
      %p495 = scmp.ne.s32.totalorder %s486, %s487
      %p496 = scmp.eq.s32.totalorder %s44, 0
      %p497 = por %p495, %p496
      %p498 = scmp.ne.s32.totalorder %s486, %s487
      %p499 = scmp.eq.s32.totalorder %s45, 5
      %p500 = por %p498, %p499
      %p502 = scmp.ne.s32.totalorder %s487, %s501
      %p503 = scmp.eq.s32.totalorder %s45, 0
      %p504 = por %p502, %p503
      %s506 = sadd.s32 %s505, 1
      %p509 = scmp.eq.s32.totalorder %s39, 5
      %p510 = scmp.ne.s32.totalorder %s505, %s507
      %p511 = scmp.eq.s32.totalorder %s39, 0
      %p512 = por %p510, %p511
      %p513 = scmp.ne.s32.totalorder %s505, %s507
      %p514 = scmp.eq.s32.totalorder %s44, 5
      %p515 = por %p513, %p514
      %p516 = scmp.ne.s32.totalorder %s507, %s508
      %p517 = scmp.eq.s32.totalorder %s44, 0
      %p518 = por %p516, %p517
      %p519 = scmp.ne.s32.totalorder %s507, %s508
      %p520 = scmp.eq.s32.totalorder %s45, 5
      %p521 = por %p519, %p520
      %p523 = scmp.ne.s32.totalorder %s508, %s522
      %p524 = scmp.eq.s32.totalorder %s45, 0
      %p525 = por %p523, %p524
      %s527 = sadd.s32 %s526, 1
      %p530 = scmp.eq.s32.totalorder %s39, 5
      %p531 = scmp.ne.s32.totalorder %s526, %s528
      %p532 = scmp.eq.s32.totalorder %s39, 0
      %p533 = por %p531, %p532
      %p534 = scmp.ne.s32.totalorder %s526, %s528
      %p535 = scmp.eq.s32.totalorder %s44, 5
      %p536 = por %p534, %p535
      %p537 = scmp.ne.s32.totalorder %s528, %s529
      %p538 = scmp.eq.s32.totalorder %s44, 0
      %p539 = por %p537, %p538
      %p540 = scmp.ne.s32.totalorder %s528, %s529
      %p541 = scmp.eq.s32.totalorder %s45, 5
      %p542 = por %p540, %p541
      %p544 = scmp.ne.s32.totalorder %s529, %s543
      %p545 = scmp.eq.s32.totalorder %s45, 0
      %p546 = por %p544, %p545
      %s547 = ssub.s32 %s46, %s58
      %p548 = scmp.eq.s32.totalorder %s547, 0
      %s550 = sadd.s32 %s549, 1
      %s551 = scalar_select %p548, %s549, %s550
      %p554 = pneg %p548
      %p555 = scmp.eq.s32.totalorder %s39, 5
      %p556 = por %p554, %p555
      %p557 = scmp.ne.s32.totalorder %s549, %s552
      %p558 = scmp.eq.s32.totalorder %s39, 0
      %p559 = por %p557, %p558
      %p560 = scmp.ne.s32.totalorder %s549, %s552
      %p561 = scmp.eq.s32.totalorder %s44, 5
      %p562 = por %p560, %p561
      %p563 = scmp.ne.s32.totalorder %s552, %s553
      %p564 = scmp.eq.s32.totalorder %s44, 0
      %p565 = por %p563, %p564
      %p566 = scmp.ne.s32.totalorder %s552, %s553
      %p567 = scmp.eq.s32.totalorder %s45, 5
      %p568 = por %p566, %p567
      %p570 = scmp.ne.s32.totalorder %s553, %s569
      %p571 = scmp.eq.s32.totalorder %s45, 0
      %p572 = por %p570, %p571
      %p573 = scmp.le.s32.totalorder 1, %s39
      %p574 = scmp.lt.s32.totalorder %s39, 7
      %p575 = pnand %p573, %p574
      %p576 = pneg %p575
      // Predicated region
      $region9: #{tpu_custom_call.1} parent=5 // pred_check
        _
      $region10: #{tpu_custom_call.1} parent=5 // pred_check_branch
        %578 = sbr.rel (%p575) target = $region12
      $region11: #{tpu_custom_call.1} parent=5 // pred_region
        %s579 = ssub.s32 %s39, 1
        // Predicated region
        $region13: #{tpu_custom_call.1} parent=11 // pred_check
          %p580 = pneg %p72
        $region14: #{tpu_custom_call.1} parent=11 // pred_check_branch
          %582 = sbr.rel (%p580) target = $region16
        $region15: #{tpu_custom_call.1} parent=11 // pred_region
          _
        $region16: #{tpu_custom_call.1} parent=11 // pred_fallthru
          _
        // Predicated region
        $region17: #{tpu_custom_call.1} parent=11 // pred_check
          %p583 = pneg %p93
        $region18: #{tpu_custom_call.1} parent=11 // pred_check_branch
          %585 = sbr.rel (%p583) target = $region20
        $region19: #{tpu_custom_call.1} parent=11 // pred_region
          %s587 = ssub.s32 256, 256
          %588 = vsyncadd [#allocation6], %s587
          %s589 = sshll.u32 [#allocation5], 4
          %s590 = int_to_ptr.vmem [resolvable:$true] %s589
          %595 = dma.hbm_to_vmem [thread:$0]  %s1, 256, %s590, [#allocation6], 128, 128, 8
        $region20: #{tpu_custom_call.1} parent=11 // pred_fallthru
          _
        // Predicated region
        $region21: #{tpu_custom_call.1} parent=11 // pred_check
          %p596 = pneg %p140
        $region22: #{tpu_custom_call.1} parent=11 // pred_check_branch
          %598 = sbr.rel (%p596) target = $region24
        $region23: #{tpu_custom_call.1} parent=11 // pred_region
          %s600 = ssub.s32 384, 384
          %601 = vsyncadd [#allocation9], %s600
          %s602 = sshll.u32 [#allocation8], 4
          %s603 = int_to_ptr.vmem [resolvable:$true] %s602
          %608 = dma.hbm_to_vmem [thread:$0]  %s3, 384, %s603, [#allocation9], 128, 128, 8
        $region24: #{tpu_custom_call.1} parent=11 // pred_fallthru
          _
        // Predicated region
        $region25: #{tpu_custom_call.1} parent=11 // pred_check
          %p609 = pneg %p161
        $region26: #{tpu_custom_call.1} parent=11 // pred_check_branch
          %611 = sbr.rel (%p609) target = $region28
        $region27: #{tpu_custom_call.1} parent=11 // pred_region
          %s613 = ssub.s32 16, 16
          %614 = vsyncadd [#allocation9], %s613
          %s616 = sshll.u32 [#allocation10], 4
          %s617 = int_to_ptr.vmem [resolvable:$true] %s616
          %619 = dma.hbm_to_vmem [thread:$0]  %s4, 16, %s617, [#allocation9]
        $region28: #{tpu_custom_call.1} parent=11 // pred_fallthru
          _
        // Predicated region
        $region29: #{tpu_custom_call.1} parent=11 // pred_check
          %p620 = pneg %p182
        $region30: #{tpu_custom_call.1} parent=11 // pred_check_branch
          %622 = sbr.rel (%p620) target = $region32
        $region31: #{tpu_custom_call.1} parent=11 // pred_region
          %s624 = ssub.s32 2048, 2048
          %625 = vsyncadd [#allocation12], %s624
          %s626 = sshll.u32 [#allocation11], 4
          %s627 = int_to_ptr.vmem [resolvable:$true] %s626
          %632 = dma.hbm_to_vmem [thread:$0]  %s5, 2048, %s627, [#allocation12], 128, 128, 8
        $region32: #{tpu_custom_call.1} parent=11 // pred_fallthru
          _
        // Predicated region
        $region33: #{tpu_custom_call.1} parent=11 // pred_check
          %p633 = pneg %p203
        $region34: #{tpu_custom_call.1} parent=11 // pred_check_branch
          %635 = sbr.rel (%p633) target = $region36
        $region35: #{tpu_custom_call.1} parent=11 // pred_region
          %s637 = ssub.s32 16, 16
          %638 = vsyncadd [#allocation12], %s637
          %s640 = sshll.u32 [#allocation13], 4
          %s641 = int_to_ptr.vmem [resolvable:$true] %s640
          %643 = dma.hbm_to_vmem [thread:$0]  %s6, 16, %s641, [#allocation12]
        $region36: #{tpu_custom_call.1} parent=11 // pred_fallthru
          _
        // Predicated region
        $region37: #{tpu_custom_call.1} parent=11 // pred_check
          %p644 = pneg %p224
        $region38: #{tpu_custom_call.1} parent=11 // pred_check_branch
          %646 = sbr.rel (%p644) target = $region40
        $region39: #{tpu_custom_call.1} parent=11 // pred_region
          %s648 = ssub.s32 2048, 2048
          %649 = vsyncadd [#allocation15], %s648
          %s650 = sshll.u32 [#allocation14], 4
          %s651 = int_to_ptr.vmem [resolvable:$true] %s650
          %656 = dma.hbm_to_vmem [thread:$0]  %s7, 2048, %s651, [#allocation15], 128, 128, 8
        $region40: #{tpu_custom_call.1} parent=11 // pred_fallthru
          _
        // Predicated region
        $region41: #{tpu_custom_call.1} parent=11 // pred_check
          %p657 = pneg %p245
        $region42: #{tpu_custom_call.1} parent=11 // pred_check_branch
          %659 = sbr.rel (%p657) target = $region44
        $region43: #{tpu_custom_call.1} parent=11 // pred_region
          _
        $region44: #{tpu_custom_call.1} parent=11 // pred_fallthru
          _
        // Predicated region
        $region45: #{tpu_custom_call.1} parent=11 // pred_check
          %p660 = pneg %p266
        $region46: #{tpu_custom_call.1} parent=11 // pred_check_branch
          %662 = sbr.rel (%p660) target = $region48
        $region47: #{tpu_custom_call.1} parent=11 // pred_region
          %s664 = ssub.s32 16, 16
          %665 = vsyncadd [#allocation15], %s664
          %s667 = sshll.u32 [#allocation16], 4
          %s668 = int_to_ptr.vmem [resolvable:$true] %s667
          %670 = dma.hbm_to_vmem [thread:$0]  %s9, 16, %s668, [#allocation15]
        $region48: #{tpu_custom_call.1} parent=11 // pred_fallthru
          _
        // Predicated region
        $region49: #{tpu_custom_call.1} parent=11 // pred_check
          %p671 = pneg %p287
        $region50: #{tpu_custom_call.1} parent=11 // pred_check_branch
          %673 = sbr.rel (%p671) target = $region52
        $region51: #{tpu_custom_call.1} parent=11 // pred_region
          %s675 = ssub.s32 2048, 2048
          %676 = vsyncadd [#allocation18], %s675
          %s677 = sshll.u32 [#allocation17], 4
          %s678 = int_to_ptr.vmem [resolvable:$true] %s677
          %683 = dma.hbm_to_vmem [thread:$0]  %s10, 2048, %s678, [#allocation18], 128, 128, 8
        $region52: #{tpu_custom_call.1} parent=11 // pred_fallthru
          _
        // Predicated region
        $region53: #{tpu_custom_call.1} parent=11 // pred_check
          %p684 = pneg %p308
        $region54: #{tpu_custom_call.1} parent=11 // pred_check_branch
          %686 = sbr.rel (%p684) target = $region56
        $region55: #{tpu_custom_call.1} parent=11 // pred_region
          _
        $region56: #{tpu_custom_call.1} parent=11 // pred_fallthru
          _
        // Predicated region
        $region57: #{tpu_custom_call.1} parent=11 // pred_check
          %p687 = pneg %p329
        $region58: #{tpu_custom_call.1} parent=11 // pred_check_branch
          %689 = sbr.rel (%p687) target = $region60
        $region59: #{tpu_custom_call.1} parent=11 // pred_region
          _
        $region60: #{tpu_custom_call.1} parent=11 // pred_fallthru
          _
        // Predicated region
        $region61: #{tpu_custom_call.1} parent=11 // pred_check
          %p690 = pneg %p350
        $region62: #{tpu_custom_call.1} parent=11 // pred_check_branch
          %692 = sbr.rel (%p690) target = $region64
        $region63: #{tpu_custom_call.1} parent=11 // pred_region
          _
        $region64: #{tpu_custom_call.1} parent=11 // pred_fallthru
          _
        // Predicated region
        $region65: #{tpu_custom_call.1} parent=11 // pred_check
          %p693 = pneg %p371
        $region66: #{tpu_custom_call.1} parent=11 // pred_check_branch
          %695 = sbr.rel (%p693) target = $region68
        $region67: #{tpu_custom_call.1} parent=11 // pred_region
          _
        $region68: #{tpu_custom_call.1} parent=11 // pred_fallthru
          _
        // Predicated region
        $region69: #{tpu_custom_call.1} parent=11 // pred_check
          %p696 = pneg %p392
        $region70: #{tpu_custom_call.1} parent=11 // pred_check_branch
          %698 = sbr.rel (%p696) target = $region72
        $region71: #{tpu_custom_call.1} parent=11 // pred_region
          %s700 = ssub.s32 2048, 2048
          %701 = vsyncadd [#allocation18], %s700
          %s702 = sshll.u32 [#allocation19], 4
          %s703 = int_to_ptr.vmem [resolvable:$true] %s702
          %708 = dma.hbm_to_vmem [thread:$0]  %s15, 2048, %s703, [#allocation18], 128, 128, 8
        $region72: #{tpu_custom_call.1} parent=11 // pred_fallthru
          _
        // Predicated region
        $region73: #{tpu_custom_call.1} parent=11 // pred_check
          %p709 = pneg %p413
        $region74: #{tpu_custom_call.1} parent=11 // pred_check_branch
          %711 = sbr.rel (%p709) target = $region76
        $region75: #{tpu_custom_call.1} parent=11 // pred_region
          _
        $region76: #{tpu_custom_call.1} parent=11 // pred_fallthru
          _
        // Predicated region
        $region77: #{tpu_custom_call.1} parent=11 // pred_check
          %p712 = pneg %p434
        $region78: #{tpu_custom_call.1} parent=11 // pred_check_branch
          %714 = sbr.rel (%p712) target = $region80
        $region79: #{tpu_custom_call.1} parent=11 // pred_region
          _
        $region80: #{tpu_custom_call.1} parent=11 // pred_fallthru
          _
        // Predicated region
        $region81: #{tpu_custom_call.1} parent=11 // pred_check
          %p715 = pneg %p455
        $region82: #{tpu_custom_call.1} parent=11 // pred_check_branch
          %717 = sbr.rel (%p715) target = $region84
        $region83: #{tpu_custom_call.1} parent=11 // pred_region
          _
        $region84: #{tpu_custom_call.1} parent=11 // pred_fallthru
          _
        // Predicated region
        $region85: #{tpu_custom_call.1} parent=11 // pred_check
          %p718 = pneg %p476
        $region86: #{tpu_custom_call.1} parent=11 // pred_check_branch
          %720 = sbr.rel (%p718) target = $region88
        $region87: #{tpu_custom_call.1} parent=11 // pred_region
          %s722 = ssub.s32 2048, 2048
          %723 = vsyncadd [#allocation21], %s722
          %s724 = sshll.u32 [#allocation20], 4
          %s725 = int_to_ptr.vmem [resolvable:$true] %s724
          %730 = dma.hbm_to_vmem [thread:$0]  %s19, 2048, %s725, [#allocation21], 128, 128, 8
        $region88: #{tpu_custom_call.1} parent=11 // pred_fallthru
          _
        // Predicated region
        $region89: #{tpu_custom_call.1} parent=11 // pred_check
          %p731 = pneg %p497
        $region90: #{tpu_custom_call.1} parent=11 // pred_check_branch
          %733 = sbr.rel (%p731) target = $region92
        $region91: #{tpu_custom_call.1} parent=11 // pred_region
          _
        $region92: #{tpu_custom_call.1} parent=11 // pred_fallthru
          _
        // Predicated region
        $region93: #{tpu_custom_call.1} parent=11 // pred_check
          %p734 = pneg %p518
        $region94: #{tpu_custom_call.1} parent=11 // pred_check_branch
          %736 = sbr.rel (%p734) target = $region96
        $region95: #{tpu_custom_call.1} parent=11 // pred_region
          _
        $region96: #{tpu_custom_call.1} parent=11 // pred_fallthru
          _
        // Predicated region
        $region97: #{tpu_custom_call.1} parent=11 // pred_check
          %p737 = pneg %p539
        $region98: #{tpu_custom_call.1} parent=11 // pred_check_branch
          %739 = sbr.rel (%p737) target = $region100
        $region99: #{tpu_custom_call.1} parent=11 // pred_region
          _
        $region100: #{tpu_custom_call.1} parent=11 // pred_fallthru
          _
      $region12: #{tpu_custom_call.1} parent=5 // pred_fallthru
        _
      %p740 = scmp.lt.s32.totalorder %s39, 6
      // Predicated region
      $region101: #{tpu_custom_call.1} parent=5 // pred_check
        %p741 = pneg %p740
      $region102: #{tpu_custom_call.1} parent=5 // pred_check_branch
        %743 = sbr.rel (%p741) target = $region104
      $region103: #{tpu_custom_call.1} parent=5 // pred_region
        // Predicated region
        $region105: #{tpu_custom_call.1} parent=103 // pred_check
          %p744 = pneg %p113
        $region106: #{tpu_custom_call.1} parent=103 // pred_check_branch
          %746 = sbr.rel (%p744) target = $region108
        $region107: #{tpu_custom_call.1} parent=103 // pred_region
          %s747 = smul.u32 2, %s47
          %p748 = scmp.lt.s32.totalorder %s747, 5
          %s749 = scalar_select %p748, %s747, 5
          %s750 = smul.addr %s749, 8
          %s751 = scalar_lea.vmem %s2, %s750
          %s752 = smul.u32 2, %s47
        $region108: #{tpu_custom_call.1} parent=103 // pred_fallthru
          _
      $region104: #{tpu_custom_call.1} parent=5 // pred_fallthru
        _
      %p753 = scmp.le.s32.totalorder 1, %s39
      %p754 = scmp.lt.s32.totalorder %s39, 7
      %p755 = pnand %p753, %p754
      %p756 = pneg %p755
      // Predicated region
      $region109: #{tpu_custom_call.1} parent=5 // pred_check
        _
      $region110: #{tpu_custom_call.1} parent=5 // pred_check_branch
        %758 = sbr.rel (%p755) target = $region112
      $region111: #{tpu_custom_call.1} parent=5 // pred_region
        %s759 = ssub.s32 %s39, 1
        // Predicated region
        $region113: #{tpu_custom_call.1} parent=111 // pred_check
          %p760 = pneg %p93
        $region114: #{tpu_custom_call.1} parent=111 // pred_check_branch
          %762 = sbr.rel (%p760) target = $region116
        $region115: #{tpu_custom_call.1} parent=111 // pred_region
          %763 = dma.done [#allocation6], 256
        $region116: #{tpu_custom_call.1} parent=111 // pred_fallthru
          _
        // Predicated region
        $region117: #{tpu_custom_call.1} parent=111 // pred_check
          %p764 = pneg %p140
        $region118: #{tpu_custom_call.1} parent=111 // pred_check_branch
          %766 = sbr.rel (%p764) target = $region120
        $region119: #{tpu_custom_call.1} parent=111 // pred_region
          %767 = dma.done [#allocation9], 384
        $region120: #{tpu_custom_call.1} parent=111 // pred_fallthru
          _
        // Predicated region
        $region121: #{tpu_custom_call.1} parent=111 // pred_check
          %p768 = pneg %p161
        $region122: #{tpu_custom_call.1} parent=111 // pred_check_branch
          %770 = sbr.rel (%p768) target = $region124
        $region123: #{tpu_custom_call.1} parent=111 // pred_region
          %771 = dma.done [#allocation9], 16
        $region124: #{tpu_custom_call.1} parent=111 // pred_fallthru
          _
        // Predicated region
        $region125: #{tpu_custom_call.1} parent=111 // pred_check
          %p772 = pneg %p182
        $region126: #{tpu_custom_call.1} parent=111 // pred_check_branch
          %774 = sbr.rel (%p772) target = $region128
        $region127: #{tpu_custom_call.1} parent=111 // pred_region
          %775 = dma.done [#allocation12], 2048
        $region128: #{tpu_custom_call.1} parent=111 // pred_fallthru
          _
        // Predicated region
        $region129: #{tpu_custom_call.1} parent=111 // pred_check
          %p776 = pneg %p203
        $region130: #{tpu_custom_call.1} parent=111 // pred_check_branch
          %778 = sbr.rel (%p776) target = $region132
        $region131: #{tpu_custom_call.1} parent=111 // pred_region
          %779 = dma.done [#allocation12], 16
        $region132: #{tpu_custom_call.1} parent=111 // pred_fallthru
          _
        // Predicated region
        $region133: #{tpu_custom_call.1} parent=111 // pred_check
          %p780 = pneg %p224
        $region134: #{tpu_custom_call.1} parent=111 // pred_check_branch
          %782 = sbr.rel (%p780) target = $region136
        $region135: #{tpu_custom_call.1} parent=111 // pred_region
          %783 = dma.done [#allocation15], 2048
        $region136: #{tpu_custom_call.1} parent=111 // pred_fallthru
          _
        // Predicated region
        $region137: #{tpu_custom_call.1} parent=111 // pred_check
          %p784 = pneg %p266
        $region138: #{tpu_custom_call.1} parent=111 // pred_check_branch
          %786 = sbr.rel (%p784) target = $region140
        $region139: #{tpu_custom_call.1} parent=111 // pred_region
          %787 = dma.done [#allocation15], 16
        $region140: #{tpu_custom_call.1} parent=111 // pred_fallthru
          _
        // Predicated region
        $region141: #{tpu_custom_call.1} parent=111 // pred_check
          %p788 = pneg %p287
        $region142: #{tpu_custom_call.1} parent=111 // pred_check_branch
          %790 = sbr.rel (%p788) target = $region144
        $region143: #{tpu_custom_call.1} parent=111 // pred_region
          %791 = dma.done [#allocation18], 2048
        $region144: #{tpu_custom_call.1} parent=111 // pred_fallthru
          _
        // Predicated region
        $region145: #{tpu_custom_call.1} parent=111 // pred_check
          %p792 = pneg %p392
        $region146: #{tpu_custom_call.1} parent=111 // pred_check_branch
          %794 = sbr.rel (%p792) target = $region148
        $region147: #{tpu_custom_call.1} parent=111 // pred_region
          %795 = dma.done [#allocation18], 2048
        $region148: #{tpu_custom_call.1} parent=111 // pred_fallthru
          _
        // Predicated region
        $region149: #{tpu_custom_call.1} parent=111 // pred_check
          %p796 = pneg %p476
        $region150: #{tpu_custom_call.1} parent=111 // pred_check_branch
          %798 = sbr.rel (%p796) target = $region152
        $region151: #{tpu_custom_call.1} parent=111 // pred_region
          %799 = dma.done [#allocation21], 2048
        $region152: #{tpu_custom_call.1} parent=111 // pred_fallthru
          _
        %p800 = pneg %p72
        %p801 = pneg %p69
        %p802 = pneg %p93
        %p803 = pneg %p90
        %s804 = smul.u32 2, %s49
        %p805 = scmp.lt.s32.totalorder %s804, 5
        %s806 = scalar_select %p805, %s804, 5
        %s807 = smul.addr %s806, 8
        %s808 = scalar_lea.vmem %s2, %s807
        %p809 = pneg %p119
        %p810 = pneg %p116
        %p811 = pneg %p140
        %p812 = pneg %p137
        %p813 = pneg %p161
        %p814 = pneg %p158
        %p815 = pneg %p182
        %p816 = pneg %p179
        %p817 = pneg %p203
        %p818 = pneg %p200
        %p819 = pneg %p224
        %p820 = pneg %p221
        %p821 = pneg %p245
        %p822 = pneg %p242
        %p823 = pneg %p266
        %p824 = pneg %p263
        %p825 = pneg %p287
        %p826 = pneg %p284
        %p827 = pneg %p308
        %p828 = pneg %p305
        %p829 = pneg %p329
        %p830 = pneg %p326
        %p831 = pneg %p350
        %p832 = pneg %p347
        %p833 = pneg %p371
        %p834 = pneg %p368
        %p835 = pneg %p392
        %p836 = pneg %p389
        %p837 = pneg %p413
        %p838 = pneg %p410
        %p839 = pneg %p434
        %p840 = pneg %p431
        %p841 = pneg %p455
        %p842 = pneg %p452
        %p843 = pneg %p476
        %p844 = pneg %p473
        %p845 = pneg %p497
        %p846 = pneg %p494
        %p847 = pneg %p518
        %p848 = pneg %p515
        %p849 = pneg %p539
        %p850 = pneg %p536
        %p851 = pneg %p565
        %p852 = pneg %p562
        %s853 = sand.u32 %s552, 1
        %s854 = scalar_lea.sflag [#allocation7], %s853
        %s855 = sand.u32 %s552, 1
        %s856 = smul.addr %s855, 8
        %s857 = scalar_lea.vmem [#allocation22], %s856
        %s858 = smul.u32 2, %s49
        %p859 = scmp.lt.s32.totalorder %s858, 5
        %s860 = scalar_select %p859, %s858, 5
        %s861 = smul.addr %s860, 8
        %s862 = scalar_lea.vmem %s2, %s861
        %s863 = smul.u32 2, %s49
        %s865 = smul.u32 %s48, 8
        %p866 = scmp.eq.s32.totalorder %s49, 0
        // Predicated region
        $region153: #{tpu_custom_call.1} parent=111 // pred_check
          %p867 = pneg %p866
        $region154: #{tpu_custom_call.1} parent=111 // pred_check_branch
          %869 = sbr.rel (%p867) target = $region156
        $region155: #{tpu_custom_call.1} parent=111 // pred_region
          %v870 = vld [vmem:[#allocation5] sm:$0xff]
          %v871 = vld [vmem:[#allocation5 + $0x8] sm:$0xff]
          %v872 = vpack.c.bf16 %v871, %v870
          %v873 = vld [vmem:[#allocation14] sm:$0xff]
          %v874 = vld [vmem:[#allocation14 + $0x8] sm:$0xff]
          %v875 = vld [vmem:[#allocation14 + $0x10] sm:$0xff]
          %v876 = vld [vmem:[#allocation14 + $0x18] sm:$0xff]
          %v877 = vld [vmem:[#allocation14 + $0x20] sm:$0xff]
          %v878 = vld [vmem:[#allocation14 + $0x28] sm:$0xff]
          %v879 = vld [vmem:[#allocation14 + $0x30] sm:$0xff]
          %v880 = vld [vmem:[#allocation14 + $0x38] sm:$0xff]
          %v881 = vld [vmem:[#allocation14 + $0x40] sm:$0xff]
          %v882 = vld [vmem:[#allocation14 + $0x48] sm:$0xff]
          %v883 = vld [vmem:[#allocation14 + $0x50] sm:$0xff]
          %v884 = vld [vmem:[#allocation14 + $0x58] sm:$0xff]
          %v885 = vld [vmem:[#allocation14 + $0x60] sm:$0xff]
          %v886 = vld [vmem:[#allocation14 + $0x68] sm:$0xff]
          %v887 = vld [vmem:[#allocation14 + $0x70] sm:$0xff]
          %v888 = vld [vmem:[#allocation14 + $0x78] sm:$0xff]
          %v889 = vpack.c.bf16 %v874, %v873
          %v890 = vpack.c.bf16 %v876, %v875
          %v891 = vpack.c.bf16 %v878, %v877
          %v892 = vpack.c.bf16 %v880, %v879
          %v893 = vpack.c.bf16 %v882, %v881
          %v894 = vpack.c.bf16 %v884, %v883
          %v895 = vpack.c.bf16 %v886, %v885
          %v896 = vpack.c.bf16 %v888, %v887
          %897 = vmatprep.subr.bf16.mxu0 0
          %898 = vmatpush1.bf16.msra.mxu0 %v889
          %899 = vmatprep.subr.bf16.mxu0 0
          %900 = vmatpush1.bf16.msra.mxu0 %v890
          %901 = vmatprep.subr.bf16.mxu0 0
          %902 = vmatpush1.bf16.msra.mxu0 %v891
          %903 = vmatprep.subr.bf16.mxu0 0
          %904 = vmatpush1.bf16.msra.mxu0 %v892
          %905 = vmatprep.subr.bf16.mxu0 0
          %906 = vmatpush1.bf16.msra.mxu0 %v893
          %907 = vmatprep.subr.bf16.mxu0 0
          %908 = vmatpush1.bf16.msra.mxu0 %v894
          %909 = vmatprep.subr.bf16.mxu0 0
          %910 = vmatpush1.bf16.msra.mxu0 %v895
          %911 = vmatprep.subr.bf16.mxu0 0
          %912 = vmatpush1.bf16.msra.mxu0 %v896
          %913 = vmatprep.subr.bf16.mxu0 0
          %914 = vmatpush1.bf16.msra.mxu0 0
          %915 = vmatprep.subr.bf16.mxu0 0
          %916 = vmatpush1.bf16.msra.mxu0 0
          %917 = vmatprep.subr.bf16.mxu0 0
          %918 = vmatpush1.bf16.msra.mxu0 0
          %919 = vmatprep.subr.bf16.mxu0 0
          %920 = vmatpush1.bf16.msra.mxu0 0
          %921 = vmatprep.subr.bf16.mxu0 0
          %922 = vmatpush1.bf16.msra.mxu0 0
          %923 = vmatprep.subr.bf16.mxu0 0
          %924 = vmatpush1.bf16.msra.mxu0 0
          %925 = vmatprep.subr.bf16.mxu0 0
          %926 = vmatpush1.bf16.msra.mxu0 0
          %927 = vmatprep.subr.bf16.mxu0 0
          %928 = vmatpush1.bf16.msra.mxu0 0
          %929 = vmatprep.mubr.bf16.mxu0 0
          %930 = vmatmul.mubr.bf16.gmra.mrb[0].mxu0 %v872
          %v931 = vpop.f32.mrb[0].mxu0
          %v932 = vadd.f32 0.0, %v931
          %v933 = vpop.f32.mrb[0].mxu0
          %v934 = vpop.f32.mrb[0].mxu0
          %v935 = vadd.f32 0.0, %v934
          %v936 = vpop.f32.mrb[0].mxu0
          %937 = vdwg.mxu0
          %v938 = vpack.c.bf16 %v935, %v932
          %939 = vst [vmem:[#allocation2] sm:$0xff] %v938
          %940 = vst [vmem:[#allocation3] sm:$0xff] 0.0
        $region156: #{tpu_custom_call.1} parent=111 // pred_fallthru
          _
        %v941 = vld [vmem:[%s862] sm:$0xff]
        %v942 = vld [vmem:[%s862 + $0x8] sm:$0xff]
        %v943 = vcvt.f32.s32.to.zero.pseudo %v941
        %v944 = vcvt.f32.s32.to.zero.pseudo %v942
        %v945 = vmul.f32 %v941, 0.31415927
        %v946 = vmul.f32 %v942, 0.31415927
        %v947 = vand.u32 2147483647, %v945
        %vm948 = vcmp.le.f32.partialorder %v947, 0.7853982
        %vm949 = vcmp.lt.s32.totalorder %v945, 0
        %v950 = vand.u32 %v945, 2139095040
        %v951 = vshrl.u32 %v950, 23
        %v952 = vsub.s32 %v951, 127
        %v953 = vand.u32 2147483647, %v945
        %v954 = vand.u32 %v953, 8388607
        %v955 = vor.u32 %v954, 8388608
        %v956 = vsub.s32 0, %v955
        %v957 = vadd.s32 %v952, 1
        %vm958 = vcmp.gt.s32.totalorder %v957, 0
        %v959 = vsel %vm958, %v957, 0
        %v960 = vshrl.u32 %v959, 5
        %v961 = vand.u32 %v959, 31
        %v962 = vsub.s32 32, %v961
        %v963 = vshrl.u32 683565275, %v962
        %v964 = vshll.u32 683565275, %v961
        %v965 = vshrl.u32 2475754826, %v962
        %v966 = vor.u32 %v964, %v965
        %v967 = vshll.u32 2475754826, %v961
        %v968 = vshrl.u32 2131351028, %v962
        %v969 = vor.u32 %v967, %v968
        %v970 = vshll.u32 2131351028, %v961
        %v971 = vshrl.u32 2102212464, %v962
        %v972 = vor.u32 %v970, %v971
        %v973 = vshll.u32 2102212464, %v961
        %v974 = vshrl.u32 920167782, %v962
        %v975 = vor.u32 %v973, %v974
        %v976 = vshll.u32 920167782, %v961
        %v977 = vshrl.u32 1326507024, %v962
        %v978 = vor.u32 %v976, %v977
        %vm979 = vcmp.lt.s32.totalorder %v960, 1
        %vm980 = vcmp.lt.s32.totalorder %v960, 2
        %vm981 = vcmp.lt.s32.totalorder %v960, 3
        %vm982 = vcmp.lt.s32.totalorder %v960, 4
        %v983 = vsel %vm979, %v963, %v966
        %v984 = vsel %vm982, %v972, 2102212464
        %v985 = vsel %vm981, %v969, %v984
        %v986 = vsel %vm980, %v983, %v985
        %v987 = vsel %vm979, %v966, %v969
        %v988 = vsel %vm982, %v975, 920167782
        %v989 = vsel %vm981, %v972, %v988
        %v990 = vsel %vm980, %v987, %v989
        %v991 = vsel %vm979, %v969, %v972
        %v992 = vsel %vm982, %v978, 1326507024
        %v993 = vsel %vm981, %v975, %v992
        %v994 = vsel %vm980, %v991, %v993
        %v995 = vshll.u32 %v955, 8
        %v996 = vmul.u32.u64.compose %v995, %v994
        %v997 = vextract.low.u32 %v996
        %v998 = vextract.high.u32 %v996
        %v999 = vmul.u32.u64.compose %v995, %v990
        %v1000 = vextract.low.u32 %v999
        %v1001 = vextract.high.u32 %v999
        %v1002 = vmul.u32 %v995, %v986
        %v1003 = vadd.s32 %v998, %v1000
        %vm1004 = vc.u32 %v998, %v1000
        %v1005 = vadd.s32 %v1001, 1
        %v1006 = vsel %vm1004, %v1005, %v1001
        %v1007 = vadd.s32 %v1002, %v1006
        %v1008 = vadd.s32 %v1007, 536870912
        %v1009 = vshrl.u32 %v1008, 30
        %v1010 = vshll.u32 %v1009, 30
        %v1011 = vsub.s32 %v1007, %v1010
        %vm1012 = vcmp.lt.s32.totalorder %v1011, 0
        %v1013 = vsub.s32 0, %v1011
        %v1014 = vsel %vm1012, %v1013, %v1011
        %v1015 = vclz %v1014
        %v1016 = vsub.s32 %v1015, 2
        %vm1017 = vcmp.gt.s32.totalorder 0, %v1016
        %v1018 = vsel %vm1017, 0, %v1016
        %v1019 = vsub.s32 32, %v1018
        %v1020 = vshll.u32 %v1011, %v1018
        %v1021 = vshrl.u32 %v1003, %v1019
        %v1022 = vor.u32 %v1020, %v1021
        %v1023 = vsub.s32 4294967266, %v1018
        %v1024 = vadd.s32 %v1023, 127
        %v1025 = vshll.u32 %v1024, 23
        %v1026 = vor.u32 4788187, %v1025
        %v1027 = vand.u32 2147483647, %v1026
        %v1029 = vcvt.s32.f32 %v1022
        %v1030 = vmul.f32 %v1029, %v1027
        %v1031 = vxor.u32 %v1030, 2147483648
        %v1032 = vsel %vm949, %v1031, %v1030
        %v1033 = vsub.s32 4, %v1009
        %v1034 = vsel %vm949, %v1033, %v1009
        %v1035 = vsel %vm948, %v945, %v1032
        %v1036 = vsel %vm948, 0, %v1034
        %v1037 = vcosq.f32.pop %v1035
        %v1038 = vsinq.f32.pop %v1035
        %vm1039 = vweird.f32 %v945
        %v1040 = vand.u32 %v1036, 3
        %vm1041 = vcmp.lt.s32.totalorder %v1040, 2
        %vm1042 = vcmp.eq.s32.totalorder %v1040, 0
        %v1043 = vxor.u32 %v1038, 2147483648
        %v1044 = vsel %vm1042, %v1037, %v1043
        %vm1045 = vcmp.eq.s32.totalorder %v1040, 2
        %v1046 = vxor.u32 %v1037, 2147483648
        %v1047 = vsel %vm1045, %v1046, %v1038
        %v1048 = vsel %vm1041, %v1044, %v1047
        %v1049 = vsel %vm1039, nan, %v1048
        %v1050 = vand.u32 2147483647, %v946
        %vm1051 = vcmp.le.f32.partialorder %v1050, 0.7853982
        %vm1052 = vcmp.lt.s32.totalorder %v946, 0
        %v1053 = vand.u32 %v946, 2139095040
        %v1054 = vshrl.u32 %v1053, 23
        %v1055 = vsub.s32 %v1054, 127
        %v1056 = vand.u32 2147483647, %v946
        %v1057 = vand.u32 %v1056, 8388607
        %v1058 = vor.u32 %v1057, 8388608
        %v1059 = vsub.s32 0, %v1058
        %v1060 = vadd.s32 %v1055, 1
        %vm1061 = vcmp.gt.s32.totalorder %v1060, 0
        %v1062 = vsel %vm1061, %v1060, 0
        %v1063 = vshrl.u32 %v1062, 5
        %v1064 = vand.u32 %v1062, 31
        %v1065 = vsub.s32 32, %v1064
        %v1066 = vshrl.u32 683565275, %v1065
        %v1067 = vshll.u32 683565275, %v1064
        %v1068 = vshrl.u32 2475754826, %v1065
        %v1069 = vor.u32 %v1067, %v1068
        %v1070 = vshll.u32 2475754826, %v1064
        %v1071 = vshrl.u32 2131351028, %v1065
        %v1072 = vor.u32 %v1070, %v1071
        %v1073 = vshll.u32 2131351028, %v1064
        %v1074 = vshrl.u32 2102212464, %v1065
        %v1075 = vor.u32 %v1073, %v1074
        %v1076 = vshll.u32 2102212464, %v1064
        %v1077 = vshrl.u32 920167782, %v1065
        %v1078 = vor.u32 %v1076, %v1077
        %v1079 = vshll.u32 920167782, %v1064
        %v1080 = vshrl.u32 1326507024, %v1065
        %v1081 = vor.u32 %v1079, %v1080
        %vm1082 = vcmp.lt.s32.totalorder %v1063, 1
        %vm1083 = vcmp.lt.s32.totalorder %v1063, 2
        %vm1084 = vcmp.lt.s32.totalorder %v1063, 3
        %vm1085 = vcmp.lt.s32.totalorder %v1063, 4
        %v1086 = vsel %vm1082, %v1066, %v1069
        %v1087 = vsel %vm1085, %v1075, 2102212464
        %v1088 = vsel %vm1084, %v1072, %v1087
        %v1089 = vsel %vm1083, %v1086, %v1088
        %v1090 = vsel %vm1082, %v1069, %v1072
        %v1091 = vsel %vm1085, %v1078, 920167782
        %v1092 = vsel %vm1084, %v1075, %v1091
        %v1093 = vsel %vm1083, %v1090, %v1092
        %v1094 = vsel %vm1082, %v1072, %v1075
        %v1095 = vsel %vm1085, %v1081, 1326507024
        %v1096 = vsel %vm1084, %v1078, %v1095
        %v1097 = vsel %vm1083, %v1094, %v1096
        %v1098 = vshll.u32 %v1058, 8
        %v1099 = vmul.u32.u64.compose %v1098, %v1097
        %v1100 = vextract.low.u32 %v1099
        %v1101 = vextract.high.u32 %v1099
        %v1102 = vmul.u32.u64.compose %v1098, %v1093
        %v1103 = vextract.low.u32 %v1102
        %v1104 = vextract.high.u32 %v1102
        %v1105 = vmul.u32 %v1098, %v1089
        %v1106 = vadd.s32 %v1101, %v1103
        %vm1107 = vc.u32 %v1101, %v1103
        %v1108 = vadd.s32 %v1104, 1
        %v1109 = vsel %vm1107, %v1108, %v1104
        %v1110 = vadd.s32 %v1105, %v1109
        %v1111 = vadd.s32 %v1110, 536870912
        %v1112 = vshrl.u32 %v1111, 30
        %v1113 = vshll.u32 %v1112, 30
        %v1114 = vsub.s32 %v1110, %v1113
        %vm1115 = vcmp.lt.s32.totalorder %v1114, 0
        %v1116 = vsub.s32 0, %v1114
        %v1117 = vsel %vm1115, %v1116, %v1114
        %v1118 = vclz %v1117
        %v1119 = vsub.s32 %v1118, 2
        %vm1120 = vcmp.gt.s32.totalorder 0, %v1119
        %v1121 = vsel %vm1120, 0, %v1119
        %v1122 = vsub.s32 32, %v1121
        %v1123 = vshll.u32 %v1114, %v1121
        %v1124 = vshrl.u32 %v1106, %v1122
        %v1125 = vor.u32 %v1123, %v1124
        %v1126 = vsub.s32 4294967266, %v1121
        %v1127 = vadd.s32 %v1126, 127
        %v1128 = vshll.u32 %v1127, 23
        %v1129 = vor.u32 4788187, %v1128
        %v1130 = vand.u32 2147483647, %v1129
        %v1132 = vcvt.s32.f32 %v1125
        %v1133 = vmul.f32 %v1132, %v1130
        %v1134 = vxor.u32 %v1133, 2147483648
        %v1135 = vsel %vm1052, %v1134, %v1133
        %v1136 = vsub.s32 4, %v1112
        %v1137 = vsel %vm1052, %v1136, %v1112
        %v1138 = vsel %vm1051, %v946, %v1135
        %v1139 = vsel %vm1051, 0, %v1137
        %v1140 = vcosq.f32.pop %v1138
        %v1141 = vsinq.f32.pop %v1138
        %vm1142 = vweird.f32 %v946
        %v1143 = vand.u32 %v1139, 3
        %vm1144 = vcmp.lt.s32.totalorder %v1143, 2
        %vm1145 = vcmp.eq.s32.totalorder %v1143, 0
        %v1146 = vxor.u32 %v1141, 2147483648
        %v1147 = vsel %vm1145, %v1140, %v1146
        %vm1148 = vcmp.eq.s32.totalorder %v1143, 2
        %v1149 = vxor.u32 %v1140, 2147483648
        %v1150 = vsel %vm1148, %v1149, %v1141
        %v1151 = vsel %vm1144, %v1147, %v1150
        %v1152 = vsel %vm1142, nan, %v1151
        %v1153 = vadd.f32 %v1049, 1.0
        %v1154 = vadd.f32 %v1152, 1.0
        %v1155 = vmul.f32 %v1153, 0.5
        %v1156 = vmul.f32 %v1154, 0.5
        %v1157 = vld [vmem:[#allocation8] sm:$0xff]
        %v1158 = vld [vmem:[#allocation8 + $0x8] sm:$0xff]
        %v1159 = vld [vmem:[#allocation8 + $0x10] sm:$0xff]
        %v1160 = vld [vmem:[#allocation10] sm:$0x1]
        %v1162 = vlaneseq
        %v1163 = vshrl.u32 %v1162, 7
        %v1164 = vsub.s32 0, %v1163
        %v1165 = vrot.slane %v1160, %v1164
        %vm1167 = vcmask 195584
        %v1169 = vsel %vm1167, %v941, 0
        %v1172 = vsel %vm1167, %v942, 0
        %1174 = vmatprep.subr.mxu0 0.0
        %1175 = vmatpush1.msra.mxu0 %v1157
        %1176 = vmatprep.subr.mxu0 0.0
        %1177 = vmatpush1.msra.mxu0 %v1158
        %1178 = vmatprep.subr.mxu0 0.0
        %1179 = vmatpush1.msra.mxu0 %v1159
        %1180 = vmatprep.subr.mxu0 0.0
        %1181 = vmatpush1.msra.mxu0 0.0
        %1182 = vmatprep.subr.mxu0 0.0
        %1183 = vmatpush1.msra.mxu0 0.0
        %1184 = vmatprep.subr.mxu0 0.0
        %1185 = vmatpush1.msra.mxu0 0.0
        %1186 = vmatprep.subr.mxu0 0.0
        %1187 = vmatpush1.msra.mxu0 0.0
        %1188 = vmatprep.subr.mxu0 0.0
        %1189 = vmatpush1.msra.mxu0 0.0
        %1190 = vmatprep.subr.mxu0 0.0
        %1191 = vmatpush1.msra.mxu0 0.0
        %1192 = vmatprep.subr.mxu0 0.0
        %1193 = vmatpush1.msra.mxu0 0.0
        %1194 = vmatprep.subr.mxu0 0.0
        %1195 = vmatpush1.msra.mxu0 0.0
        %1196 = vmatprep.subr.mxu0 0.0
        %1197 = vmatpush1.msra.mxu0 0.0
        %1198 = vmatprep.subr.mxu0 0.0
        %1199 = vmatpush1.msra.mxu0 0.0
        %1200 = vmatprep.subr.mxu0 0.0
        %1201 = vmatpush1.msra.mxu0 0.0
        %1202 = vmatprep.subr.mxu0 0.0
        %1203 = vmatpush1.msra.mxu0 0.0
        %1204 = vmatprep.subr.mxu0 0.0
        %1205 = vmatpush1.msra.mxu0 0.0
        %1206 = vmatprep.subr.mxu0 0.0
        %1207 = vmatpush1.msra.mxu0 0.0
        %1208 = vmatprep.subr.mxu0 0.0
        %1209 = vmatpush1.msra.mxu0 0.0
        %1210 = vmatprep.subr.mxu0 0.0
        %1211 = vmatpush1.msra.mxu0 0.0
        %1212 = vmatprep.subr.mxu0 0.0
        %1213 = vmatpush1.msra.mxu0 0.0
        %1214 = vmatprep.subr.mxu0 0.0
        %1215 = vmatpush1.msra.mxu0 0.0
        %1216 = vmatprep.subr.mxu0 0.0
        %1217 = vmatpush1.msra.mxu0 0.0
        %1218 = vmatprep.subr.mxu0 0.0
        %1219 = vmatpush1.msra.mxu0 0.0
        %1220 = vmatprep.subr.mxu0 0.0
        %1221 = vmatpush1.msra.mxu0 0.0
        %1222 = vmatprep.subr.mxu0 0.0
        %1223 = vmatpush1.msra.mxu0 0.0
        %1224 = vmatprep.subr.mxu0 0.0
        %1225 = vmatpush1.msra.mxu0 0.0
        %1226 = vmatprep.subr.mxu0 0.0
        %1227 = vmatpush1.msra.mxu0 0.0
        %1228 = vmatprep.subr.mxu0 0.0
        %1229 = vmatpush1.msra.mxu0 0.0
        %1230 = vmatprep.subr.mxu0 0.0
        %1231 = vmatpush1.msra.mxu0 0.0
        %1232 = vmatprep.subr.mxu0 0.0
        %1233 = vmatpush1.msra.mxu0 0.0
        %1234 = vmatprep.subr.mxu0 0.0
        %1235 = vmatpush1.msra.mxu0 0.0
        %1236 = vmatprep.subr.mxu0 0.0
        %1237 = vmatpush1.msra.mxu0 0.0
        %1238 = vmatprep.mubr.f32.mxu0 0.0
        %1239 = vmatmul.mubr.f32.gmra.mrb[0].mxu0 %v1169
        %v1240 = vpop.f32.mrb[0].mxu0
        %v1241 = vadd.f32 %v1165, %v1240
        %v1242 = vpop.f32.mrb[0].mxu0
        %1243 = vmatprep.mubr.f32.mxu0 0.0
        %1244 = vmatmul.mubr.f32.gmra.mrb[0].mxu0 %v1172
        %v1245 = vpop.f32.mrb[0].mxu0
        %v1246 = vadd.f32 %v1165, %v1245
        %v1247 = vpop.f32.mrb[0].mxu0
        %1248 = vdwg.mxu0
        %v1249 = vmax.f32 %v1241, 0.0
        %v1250 = vmax.f32 %v1246, 0.0
        %v1251 = vld [vmem:[#allocation11] sm:$0xff]
        %v1252 = vld [vmem:[#allocation11 + $0x8] sm:$0xff]
        %v1253 = vld [vmem:[#allocation11 + $0x10] sm:$0xff]
        %v1254 = vld [vmem:[#allocation11 + $0x18] sm:$0xff]
        %v1255 = vld [vmem:[#allocation11 + $0x20] sm:$0xff]
        %v1256 = vld [vmem:[#allocation11 + $0x28] sm:$0xff]
        %v1257 = vld [vmem:[#allocation11 + $0x30] sm:$0xff]
        %v1258 = vld [vmem:[#allocation11 + $0x38] sm:$0xff]
        %v1259 = vld [vmem:[#allocation11 + $0x40] sm:$0xff]
        %v1260 = vld [vmem:[#allocation11 + $0x48] sm:$0xff]
        %v1261 = vld [vmem:[#allocation11 + $0x50] sm:$0xff]
        %v1262 = vld [vmem:[#allocation11 + $0x58] sm:$0xff]
        %v1263 = vld [vmem:[#allocation11 + $0x60] sm:$0xff]
        %v1264 = vld [vmem:[#allocation11 + $0x68] sm:$0xff]
        %v1265 = vld [vmem:[#allocation11 + $0x70] sm:$0xff]
        %v1266 = vld [vmem:[#allocation11 + $0x78] sm:$0xff]
        %v1267 = vld [vmem:[#allocation13] sm:$0x1]
        %v1269 = vlaneseq
        %v1270 = vshrl.u32 %v1269, 7
        %v1271 = vsub.s32 0, %v1270
        %v1272 = vrot.slane %v1267, %v1271
        %1274 = vmatprep.subr.mxu0 0.0
        %1275 = vmatpush1.msra.mxu0 %v1251
        %1276 = vmatprep.subr.mxu0 0.0
        %1277 = vmatpush1.msra.mxu0 %v1252
        %1278 = vmatprep.subr.mxu0 0.0
        %1279 = vmatpush1.msra.mxu0 %v1253
        %1280 = vmatprep.subr.mxu0 0.0
        %1281 = vmatpush1.msra.mxu0 %v1254
        %1282 = vmatprep.subr.mxu0 0.0
        %1283 = vmatpush1.msra.mxu0 %v1255
        %1284 = vmatprep.subr.mxu0 0.0
        %1285 = vmatpush1.msra.mxu0 %v1256
        %1286 = vmatprep.subr.mxu0 0.0
        %1287 = vmatpush1.msra.mxu0 %v1257
        %1288 = vmatprep.subr.mxu0 0.0
        %1289 = vmatpush1.msra.mxu0 %v1258
        %1290 = vmatprep.subr.mxu0 0.0
        %1291 = vmatpush1.msra.mxu0 %v1259
        %1292 = vmatprep.subr.mxu0 0.0
        %1293 = vmatpush1.msra.mxu0 %v1260
        %1294 = vmatprep.subr.mxu0 0.0
        %1295 = vmatpush1.msra.mxu0 %v1261
        %1296 = vmatprep.subr.mxu0 0.0
        %1297 = vmatpush1.msra.mxu0 %v1262
        %1298 = vmatprep.subr.mxu0 0.0
        %1299 = vmatpush1.msra.mxu0 %v1263
        %1300 = vmatprep.subr.mxu0 0.0
        %1301 = vmatpush1.msra.mxu0 %v1264
        %1302 = vmatprep.subr.mxu0 0.0
        %1303 = vmatpush1.msra.mxu0 %v1265
        %1304 = vmatprep.subr.mxu0 0.0
        %1305 = vmatpush1.msra.mxu0 %v1266
        %1306 = vmatprep.subr.mxu0 0.0
        %1307 = vmatpush1.msra.mxu0 0.0
        %1308 = vmatprep.subr.mxu0 0.0
        %1309 = vmatpush1.msra.mxu0 0.0
        %1310 = vmatprep.subr.mxu0 0.0
        %1311 = vmatpush1.msra.mxu0 0.0
        %1312 = vmatprep.subr.mxu0 0.0
        %1313 = vmatpush1.msra.mxu0 0.0
        %1314 = vmatprep.subr.mxu0 0.0
        %1315 = vmatpush1.msra.mxu0 0.0
        %1316 = vmatprep.subr.mxu0 0.0
        %1317 = vmatpush1.msra.mxu0 0.0
        %1318 = vmatprep.subr.mxu0 0.0
        %1319 = vmatpush1.msra.mxu0 0.0
        %1320 = vmatprep.subr.mxu0 0.0
        %1321 = vmatpush1.msra.mxu0 0.0
        %1322 = vmatprep.subr.mxu0 0.0
        %1323 = vmatpush1.msra.mxu0 0.0
        %1324 = vmatprep.subr.mxu0 0.0
        %1325 = vmatpush1.msra.mxu0 0.0
        %1326 = vmatprep.subr.mxu0 0.0
        %1327 = vmatpush1.msra.mxu0 0.0
        %1328 = vmatprep.subr.mxu0 0.0
        %1329 = vmatpush1.msra.mxu0 0.0
        %1330 = vmatprep.subr.mxu0 0.0
        %1331 = vmatpush1.msra.mxu0 0.0
        %1332 = vmatprep.subr.mxu0 0.0
        %1333 = vmatpush1.msra.mxu0 0.0
        %1334 = vmatprep.subr.mxu0 0.0
        %1335 = vmatpush1.msra.mxu0 0.0
        %1336 = vmatprep.subr.mxu0 0.0
        %1337 = vmatpush1.msra.mxu0 0.0
        %1338 = vmatprep.mubr.f32.mxu0 0.0
        %1339 = vmatmul.mubr.f32.gmra.mrb[0].mxu0 %v1249
        %v1340 = vpop.f32.mrb[0].mxu0
        %v1341 = vadd.f32 %v1272, %v1340
        %v1342 = vpop.f32.mrb[0].mxu0
        %1343 = vmatprep.mubr.f32.mxu0 0.0
        %1344 = vmatmul.mubr.f32.gmra.mrb[0].mxu0 %v1250
        %v1345 = vpop.f32.mrb[0].mxu0
        %v1346 = vadd.f32 %v1272, %v1345
        %v1347 = vpop.f32.mrb[0].mxu0
        %1348 = vdwg.mxu0
        %1350 = vset.pattern.permute.xlu0 21
        %1351 = vperm.xlu0 %1350, %v1155
        %v1352 = vpop.permute.xlu0 %1351
        %1355 = vset.pattern.permute.xlu0 21
        %1356 = vperm.xlu0 %1355, %v1156
        %v1357 = vpop.permute.xlu0 %1356
        %v1359 = vmul.f32 %v1341, %v1352
        %v1360 = vmul.f32 %v1346, %v1357
        %v1361 = vlaneseq
        %v1362 = vand.u32 %v1361, 127
        %1363 = vset.pattern.permute.xlu0 22
        %1364 = vperm.xlu0 %1363, %v943
        %v1365 = vpop.permute.xlu0 %1364
        %1366 = vset.pattern.permute.xlu0 22
        %1367 = vperm.xlu0 %1366, %v944
        %v1368 = vpop.permute.xlu0 %1367
        %vm1369 = vcmp.eq.s32.totalorder %v1362, %v1365
        %vm1370 = vcmp.eq.s32.totalorder %v1362, %v1368
        %v1371 = vsel %vm1369, 1, 0
        %v1372 = vsel %vm1370, 1, 0
        %v1373 = vcvt.s32.f32 %v1371
        %v1374 = vcvt.s32.f32 %v1372
        %v1375 = vpack.c.bf16 %v1374, %v1373
        %v1376 = vld [vmem:[#allocation2] sm:$0xff]
        %vm1377 = vcmask 130048
        %v1379 = vsel %vm1377, %v1375, 0
        %1381 = vmatprep.subr.bf16.mxu0 0
        %1382 = vmatpush1.bf16.msra.mxu0 %v1376
        %1383 = vmatprep.subr.bf16.mxu0 0
        %1384 = vmatpush1.bf16.msra.mxu0 0
        %1385 = vmatprep.subr.bf16.mxu0 0
        %1386 = vmatpush1.bf16.msra.mxu0 0
        %1387 = vmatprep.subr.bf16.mxu0 0
        %1388 = vmatpush1.bf16.msra.mxu0 0
        %1389 = vmatprep.subr.bf16.mxu0 0
        %1390 = vmatpush1.bf16.msra.mxu0 0
        %1391 = vmatprep.subr.bf16.mxu0 0
        %1392 = vmatpush1.bf16.msra.mxu0 0
        %1393 = vmatprep.subr.bf16.mxu0 0
        %1394 = vmatpush1.bf16.msra.mxu0 0
        %1395 = vmatprep.subr.bf16.mxu0 0
        %1396 = vmatpush1.bf16.msra.mxu0 0
        %1397 = vmatprep.subr.bf16.mxu0 0
        %1398 = vmatpush1.bf16.msra.mxu0 0
        %1399 = vmatprep.subr.bf16.mxu0 0
        %1400 = vmatpush1.bf16.msra.mxu0 0
        %1401 = vmatprep.subr.bf16.mxu0 0
        %1402 = vmatpush1.bf16.msra.mxu0 0
        %1403 = vmatprep.subr.bf16.mxu0 0
        %1404 = vmatpush1.bf16.msra.mxu0 0
        %1405 = vmatprep.subr.bf16.mxu0 0
        %1406 = vmatpush1.bf16.msra.mxu0 0
        %1407 = vmatprep.subr.bf16.mxu0 0
        %1408 = vmatpush1.bf16.msra.mxu0 0
        %1409 = vmatprep.subr.bf16.mxu0 0
        %1410 = vmatpush1.bf16.msra.mxu0 0
        %1411 = vmatprep.subr.bf16.mxu0 0
        %1412 = vmatpush1.bf16.msra.mxu0 0
        %1413 = vmatprep.mubr.bf16.mxu0 0
        %1414 = vmatmul.mubr.bf16.gmra.mrb[0].mxu0 %v1379
        %v1415 = vpop.f32.mrb[0].mxu0
        %v1416 = vadd.f32 0.0, %v1415
        %v1417 = vpop.f32.mrb[0].mxu0
        %v1418 = vpop.f32.mrb[0].mxu0
        %v1419 = vadd.f32 0.0, %v1418
        %v1420 = vpop.f32.mrb[0].mxu0
        %1421 = vdwg.mxu0
        %v1422 = vmul.f32 %v1416, %v1359
        %v1423 = vmul.f32 %v1419, %v1360
        %v1424 = vpack.c.bf16 %v1423, %v1422
        %v1425 = vstv %s865
        %v1426 = vadd.s32 %v1362, %v1425
        %1427 = vset.pattern.permute.xlu0 23
        %1428 = vperm.xlu0 %1427, %v943
        %v1429 = vpop.permute.xlu0 %1428
        %1430 = vset.pattern.permute.xlu0 23
        %1431 = vperm.xlu0 %1430, %v944
        %v1432 = vpop.permute.xlu0 %1431
        %vm1433 = vcmp.eq.s32.totalorder %v1426, %v1429
        %vm1434 = vcmp.eq.s32.totalorder %v1426, %v1432
        %v1435 = vsel %vm1433, 1, 0
        %v1436 = vsel %vm1434, 1, 0
        %v1437 = vcvt.s32.f32 %v1435
        %v1438 = vcvt.s32.f32 %v1436
        %v1439 = vpack.c.bf16 %v1438, %v1437
        %v1440 = vld [vmem:[#allocation3] sm:$0xff]
        %1441 = vxpose.xlu0.c.b16.start [1/8] %v1439, 128
        %1442 = vxpose.xlu0.c.b16.cont [2/8] 0, 128
        %1443 = vxpose.xlu0.c.b16.cont [3/8] 0, 128
        %1444 = vxpose.xlu0.c.b16.cont [4/8] 0, 128
        %1445 = vxpose.xlu0.c.b16.cont [5/8] 0, 128
        %1446 = vxpose.xlu0.c.b16.cont [6/8] 0, 128
        %1447 = vxpose.xlu0.c.b16.cont [7/8] 0, 128
        %1448 = vxpose.xlu0.c.b16.end [8/8] 0, 128
        %v1449 = vpop.trf.xlu0
        %v1450 = vpop.trf.xlu0
        %v1451 = vpop.trf.xlu0
        %v1452 = vpop.trf.xlu0
        %v1453 = vpop.trf.xlu0
        %v1454 = vpop.trf.xlu0
        %v1455 = vpop.trf.xlu0
        %v1456 = vpop.trf.xlu0
        %v1458 = vsel %vm1377, %v1449, 0
        %1460 = vmatprep.subr.bf16.mxu0 0
        %1461 = vmatpush1.bf16.msra.mxu0 %v1424
        %1462 = vmatprep.subr.bf16.mxu0 0
        %1463 = vmatpush1.bf16.msra.mxu0 0
        %1464 = vmatprep.subr.bf16.mxu0 0
        %1465 = vmatpush1.bf16.msra.mxu0 0
        %1466 = vmatprep.subr.bf16.mxu0 0
        %1467 = vmatpush1.bf16.msra.mxu0 0
        %1468 = vmatprep.subr.bf16.mxu0 0
        %1469 = vmatpush1.bf16.msra.mxu0 0
        %1470 = vmatprep.subr.bf16.mxu0 0
        %1471 = vmatpush1.bf16.msra.mxu0 0
        %1472 = vmatprep.subr.bf16.mxu0 0
        %1473 = vmatpush1.bf16.msra.mxu0 0
        %1474 = vmatprep.subr.bf16.mxu0 0
        %1475 = vmatpush1.bf16.msra.mxu0 0
        %1476 = vmatprep.subr.bf16.mxu0 0
        %1477 = vmatpush1.bf16.msra.mxu0 0
        %1478 = vmatprep.subr.bf16.mxu0 0
        %1479 = vmatpush1.bf16.msra.mxu0 0
        %1480 = vmatprep.subr.bf16.mxu0 0
        %1481 = vmatpush1.bf16.msra.mxu0 0
        %1482 = vmatprep.subr.bf16.mxu0 0
        %1483 = vmatpush1.bf16.msra.mxu0 0
        %1484 = vmatprep.subr.bf16.mxu0 0
        %1485 = vmatpush1.bf16.msra.mxu0 0
        %1486 = vmatprep.subr.bf16.mxu0 0
        %1487 = vmatpush1.bf16.msra.mxu0 0
        %1488 = vmatprep.subr.bf16.mxu0 0
        %1489 = vmatpush1.bf16.msra.mxu0 0
        %1490 = vmatprep.subr.bf16.mxu0 0
        %1491 = vmatpush1.bf16.msra.mxu0 0
        %1492 = vmatprep.mubr.bf16.mxu0 0
        %1493 = vmatmul.mubr.bf16.gmra.mrb[0].mxu0 %v1458
        %v1494 = vpop.f32.mrb[0].mxu0
        %v1495 = vadd.f32 0.0, %v1494
        %v1496 = vpop.f32.mrb[0].mxu0
        %v1497 = vpop.f32.mrb[0].mxu0
        %v1498 = vpop.f32.mrb[0].mxu0
        %1499 = vdwg.mxu0
        %v1500 = vadd.f32 %v1440, %v1495
        %1501 = vst [vmem:[#allocation3] sm:$0xff] %v1500
        %p1502 = scmp.eq.s32.totalorder %s49, 2
        // Predicated region
        $region157: #{tpu_custom_call.1} parent=111 // pred_check
          %p1503 = pneg %p1502
        $region158: #{tpu_custom_call.1} parent=111 // pred_check_branch
          %1505 = sbr.rel (%p1503) target = $region160
        $region159: #{tpu_custom_call.1} parent=111 // pred_region
          %s1506 = scalar_lea.vmem [#allocation5], %s865
          %v1507 = vld [vmem:[%s1506] sm:$0xff]
          %v1508 = vld [vmem:[#allocation3] sm:$0xff]
          %v1509 = vld [vmem:[%s8] sm:$0xff]
          %v1510 = vld [vmem:[%s8 + $0x8] sm:$0xff]
          %v1511 = vld [vmem:[%s8 + $0x10] sm:$0xff]
          %v1512 = vld [vmem:[%s8 + $0x18] sm:$0xff]
          %v1513 = vld [vmem:[%s8 + $0x20] sm:$0xff]
          %v1514 = vld [vmem:[%s8 + $0x28] sm:$0xff]
          %v1515 = vld [vmem:[%s8 + $0x30] sm:$0xff]
          %v1516 = vld [vmem:[%s8 + $0x38] sm:$0xff]
          %v1517 = vld [vmem:[%s8 + $0x40] sm:$0xff]
          %v1518 = vld [vmem:[%s8 + $0x48] sm:$0xff]
          %v1519 = vld [vmem:[%s8 + $0x50] sm:$0xff]
          %v1520 = vld [vmem:[%s8 + $0x58] sm:$0xff]
          %v1521 = vld [vmem:[%s8 + $0x60] sm:$0xff]
          %v1522 = vld [vmem:[%s8 + $0x68] sm:$0xff]
          %v1523 = vld [vmem:[%s8 + $0x70] sm:$0xff]
          %v1524 = vld [vmem:[%s8 + $0x78] sm:$0xff]
          %v1525 = vld [vmem:[#allocation16] sm:$0x1]
          %v1527 = vlaneseq
          %v1528 = vshrl.u32 %v1527, 7
          %v1529 = vsub.s32 0, %v1528
          %v1530 = vrot.slane %v1525, %v1529
          %1532 = vmatprep.subr.mxu0 0.0
          %1533 = vmatpush1.msra.mxu0 %v1509
          %1534 = vmatprep.subr.mxu0 0.0
          %1535 = vmatpush1.msra.mxu0 %v1510
          %1536 = vmatprep.subr.mxu0 0.0
          %1537 = vmatpush1.msra.mxu0 %v1511
          %1538 = vmatprep.subr.mxu0 0.0
          %1539 = vmatpush1.msra.mxu0 %v1512
          %1540 = vmatprep.subr.mxu0 0.0
          %1541 = vmatpush1.msra.mxu0 %v1513
          %1542 = vmatprep.subr.mxu0 0.0
          %1543 = vmatpush1.msra.mxu0 %v1514
          %1544 = vmatprep.subr.mxu0 0.0
          %1545 = vmatpush1.msra.mxu0 %v1515
          %1546 = vmatprep.subr.mxu0 0.0
          %1547 = vmatpush1.msra.mxu0 %v1516
          %1548 = vmatprep.subr.mxu0 0.0
          %1549 = vmatpush1.msra.mxu0 %v1517
          %1550 = vmatprep.subr.mxu0 0.0
          %1551 = vmatpush1.msra.mxu0 %v1518
          %1552 = vmatprep.subr.mxu0 0.0
          %1553 = vmatpush1.msra.mxu0 %v1519
          %1554 = vmatprep.subr.mxu0 0.0
          %1555 = vmatpush1.msra.mxu0 %v1520
          %1556 = vmatprep.subr.mxu0 0.0
          %1557 = vmatpush1.msra.mxu0 %v1521
          %1558 = vmatprep.subr.mxu0 0.0
          %1559 = vmatpush1.msra.mxu0 %v1522
          %1560 = vmatprep.subr.mxu0 0.0
          %1561 = vmatpush1.msra.mxu0 %v1523
          %1562 = vmatprep.subr.mxu0 0.0
          %1563 = vmatpush1.msra.mxu0 %v1524
          %1564 = vmatprep.subr.mxu0 0.0
          %1565 = vmatpush1.msra.mxu0 0.0
          %1566 = vmatprep.subr.mxu0 0.0
          %1567 = vmatpush1.msra.mxu0 0.0
          %1568 = vmatprep.subr.mxu0 0.0
          %1569 = vmatpush1.msra.mxu0 0.0
          %1570 = vmatprep.subr.mxu0 0.0
          %1571 = vmatpush1.msra.mxu0 0.0
          %1572 = vmatprep.subr.mxu0 0.0
          %1573 = vmatpush1.msra.mxu0 0.0
          %1574 = vmatprep.subr.mxu0 0.0
          %1575 = vmatpush1.msra.mxu0 0.0
          %1576 = vmatprep.subr.mxu0 0.0
          %1577 = vmatpush1.msra.mxu0 0.0
          %1578 = vmatprep.subr.mxu0 0.0
          %1579 = vmatpush1.msra.mxu0 0.0
          %1580 = vmatprep.subr.mxu0 0.0
          %1581 = vmatpush1.msra.mxu0 0.0
          %1582 = vmatprep.subr.mxu0 0.0
          %1583 = vmatpush1.msra.mxu0 0.0
          %1584 = vmatprep.subr.mxu0 0.0
          %1585 = vmatpush1.msra.mxu0 0.0
          %1586 = vmatprep.subr.mxu0 0.0
          %1587 = vmatpush1.msra.mxu0 0.0
          %1588 = vmatprep.subr.mxu0 0.0
          %1589 = vmatpush1.msra.mxu0 0.0
          %1590 = vmatprep.subr.mxu0 0.0
          %1591 = vmatpush1.msra.mxu0 0.0
          %1592 = vmatprep.subr.mxu0 0.0
          %1593 = vmatpush1.msra.mxu0 0.0
          %1594 = vmatprep.subr.mxu0 0.0
          %1595 = vmatpush1.msra.mxu0 0.0
          %1596 = vmatprep.mubr.f32.mxu0 0.0
          %1597 = vmatmul.mubr.f32.gmra.mrb[0].mxu0 %v1508
          %v1598 = vpop.f32.mrb[0].mxu0
          %v1599 = vadd.f32 %v1530, %v1598
          %v1600 = vpop.f32.mrb[0].mxu0
          %1601 = vdwg.mxu0
          %v1602 = vmax.f32 %v1599, 0.0
          %v1603 = vld [vmem:[#allocation17] sm:$0xff]
          %v1604 = vld [vmem:[#allocation17 + $0x8] sm:$0xff]
          %v1605 = vld [vmem:[#allocation17 + $0x10] sm:$0xff]
          %v1606 = vld [vmem:[#allocation17 + $0x18] sm:$0xff]
          %v1607 = vld [vmem:[#allocation17 + $0x20] sm:$0xff]
          %v1608 = vld [vmem:[#allocation17 + $0x28] sm:$0xff]
          %v1609 = vld [vmem:[#allocation17 + $0x30] sm:$0xff]
          %v1610 = vld [vmem:[#allocation17 + $0x38] sm:$0xff]
          %v1611 = vld [vmem:[#allocation17 + $0x40] sm:$0xff]
          %v1612 = vld [vmem:[#allocation17 + $0x48] sm:$0xff]
          %v1613 = vld [vmem:[#allocation17 + $0x50] sm:$0xff]
          %v1614 = vld [vmem:[#allocation17 + $0x58] sm:$0xff]
          %v1615 = vld [vmem:[#allocation17 + $0x60] sm:$0xff]
          %v1616 = vld [vmem:[#allocation17 + $0x68] sm:$0xff]
          %v1617 = vld [vmem:[#allocation17 + $0x70] sm:$0xff]
          %v1618 = vld [vmem:[#allocation17 + $0x78] sm:$0xff]
          %v1619 = vld [vmem:[%s11] sm:$0x1]
          %v1621 = vlaneseq
          %v1622 = vshrl.u32 %v1621, 7
          %v1623 = vsub.s32 0, %v1622
          %v1624 = vrot.slane %v1619, %v1623
          %1626 = vmatprep.subr.mxu0 0.0
          %1627 = vmatpush1.msra.mxu0 %v1603
          %1628 = vmatprep.subr.mxu0 0.0
          %1629 = vmatpush1.msra.mxu0 %v1604
          %1630 = vmatprep.subr.mxu0 0.0
          %1631 = vmatpush1.msra.mxu0 %v1605
          %1632 = vmatprep.subr.mxu0 0.0
          %1633 = vmatpush1.msra.mxu0 %v1606
          %1634 = vmatprep.subr.mxu0 0.0
          %1635 = vmatpush1.msra.mxu0 %v1607
          %1636 = vmatprep.subr.mxu0 0.0
          %1637 = vmatpush1.msra.mxu0 %v1608
          %1638 = vmatprep.subr.mxu0 0.0
          %1639 = vmatpush1.msra.mxu0 %v1609
          %1640 = vmatprep.subr.mxu0 0.0
          %1641 = vmatpush1.msra.mxu0 %v1610
          %1642 = vmatprep.subr.mxu0 0.0
          %1643 = vmatpush1.msra.mxu0 %v1611
          %1644 = vmatprep.subr.mxu0 0.0
          %1645 = vmatpush1.msra.mxu0 %v1612
          %1646 = vmatprep.subr.mxu0 0.0
          %1647 = vmatpush1.msra.mxu0 %v1613
          %1648 = vmatprep.subr.mxu0 0.0
          %1649 = vmatpush1.msra.mxu0 %v1614
          %1650 = vmatprep.subr.mxu0 0.0
          %1651 = vmatpush1.msra.mxu0 %v1615
          %1652 = vmatprep.subr.mxu0 0.0
          %1653 = vmatpush1.msra.mxu0 %v1616
          %1654 = vmatprep.subr.mxu0 0.0
          %1655 = vmatpush1.msra.mxu0 %v1617
          %1656 = vmatprep.subr.mxu0 0.0
          %1657 = vmatpush1.msra.mxu0 %v1618
          %1658 = vmatprep.subr.mxu0 0.0
          %1659 = vmatpush1.msra.mxu0 0.0
          %1660 = vmatprep.subr.mxu0 0.0
          %1661 = vmatpush1.msra.mxu0 0.0
          %1662 = vmatprep.subr.mxu0 0.0
          %1663 = vmatpush1.msra.mxu0 0.0
          %1664 = vmatprep.subr.mxu0 0.0
          %1665 = vmatpush1.msra.mxu0 0.0
          %1666 = vmatprep.subr.mxu0 0.0
          %1667 = vmatpush1.msra.mxu0 0.0
          %1668 = vmatprep.subr.mxu0 0.0
          %1669 = vmatpush1.msra.mxu0 0.0
          %1670 = vmatprep.subr.mxu0 0.0
          %1671 = vmatpush1.msra.mxu0 0.0
          %1672 = vmatprep.subr.mxu0 0.0
          %1673 = vmatpush1.msra.mxu0 0.0
          %1674 = vmatprep.subr.mxu0 0.0
          %1675 = vmatpush1.msra.mxu0 0.0
          %1676 = vmatprep.subr.mxu0 0.0
          %1677 = vmatpush1.msra.mxu0 0.0
          %1678 = vmatprep.subr.mxu0 0.0
          %1679 = vmatpush1.msra.mxu0 0.0
          %1680 = vmatprep.subr.mxu0 0.0
          %1681 = vmatpush1.msra.mxu0 0.0
          %1682 = vmatprep.subr.mxu0 0.0
          %1683 = vmatpush1.msra.mxu0 0.0
          %1684 = vmatprep.subr.mxu0 0.0
          %1685 = vmatpush1.msra.mxu0 0.0
          %1686 = vmatprep.subr.mxu0 0.0
          %1687 = vmatpush1.msra.mxu0 0.0
          %1688 = vmatprep.subr.mxu0 0.0
          %1689 = vmatpush1.msra.mxu0 0.0
          %1690 = vmatprep.mubr.f32.mxu0 0.0
          %1691 = vmatmul.mubr.f32.gmra.mrb[0].mxu0 %v1602
          %v1692 = vpop.f32.mrb[0].mxu0
          %v1693 = vadd.f32 %v1624, %v1692
          %v1694 = vpop.f32.mrb[0].mxu0
          %1695 = vdwg.mxu0
          %v1696 = vadd.f32 %v1507, %v1693
          %v1697 = vld [vmem:[#allocation5] sm:$0xff]
          %v1698 = vld [vmem:[#allocation5 + $0x8] sm:$0xff]
          %v1699 = vld [vmem:[%s12] sm:$0xff]
          %v1700 = vld [vmem:[%s12 + $0x8] sm:$0xff]
          %vm1701 = vcmp.eq.s32.totalorder %v1699, 0
          %vm1702 = vcmp.eq.s32.totalorder %v1700, 0
          %v1703 = vsel %vm1701, 1, 0
          %v1704 = vsel %vm1702, 1, 0
          %1705 = vset.pattern.permute.xlu0 0
          %1706 = vperm.xlu0 %1705, %v1703
          %v1707 = vpop.permute.xlu0 %1706
          %1708 = vset.pattern.permute.xlu0 0
          %1709 = vperm.xlu0 %1708, %v1704
          %v1710 = vpop.permute.xlu0 %1709
          %vm1711 = vcmp.eq.s32.totalorder %v1707, 1
          %vm1712 = vcmp.eq.s32.totalorder %v1710, 1
          %v1713 = vsel %vm1711, %v1697, -1e+30
          %v1714 = vsel %vm1712, %v1698, -1e+30
          %v1715 = vmax.f32 %v1713, %v1714
          %v1716 = vrot.slane %v1715, 4
          %v1717 = vmax.f32 %v1715, %v1716
          %v1718 = vrot.slane %v1717, 2
          %v1719 = vmax.f32 %v1717, %v1718
          %v1720 = vrot.slane %v1719, 1
          %v1721 = vmax.f32 %v1719, %v1720
          %v1722 = vcvt.s32.f32 %v1703
          %v1723 = vcvt.s32.f32 %v1704
          %vm1724 = vcmask 7168
          %v1725 = vsel %vm1724, %v1722, 0.0
          %v1726 = vsel %vm1724, %v1723, 0.0
          %v1727 = vadd.f32 %v1725, %v1726
          %v1728 = vrot.slane %v1727, 4
          %v1729 = vadd.f32 %v1727, %v1728
          %v1730 = vrot.slane %v1729, 2
          %v1731 = vadd.f32 %v1729, %v1730
          %v1732 = vrot.slane %v1731, 1
          %v1733 = vadd.f32 %v1731, %v1732
          %vm1734 = vcmp.gt.f32.partialorder %v1733, 0.0
          %v1735 = vsel %vm1734, 1, 0
          %1736 = vset.pattern.permute.xlu0 0
          %1737 = vperm.xlu0 %1736, %v1735
          %v1738 = vpop.permute.xlu0 %1737
          %vm1739 = vcmp.eq.s32.totalorder %v1738, 1
          %v1740 = vsel %vm1739, %v1721, 0.0
          %vm1741 = vcmp.eq.s32.totalorder %v1699, 1
          %vm1742 = vcmp.eq.s32.totalorder %v1700, 1
          %v1743 = vsel %vm1741, 1, 0
          %v1744 = vsel %vm1742, 1, 0
          %1745 = vset.pattern.permute.xlu0 0
          %1746 = vperm.xlu0 %1745, %v1743
          %v1747 = vpop.permute.xlu0 %1746
          %1748 = vset.pattern.permute.xlu0 0
          %1749 = vperm.xlu0 %1748, %v1744
          %v1750 = vpop.permute.xlu0 %1749
          %vm1751 = vcmp.eq.s32.totalorder %v1747, 1
          %vm1752 = vcmp.eq.s32.totalorder %v1750, 1
          %v1753 = vsel %vm1751, %v1697, -1e+30
          %v1754 = vsel %vm1752, %v1698, -1e+30
          %v1755 = vmax.f32 %v1753, %v1754
          %v1756 = vrot.slane %v1755, 4
          %v1757 = vmax.f32 %v1755, %v1756
          %v1758 = vrot.slane %v1757, 2
          %v1759 = vmax.f32 %v1757, %v1758
          %v1760 = vrot.slane %v1759, 1
          %v1761 = vmax.f32 %v1759, %v1760
          %v1762 = vcvt.s32.f32 %v1743
          %v1763 = vcvt.s32.f32 %v1744
          %v1764 = vsel %vm1724, %v1762, 0.0
          %v1765 = vsel %vm1724, %v1763, 0.0
          %v1766 = vadd.f32 %v1764, %v1765
          %v1767 = vrot.slane %v1766, 4
          %v1768 = vadd.f32 %v1766, %v1767
          %v1769 = vrot.slane %v1768, 2
          %v1770 = vadd.f32 %v1768, %v1769
          %v1771 = vrot.slane %v1770, 1
          %v1772 = vadd.f32 %v1770, %v1771
          %vm1773 = vcmp.gt.f32.partialorder %v1772, 0.0
          %v1774 = vsel %vm1773, 1, 0
          %1775 = vset.pattern.permute.xlu0 0
          %1776 = vperm.xlu0 %1775, %v1774
          %v1777 = vpop.permute.xlu0 %1776
          %vm1778 = vcmp.eq.s32.totalorder %v1777, 1
          %v1779 = vsel %vm1778, %v1761, 0.0
          %vm1780 = vcmp.eq.s32.totalorder %v1699, 2
          %vm1781 = vcmp.eq.s32.totalorder %v1700, 2
          %v1782 = vsel %vm1780, 1, 0
          %v1783 = vsel %vm1781, 1, 0
          %1784 = vset.pattern.permute.xlu0 0
          %1785 = vperm.xlu0 %1784, %v1782
          %v1786 = vpop.permute.xlu0 %1785
          %1787 = vset.pattern.permute.xlu0 0
          %1788 = vperm.xlu0 %1787, %v1783
          %v1789 = vpop.permute.xlu0 %1788
          %vm1790 = vcmp.eq.s32.totalorder %v1786, 1
          %vm1791 = vcmp.eq.s32.totalorder %v1789, 1
          %v1792 = vsel %vm1790, %v1697, -1e+30
          %v1793 = vsel %vm1791, %v1698, -1e+30
          %v1794 = vmax.f32 %v1792, %v1793
          %v1795 = vrot.slane %v1794, 4
          %v1796 = vmax.f32 %v1794, %v1795
          %v1797 = vrot.slane %v1796, 2
          %v1798 = vmax.f32 %v1796, %v1797
          %v1799 = vrot.slane %v1798, 1
          %v1800 = vmax.f32 %v1798, %v1799
          %v1801 = vcvt.s32.f32 %v1782
          %v1802 = vcvt.s32.f32 %v1783
          %v1803 = vsel %vm1724, %v1801, 0.0
          %v1804 = vsel %vm1724, %v1802, 0.0
          %v1805 = vadd.f32 %v1803, %v1804
          %v1806 = vrot.slane %v1805, 4
          %v1807 = vadd.f32 %v1805, %v1806
          %v1808 = vrot.slane %v1807, 2
          %v1809 = vadd.f32 %v1807, %v1808
          %v1810 = vrot.slane %v1809, 1
          %v1811 = vadd.f32 %v1809, %v1810
          %vm1812 = vcmp.gt.f32.partialorder %v1811, 0.0
          %v1813 = vsel %vm1812, 1, 0
          %1814 = vset.pattern.permute.xlu0 0
          %1815 = vperm.xlu0 %1814, %v1813
          %v1816 = vpop.permute.xlu0 %1815
          %vm1817 = vcmp.eq.s32.totalorder %v1816, 1
          %v1818 = vsel %vm1817, %v1800, 0.0
          %vm1819 = vcmp.eq.s32.totalorder %v1699, 3
          %vm1820 = vcmp.eq.s32.totalorder %v1700, 3
          %v1821 = vsel %vm1819, 1, 0
          %v1822 = vsel %vm1820, 1, 0
          %1823 = vset.pattern.permute.xlu0 0
          %1824 = vperm.xlu0 %1823, %v1821
          %v1825 = vpop.permute.xlu0 %1824
          %1826 = vset.pattern.permute.xlu0 0
          %1827 = vperm.xlu0 %1826, %v1822
          %v1828 = vpop.permute.xlu0 %1827
          %vm1829 = vcmp.eq.s32.totalorder %v1825, 1
          %vm1830 = vcmp.eq.s32.totalorder %v1828, 1
          %v1831 = vsel %vm1829, %v1697, -1e+30
          %v1832 = vsel %vm1830, %v1698, -1e+30
          %v1833 = vmax.f32 %v1831, %v1832
          %v1834 = vrot.slane %v1833, 4
          %v1835 = vmax.f32 %v1833, %v1834
          %v1836 = vrot.slane %v1835, 2
          %v1837 = vmax.f32 %v1835, %v1836
          %v1838 = vrot.slane %v1837, 1
          %v1839 = vmax.f32 %v1837, %v1838
          %v1840 = vcvt.s32.f32 %v1821
          %v1841 = vcvt.s32.f32 %v1822
          %v1842 = vsel %vm1724, %v1840, 0.0
          %v1843 = vsel %vm1724, %v1841, 0.0
          %v1844 = vadd.f32 %v1842, %v1843
          %v1845 = vrot.slane %v1844, 4
          %v1846 = vadd.f32 %v1844, %v1845
          %v1847 = vrot.slane %v1846, 2
          %v1848 = vadd.f32 %v1846, %v1847
          %v1849 = vrot.slane %v1848, 1
          %v1850 = vadd.f32 %v1848, %v1849
          %vm1851 = vcmp.gt.f32.partialorder %v1850, 0.0
          %v1852 = vsel %vm1851, 1, 0
          %1853 = vset.pattern.permute.xlu0 0
          %1854 = vperm.xlu0 %1853, %v1852
          %v1855 = vpop.permute.xlu0 %1854
          %vm1856 = vcmp.eq.s32.totalorder %v1855, 1
          %v1857 = vsel %vm1856, %v1839, 0.0
          %vm1858 = vcmask 1040384
          %v1859 = vsel %vm1858, %v1740, %v1779
          %vm1860 = vcmask 1041408
          %v1861 = vsel %vm1860, %v1859, %v1818
          %vm1862 = vcmask 1042432
          %v1863 = vsel %vm1862, %v1861, %v1857
          %v1864 = vld [vmem:[%s13] sm:$0xff]
          %1865 = vset.pattern.permute.xlu0 0
          %1866 = vperm.xlu0 %1865, %v1864
          %v1867 = vpop.permute.xlu0 %1866
          %vm1868 = vcmp.eq.s32.totalorder %v1362, %v1867
          %v1869 = vsel %vm1868, 1, 0
          %v1870 = vcvt.s32.f32 %v1869
          %1871 = vset.pattern.permute.xlu0 1
          %1872 = vperm.xlu0 %1871, %v1864
          %v1873 = vpop.permute.xlu0 %1872
          %vm1874 = vcmp.eq.s32.totalorder %v1362, %v1873
          %v1875 = vsel %vm1874, 1, 0
          %v1876 = vcvt.s32.f32 %v1875
          %v1877 = vld [vmem:[%s14] sm:$0xff]
          %vm1878 = vcmask 31744
          %v1880 = vsel %vm1878, %v1870, 0
          %vm1882 = vcmask 1043456
          %v1884 = vsel %vm1882, %v1863, 0
          %1886 = vmatprep.subr.mxu0 0.0
          %1887 = vmatpush1.msra.mxu0 %v1884
          %1888 = vmatprep.subr.mxu0 0.0
          %1889 = vmatpush1.msra.mxu0 0.0
          %1890 = vmatprep.subr.mxu0 0.0
          %1891 = vmatpush1.msra.mxu0 0.0
          %1892 = vmatprep.subr.mxu0 0.0
          %1893 = vmatpush1.msra.mxu0 0.0
          %1894 = vmatprep.subr.mxu0 0.0
          %1895 = vmatpush1.msra.mxu0 0.0
          %1896 = vmatprep.subr.mxu0 0.0
          %1897 = vmatpush1.msra.mxu0 0.0
          %1898 = vmatprep.subr.mxu0 0.0
          %1899 = vmatpush1.msra.mxu0 0.0
          %1900 = vmatprep.subr.mxu0 0.0
          %1901 = vmatpush1.msra.mxu0 0.0
          %1902 = vmatprep.subr.mxu0 0.0
          %1903 = vmatpush1.msra.mxu0 0.0
          %1904 = vmatprep.subr.mxu0 0.0
          %1905 = vmatpush1.msra.mxu0 0.0
          %1906 = vmatprep.subr.mxu0 0.0
          %1907 = vmatpush1.msra.mxu0 0.0
          %1908 = vmatprep.subr.mxu0 0.0
          %1909 = vmatpush1.msra.mxu0 0.0
          %1910 = vmatprep.subr.mxu0 0.0
          %1911 = vmatpush1.msra.mxu0 0.0
          %1912 = vmatprep.subr.mxu0 0.0
          %1913 = vmatpush1.msra.mxu0 0.0
          %1914 = vmatprep.subr.mxu0 0.0
          %1915 = vmatpush1.msra.mxu0 0.0
          %1916 = vmatprep.subr.mxu0 0.0
          %1917 = vmatpush1.msra.mxu0 0.0
          %1918 = vmatprep.subr.mxu0 0.0
          %1919 = vmatpush1.msra.mxu0 0.0
          %1920 = vmatprep.subr.mxu0 0.0
          %1921 = vmatpush1.msra.mxu0 0.0
          %1922 = vmatprep.subr.mxu0 0.0
          %1923 = vmatpush1.msra.mxu0 0.0
          %1924 = vmatprep.subr.mxu0 0.0
          %1925 = vmatpush1.msra.mxu0 0.0
          %1926 = vmatprep.subr.mxu0 0.0
          %1927 = vmatpush1.msra.mxu0 0.0
          %1928 = vmatprep.subr.mxu0 0.0
          %1929 = vmatpush1.msra.mxu0 0.0
          %1930 = vmatprep.subr.mxu0 0.0
          %1931 = vmatpush1.msra.mxu0 0.0
          %1932 = vmatprep.subr.mxu0 0.0
          %1933 = vmatpush1.msra.mxu0 0.0
          %1934 = vmatprep.subr.mxu0 0.0
          %1935 = vmatpush1.msra.mxu0 0.0
          %1936 = vmatprep.subr.mxu0 0.0
          %1937 = vmatpush1.msra.mxu0 0.0
          %1938 = vmatprep.subr.mxu0 0.0
          %1939 = vmatpush1.msra.mxu0 0.0
          %1940 = vmatprep.subr.mxu0 0.0
          %1941 = vmatpush1.msra.mxu0 0.0
          %1942 = vmatprep.subr.mxu0 0.0
          %1943 = vmatpush1.msra.mxu0 0.0
          %1944 = vmatprep.subr.mxu0 0.0
          %1945 = vmatpush1.msra.mxu0 0.0
          %1946 = vmatprep.subr.mxu0 0.0
          %1947 = vmatpush1.msra.mxu0 0.0
          %1948 = vmatprep.subr.mxu0 0.0
          %1949 = vmatpush1.msra.mxu0 0.0
          %1950 = vmatprep.mubr.f32.mxu0 0.0
          %1951 = vmatmul.mubr.f32.gmra.mrb[0].mxu0 %v1880
          %v1952 = vpop.f32.mrb[0].mxu0
          %v1953 = vadd.f32 %v1877, %v1952
          %v1954 = vpop.f32.mrb[0].mxu0
          %1955 = vdwg.mxu0
          %v1956 = vmax.f32 %v1953, 0.0
          %1957 = vxpose.xlu0.b32.start [1/16] %v1876, 128
          %1958 = vxpose.xlu0.b32.cont [2/16] 0.0, 128
          %1959 = vxpose.xlu0.b32.cont [3/16] 0.0, 128
          %1960 = vxpose.xlu0.b32.cont [4/16] 0.0, 128
          %1961 = vxpose.xlu0.b32.cont [5/16] 0.0, 128
          %1962 = vxpose.xlu0.b32.cont [6/16] 0.0, 128
          %1963 = vxpose.xlu0.b32.cont [7/16] 0.0, 128
          %1964 = vxpose.xlu0.b32.cont [8/16] 0.0, 128
          %1965 = vxpose.xlu0.b32.cont [9/16] 0.0, 128
          %1966 = vxpose.xlu0.b32.cont [10/16] 0.0, 128
          %1967 = vxpose.xlu0.b32.cont [11/16] 0.0, 128
          %1968 = vxpose.xlu0.b32.cont [12/16] 0.0, 128
          %1969 = vxpose.xlu0.b32.cont [13/16] 0.0, 128
          %1970 = vxpose.xlu0.b32.cont [14/16] 0.0, 128
          %1971 = vxpose.xlu0.b32.cont [15/16] 0.0, 128
          %1972 = vxpose.xlu0.b32.end [16/16] 0.0, 128
          %v1973 = vpop.trf.xlu0
          %v1974 = vpop.trf.xlu0
          %v1975 = vpop.trf.xlu0
          %v1976 = vpop.trf.xlu0
          %v1977 = vpop.trf.xlu0
          %v1978 = vpop.trf.xlu0
          %v1979 = vpop.trf.xlu0
          %v1980 = vpop.trf.xlu0
          %v1981 = vpop.trf.xlu0
          %v1982 = vpop.trf.xlu0
          %v1983 = vpop.trf.xlu0
          %v1984 = vpop.trf.xlu0
          %v1985 = vpop.trf.xlu0
          %v1986 = vpop.trf.xlu0
          %v1987 = vpop.trf.xlu0
          %v1988 = vpop.trf.xlu0
          %vm1989 = vcmask 64512
          %v1991 = vsel %vm1989, %v1973, 0
          %1993 = vmatprep.subr.mxu0 0.0
          %1994 = vmatpush1.msra.mxu0 %v1956
          %1995 = vmatprep.subr.mxu0 0.0
          %1996 = vmatpush1.msra.mxu0 0.0
          %1997 = vmatprep.subr.mxu0 0.0
          %1998 = vmatpush1.msra.mxu0 0.0
          %1999 = vmatprep.subr.mxu0 0.0
          %2000 = vmatpush1.msra.mxu0 0.0
          %2001 = vmatprep.subr.mxu0 0.0
          %2002 = vmatpush1.msra.mxu0 0.0
          %2003 = vmatprep.subr.mxu0 0.0
          %2004 = vmatpush1.msra.mxu0 0.0
          %2005 = vmatprep.subr.mxu0 0.0
          %2006 = vmatpush1.msra.mxu0 0.0
          %2007 = vmatprep.subr.mxu0 0.0
          %2008 = vmatpush1.msra.mxu0 0.0
          %2009 = vmatprep.subr.mxu0 0.0
          %2010 = vmatpush1.msra.mxu0 0.0
          %2011 = vmatprep.subr.mxu0 0.0
          %2012 = vmatpush1.msra.mxu0 0.0
          %2013 = vmatprep.subr.mxu0 0.0
          %2014 = vmatpush1.msra.mxu0 0.0
          %2015 = vmatprep.subr.mxu0 0.0
          %2016 = vmatpush1.msra.mxu0 0.0
          %2017 = vmatprep.subr.mxu0 0.0
          %2018 = vmatpush1.msra.mxu0 0.0
          %2019 = vmatprep.subr.mxu0 0.0
          %2020 = vmatpush1.msra.mxu0 0.0
          %2021 = vmatprep.subr.mxu0 0.0
          %2022 = vmatpush1.msra.mxu0 0.0
          %2023 = vmatprep.subr.mxu0 0.0
          %2024 = vmatpush1.msra.mxu0 0.0
          %2025 = vmatprep.subr.mxu0 0.0
          %2026 = vmatpush1.msra.mxu0 0.0
          %2027 = vmatprep.subr.mxu0 0.0
          %2028 = vmatpush1.msra.mxu0 0.0
          %2029 = vmatprep.subr.mxu0 0.0
          %2030 = vmatpush1.msra.mxu0 0.0
          %2031 = vmatprep.subr.mxu0 0.0
          %2032 = vmatpush1.msra.mxu0 0.0
          %2033 = vmatprep.subr.mxu0 0.0
          %2034 = vmatpush1.msra.mxu0 0.0
          %2035 = vmatprep.subr.mxu0 0.0
          %2036 = vmatpush1.msra.mxu0 0.0
          %2037 = vmatprep.subr.mxu0 0.0
          %2038 = vmatpush1.msra.mxu0 0.0
          %2039 = vmatprep.subr.mxu0 0.0
          %2040 = vmatpush1.msra.mxu0 0.0
          %2041 = vmatprep.subr.mxu0 0.0
          %2042 = vmatpush1.msra.mxu0 0.0
          %2043 = vmatprep.subr.mxu0 0.0
          %2044 = vmatpush1.msra.mxu0 0.0
          %2045 = vmatprep.subr.mxu0 0.0
          %2046 = vmatpush1.msra.mxu0 0.0
          %2047 = vmatprep.subr.mxu0 0.0
          %2048 = vmatpush1.msra.mxu0 0.0
          %2049 = vmatprep.subr.mxu0 0.0
          %2050 = vmatpush1.msra.mxu0 0.0
          %2051 = vmatprep.subr.mxu0 0.0
          %2052 = vmatpush1.msra.mxu0 0.0
          %2053 = vmatprep.subr.mxu0 0.0
          %2054 = vmatpush1.msra.mxu0 0.0
          %2055 = vmatprep.subr.mxu0 0.0
          %2056 = vmatpush1.msra.mxu0 0.0
          %2057 = vmatprep.mubr.f32.mxu0 0.0
          %2058 = vmatmul.mubr.f32.gmra.mrb[0].mxu0 %v1991
          %v2059 = vpop.f32.mrb[0].mxu0
          %v2060 = vadd.f32 0.0, %v2059
          %v2061 = vpop.f32.mrb[0].mxu0
          %2062 = vdwg.mxu0
          %s2063 = sld [smem:[#allocation4]]
          %s2064 = sadd.f32 %s2063, 1.0
          %v2065 = vstv %s2064
          %v2066 = vmul.f32 %v2065, %v1863
          %v2067 = vadd.f32 %v2066, %v2060
          %v2068 = vld [vmem:[#allocation19] sm:$0xff]
          %v2069 = vld [vmem:[#allocation19 + $0x8] sm:$0xff]
          %v2070 = vld [vmem:[#allocation19 + $0x10] sm:$0xff]
          %v2071 = vld [vmem:[#allocation19 + $0x18] sm:$0xff]
          %v2072 = vld [vmem:[#allocation19 + $0x20] sm:$0xff]
          %v2073 = vld [vmem:[#allocation19 + $0x28] sm:$0xff]
          %v2074 = vld [vmem:[#allocation19 + $0x30] sm:$0xff]
          %v2075 = vld [vmem:[#allocation19 + $0x38] sm:$0xff]
          %v2076 = vld [vmem:[#allocation19 + $0x40] sm:$0xff]
          %v2077 = vld [vmem:[#allocation19 + $0x48] sm:$0xff]
          %v2078 = vld [vmem:[#allocation19 + $0x50] sm:$0xff]
          %v2079 = vld [vmem:[#allocation19 + $0x58] sm:$0xff]
          %v2080 = vld [vmem:[#allocation19 + $0x60] sm:$0xff]
          %v2081 = vld [vmem:[#allocation19 + $0x68] sm:$0xff]
          %v2082 = vld [vmem:[#allocation19 + $0x70] sm:$0xff]
          %v2083 = vld [vmem:[#allocation19 + $0x78] sm:$0xff]
          %v2084 = vld [vmem:[%s16] sm:$0x1]
          %v2086 = vlaneseq
          %v2087 = vshrl.u32 %v2086, 7
          %v2088 = vsub.s32 0, %v2087
          %v2089 = vrot.slane %v2084, %v2088
          %2091 = vmatprep.subr.mxu0 0.0
          %2092 = vmatpush1.msra.mxu0 %v2068
          %2093 = vmatprep.subr.mxu0 0.0
          %2094 = vmatpush1.msra.mxu0 %v2069
          %2095 = vmatprep.subr.mxu0 0.0
          %2096 = vmatpush1.msra.mxu0 %v2070
          %2097 = vmatprep.subr.mxu0 0.0
          %2098 = vmatpush1.msra.mxu0 %v2071
          %2099 = vmatprep.subr.mxu0 0.0
          %2100 = vmatpush1.msra.mxu0 %v2072
          %2101 = vmatprep.subr.mxu0 0.0
          %2102 = vmatpush1.msra.mxu0 %v2073
          %2103 = vmatprep.subr.mxu0 0.0
          %2104 = vmatpush1.msra.mxu0 %v2074
          %2105 = vmatprep.subr.mxu0 0.0
          %2106 = vmatpush1.msra.mxu0 %v2075
          %2107 = vmatprep.subr.mxu0 0.0
          %2108 = vmatpush1.msra.mxu0 %v2076
          %2109 = vmatprep.subr.mxu0 0.0
          %2110 = vmatpush1.msra.mxu0 %v2077
          %2111 = vmatprep.subr.mxu0 0.0
          %2112 = vmatpush1.msra.mxu0 %v2078
          %2113 = vmatprep.subr.mxu0 0.0
          %2114 = vmatpush1.msra.mxu0 %v2079
          %2115 = vmatprep.subr.mxu0 0.0
          %2116 = vmatpush1.msra.mxu0 %v2080
          %2117 = vmatprep.subr.mxu0 0.0
          %2118 = vmatpush1.msra.mxu0 %v2081
          %2119 = vmatprep.subr.mxu0 0.0
          %2120 = vmatpush1.msra.mxu0 %v2082
          %2121 = vmatprep.subr.mxu0 0.0
          %2122 = vmatpush1.msra.mxu0 %v2083
          %2123 = vmatprep.subr.mxu0 0.0
          %2124 = vmatpush1.msra.mxu0 0.0
          %2125 = vmatprep.subr.mxu0 0.0
          %2126 = vmatpush1.msra.mxu0 0.0
          %2127 = vmatprep.subr.mxu0 0.0
          %2128 = vmatpush1.msra.mxu0 0.0
          %2129 = vmatprep.subr.mxu0 0.0
          %2130 = vmatpush1.msra.mxu0 0.0
          %2131 = vmatprep.subr.mxu0 0.0
          %2132 = vmatpush1.msra.mxu0 0.0
          %2133 = vmatprep.subr.mxu0 0.0
          %2134 = vmatpush1.msra.mxu0 0.0
          %2135 = vmatprep.subr.mxu0 0.0
          %2136 = vmatpush1.msra.mxu0 0.0
          %2137 = vmatprep.subr.mxu0 0.0
          %2138 = vmatpush1.msra.mxu0 0.0
          %2139 = vmatprep.subr.mxu0 0.0
          %2140 = vmatpush1.msra.mxu0 0.0
          %2141 = vmatprep.subr.mxu0 0.0
          %2142 = vmatpush1.msra.mxu0 0.0
          %2143 = vmatprep.subr.mxu0 0.0
          %2144 = vmatpush1.msra.mxu0 0.0
          %2145 = vmatprep.subr.mxu0 0.0
          %2146 = vmatpush1.msra.mxu0 0.0
          %2147 = vmatprep.subr.mxu0 0.0
          %2148 = vmatpush1.msra.mxu0 0.0
          %2149 = vmatprep.subr.mxu0 0.0
          %2150 = vmatpush1.msra.mxu0 0.0
          %2151 = vmatprep.subr.mxu0 0.0
          %2152 = vmatpush1.msra.mxu0 0.0
          %2153 = vmatprep.subr.mxu0 0.0
          %2154 = vmatpush1.msra.mxu0 0.0
          %2155 = vmatprep.mubr.f32.mxu0 0.0
          %2156 = vmatmul.mubr.f32.gmra.mrb[0].mxu0 %v2067
          %v2157 = vpop.f32.mrb[0].mxu0
          %v2158 = vadd.f32 %v2089, %v2157
          %v2159 = vpop.f32.mrb[0].mxu0
          %2160 = vdwg.mxu0
          %v2161 = vsel %vm1882, %v2158, 0.0
          %v2162 = vrot.slane %v2161, 4
          %v2163 = vadd.f32 %v2161, %v2162
          %v2164 = vrot.slane %v2163, 2
          %v2165 = vadd.f32 %v2163, %v2164
          %v2166 = vrot.slane %v2165, 1
          %v2167 = vadd.f32 %v2165, %v2166
          %v2168 = vrcp.pop 4.0
          %v2169 = vmul.f32 %v2167, %v2168
          %v2170 = vsub.f32 %v2158, %v2169
          %v2171 = vmul.f32 %v2170, %v2170
          %v2172 = vsel %vm1882, %v2171, 0.0
          %v2173 = vrot.slane %v2172, 4
          %v2174 = vadd.f32 %v2172, %v2173
          %v2175 = vrot.slane %v2174, 2
          %v2176 = vadd.f32 %v2174, %v2175
          %v2177 = vrot.slane %v2176, 1
          %v2178 = vadd.f32 %v2176, %v2177
          %v2179 = vmul.f32 %v2178, %v2168
          %v2180 = vadd.f32 %v2179, 1e-05
          %v2181 = vrsqrt.pop %v2180
          %v2182 = vmul.f32 %v2170, %v2181
          %v2183 = vld [vmem:[%s17] sm:$0x1]
          %v2185 = vlaneseq
          %v2186 = vshrl.u32 %v2185, 7
          %v2187 = vsub.s32 0, %v2186
          %v2188 = vrot.slane %v2183, %v2187
          %v2190 = vmul.f32 %v2182, %v2188
          %v2191 = vld [vmem:[%s18] sm:$0x1]
          %v2193 = vlaneseq
          %v2194 = vshrl.u32 %v2193, 7
          %v2195 = vsub.s32 0, %v2194
          %v2196 = vrot.slane %v2191, %v2195
          %v2198 = vadd.f32 %v2190, %v2196
          %v2199 = vmax.f32 %v2198, 0.0
          %v2200 = vld [vmem:[#allocation20] sm:$0xff]
          %v2201 = vld [vmem:[#allocation20 + $0x8] sm:$0xff]
          %v2202 = vld [vmem:[#allocation20 + $0x10] sm:$0xff]
          %v2203 = vld [vmem:[#allocation20 + $0x18] sm:$0xff]
          %v2204 = vld [vmem:[#allocation20 + $0x20] sm:$0xff]
          %v2205 = vld [vmem:[#allocation20 + $0x28] sm:$0xff]
          %v2206 = vld [vmem:[#allocation20 + $0x30] sm:$0xff]
          %v2207 = vld [vmem:[#allocation20 + $0x38] sm:$0xff]
          %v2208 = vld [vmem:[#allocation20 + $0x40] sm:$0xff]
          %v2209 = vld [vmem:[#allocation20 + $0x48] sm:$0xff]
          %v2210 = vld [vmem:[#allocation20 + $0x50] sm:$0xff]
          %v2211 = vld [vmem:[#allocation20 + $0x58] sm:$0xff]
          %v2212 = vld [vmem:[#allocation20 + $0x60] sm:$0xff]
          %v2213 = vld [vmem:[#allocation20 + $0x68] sm:$0xff]
          %v2214 = vld [vmem:[#allocation20 + $0x70] sm:$0xff]
          %v2215 = vld [vmem:[#allocation20 + $0x78] sm:$0xff]
          %v2216 = vld [vmem:[%s20] sm:$0x1]
          %v2218 = vlaneseq
          %v2219 = vshrl.u32 %v2218, 7
          %v2220 = vsub.s32 0, %v2219
          %v2221 = vrot.slane %v2216, %v2220
          %2223 = vmatprep.subr.mxu0 0.0
          %2224 = vmatpush1.msra.mxu0 %v2200
          %2225 = vmatprep.subr.mxu0 0.0
          %2226 = vmatpush1.msra.mxu0 %v2201
          %2227 = vmatprep.subr.mxu0 0.0
          %2228 = vmatpush1.msra.mxu0 %v2202
          %2229 = vmatprep.subr.mxu0 0.0
          %2230 = vmatpush1.msra.mxu0 %v2203
          %2231 = vmatprep.subr.mxu0 0.0
          %2232 = vmatpush1.msra.mxu0 %v2204
          %2233 = vmatprep.subr.mxu0 0.0
          %2234 = vmatpush1.msra.mxu0 %v2205
          %2235 = vmatprep.subr.mxu0 0.0
          %2236 = vmatpush1.msra.mxu0 %v2206
          %2237 = vmatprep.subr.mxu0 0.0
          %2238 = vmatpush1.msra.mxu0 %v2207
          %2239 = vmatprep.subr.mxu0 0.0
          %2240 = vmatpush1.msra.mxu0 %v2208
          %2241 = vmatprep.subr.mxu0 0.0
          %2242 = vmatpush1.msra.mxu0 %v2209
          %2243 = vmatprep.subr.mxu0 0.0
          %2244 = vmatpush1.msra.mxu0 %v2210
          %2245 = vmatprep.subr.mxu0 0.0
          %2246 = vmatpush1.msra.mxu0 %v2211
          %2247 = vmatprep.subr.mxu0 0.0
          %2248 = vmatpush1.msra.mxu0 %v2212
          %2249 = vmatprep.subr.mxu0 0.0
          %2250 = vmatpush1.msra.mxu0 %v2213
          %2251 = vmatprep.subr.mxu0 0.0
          %2252 = vmatpush1.msra.mxu0 %v2214
          %2253 = vmatprep.subr.mxu0 0.0
          %2254 = vmatpush1.msra.mxu0 %v2215
          %2255 = vmatprep.subr.mxu0 0.0
          %2256 = vmatpush1.msra.mxu0 0.0
          %2257 = vmatprep.subr.mxu0 0.0
          %2258 = vmatpush1.msra.mxu0 0.0
          %2259 = vmatprep.subr.mxu0 0.0
          %2260 = vmatpush1.msra.mxu0 0.0
          %2261 = vmatprep.subr.mxu0 0.0
          %2262 = vmatpush1.msra.mxu0 0.0
          %2263 = vmatprep.subr.mxu0 0.0
          %2264 = vmatpush1.msra.mxu0 0.0
          %2265 = vmatprep.subr.mxu0 0.0
          %2266 = vmatpush1.msra.mxu0 0.0
          %2267 = vmatprep.subr.mxu0 0.0
          %2268 = vmatpush1.msra.mxu0 0.0
          %2269 = vmatprep.subr.mxu0 0.0
          %2270 = vmatpush1.msra.mxu0 0.0
          %2271 = vmatprep.subr.mxu0 0.0
          %2272 = vmatpush1.msra.mxu0 0.0
          %2273 = vmatprep.subr.mxu0 0.0
          %2274 = vmatpush1.msra.mxu0 0.0
          %2275 = vmatprep.subr.mxu0 0.0
          %2276 = vmatpush1.msra.mxu0 0.0
          %2277 = vmatprep.subr.mxu0 0.0
          %2278 = vmatpush1.msra.mxu0 0.0
          %2279 = vmatprep.subr.mxu0 0.0
          %2280 = vmatpush1.msra.mxu0 0.0
          %2281 = vmatprep.subr.mxu0 0.0
          %2282 = vmatpush1.msra.mxu0 0.0
          %2283 = vmatprep.subr.mxu0 0.0
          %2284 = vmatpush1.msra.mxu0 0.0
          %2285 = vmatprep.subr.mxu0 0.0
          %2286 = vmatpush1.msra.mxu0 0.0
          %2287 = vmatprep.mubr.f32.mxu0 0.0
          %2288 = vmatmul.mubr.f32.gmra.mrb[0].mxu0 %v2199
          %v2289 = vpop.f32.mrb[0].mxu0
          %v2290 = vadd.f32 %v2221, %v2289
          %v2291 = vpop.f32.mrb[0].mxu0
          %2292 = vdwg.mxu0
          %v2293 = vsel %vm1882, %v2290, 0.0
          %v2294 = vrot.slane %v2293, 4
          %v2295 = vadd.f32 %v2293, %v2294
          %v2296 = vrot.slane %v2295, 2
          %v2297 = vadd.f32 %v2295, %v2296
          %v2298 = vrot.slane %v2297, 1
          %v2299 = vadd.f32 %v2297, %v2298
          %v2300 = vmul.f32 %v2299, %v2168
          %v2301 = vsub.f32 %v2290, %v2300
          %v2302 = vmul.f32 %v2301, %v2301
          %v2303 = vsel %vm1882, %v2302, 0.0
          %v2304 = vrot.slane %v2303, 4
          %v2305 = vadd.f32 %v2303, %v2304
          %v2306 = vrot.slane %v2305, 2
          %v2307 = vadd.f32 %v2305, %v2306
          %v2308 = vrot.slane %v2307, 1
          %v2309 = vadd.f32 %v2307, %v2308
          %v2310 = vmul.f32 %v2309, %v2168
          %v2311 = vadd.f32 %v2310, 1e-05
          %v2312 = vrsqrt.pop %v2311
          %v2313 = vmul.f32 %v2301, %v2312
          %v2314 = vld [vmem:[%s21] sm:$0x1]
          %v2316 = vlaneseq
          %v2317 = vshrl.u32 %v2316, 7
          %v2318 = vsub.s32 0, %v2317
          %v2319 = vrot.slane %v2314, %v2318
          %v2321 = vmul.f32 %v2313, %v2319
          %v2322 = vld [vmem:[%s22] sm:$0x1]
          %v2324 = vlaneseq
          %v2325 = vshrl.u32 %v2324, 7
          %v2326 = vsub.s32 0, %v2325
          %v2327 = vrot.slane %v2322, %v2326
          %v2329 = vadd.f32 %v2321, %v2327
          %s2330 = scalar_lea.vmem %s12, %s865
          %v2331 = vld [vmem:[%s2330] sm:$0xff]
          %2332 = vset.pattern.permute.xlu0 0
          %2333 = vperm.xlu0 %2332, %v2331
          %v2334 = vpop.permute.xlu0 %2333
          %vm2335 = vcmp.eq.s32.totalorder %v1362, %v2334
          %v2336 = vsel %vm2335, 1, 0
          %v2337 = vcvt.s32.f32 %v2336
          %v2339 = vsel %vm1878, %v2337, 0
          %v2342 = vsel %vm1882, %v2329, 0
          %2344 = vmatprep.subr.mxu0 0.0
          %2345 = vmatpush1.msra.mxu0 %v2342
          %2346 = vmatprep.subr.mxu0 0.0
          %2347 = vmatpush1.msra.mxu0 0.0
          %2348 = vmatprep.subr.mxu0 0.0
          %2349 = vmatpush1.msra.mxu0 0.0
          %2350 = vmatprep.subr.mxu0 0.0
          %2351 = vmatpush1.msra.mxu0 0.0
          %2352 = vmatprep.subr.mxu0 0.0
          %2353 = vmatpush1.msra.mxu0 0.0
          %2354 = vmatprep.subr.mxu0 0.0
          %2355 = vmatpush1.msra.mxu0 0.0
          %2356 = vmatprep.subr.mxu0 0.0
          %2357 = vmatpush1.msra.mxu0 0.0
          %2358 = vmatprep.subr.mxu0 0.0
          %2359 = vmatpush1.msra.mxu0 0.0
          %2360 = vmatprep.subr.mxu0 0.0
          %2361 = vmatpush1.msra.mxu0 0.0
          %2362 = vmatprep.subr.mxu0 0.0
          %2363 = vmatpush1.msra.mxu0 0.0
          %2364 = vmatprep.subr.mxu0 0.0
          %2365 = vmatpush1.msra.mxu0 0.0
          %2366 = vmatprep.subr.mxu0 0.0
          %2367 = vmatpush1.msra.mxu0 0.0
          %2368 = vmatprep.subr.mxu0 0.0
          %2369 = vmatpush1.msra.mxu0 0.0
          %2370 = vmatprep.subr.mxu0 0.0
          %2371 = vmatpush1.msra.mxu0 0.0
          %2372 = vmatprep.subr.mxu0 0.0
          %2373 = vmatpush1.msra.mxu0 0.0
          %2374 = vmatprep.subr.mxu0 0.0
          %2375 = vmatpush1.msra.mxu0 0.0
          %2376 = vmatprep.subr.mxu0 0.0
          %2377 = vmatpush1.msra.mxu0 0.0
          %2378 = vmatprep.subr.mxu0 0.0
          %2379 = vmatpush1.msra.mxu0 0.0
          %2380 = vmatprep.subr.mxu0 0.0
          %2381 = vmatpush1.msra.mxu0 0.0
          %2382 = vmatprep.subr.mxu0 0.0
          %2383 = vmatpush1.msra.mxu0 0.0
          %2384 = vmatprep.subr.mxu0 0.0
          %2385 = vmatpush1.msra.mxu0 0.0
          %2386 = vmatprep.subr.mxu0 0.0
          %2387 = vmatpush1.msra.mxu0 0.0
          %2388 = vmatprep.subr.mxu0 0.0
          %2389 = vmatpush1.msra.mxu0 0.0
          %2390 = vmatprep.subr.mxu0 0.0
          %2391 = vmatpush1.msra.mxu0 0.0
          %2392 = vmatprep.subr.mxu0 0.0
          %2393 = vmatpush1.msra.mxu0 0.0
          %2394 = vmatprep.subr.mxu0 0.0
          %2395 = vmatpush1.msra.mxu0 0.0
          %2396 = vmatprep.subr.mxu0 0.0
          %2397 = vmatpush1.msra.mxu0 0.0
          %2398 = vmatprep.subr.mxu0 0.0
          %2399 = vmatpush1.msra.mxu0 0.0
          %2400 = vmatprep.subr.mxu0 0.0
          %2401 = vmatpush1.msra.mxu0 0.0
          %2402 = vmatprep.subr.mxu0 0.0
          %2403 = vmatpush1.msra.mxu0 0.0
          %2404 = vmatprep.subr.mxu0 0.0
          %2405 = vmatpush1.msra.mxu0 0.0
          %2406 = vmatprep.subr.mxu0 0.0
          %2407 = vmatpush1.msra.mxu0 0.0
          %2408 = vmatprep.mubr.f32.mxu0 0.0
          %2409 = vmatmul.mubr.f32.gmra.mrb[0].mxu0 %v2339
          %v2410 = vpop.f32.mrb[0].mxu0
          %v2411 = vadd.f32 0.0, %v2410
          %v2412 = vpop.f32.mrb[0].mxu0
          %2413 = vdwg.mxu0
          %v2414 = vadd.f32 %v1696, %v2411
          %2415 = vst [vmem:[%s857] sm:$0xff] %v2414
        $region160: #{tpu_custom_call.1} parent=111 // pred_fallthru
          _
        %s2416 = sand.u32 %s552, 1
        %s2417 = scalar_lea.sflag [#allocation7], %s2416
        %s2418 = sand.u32 %s552, 1
        %s2419 = smul.addr %s2418, 8
        %s2420 = scalar_lea.vmem [#allocation22], %s2419
        // Predicated region
        $region161: #{tpu_custom_call.1} parent=111 // pred_check
          %p2421 = pneg %p562
        $region162: #{tpu_custom_call.1} parent=111 // pred_check_branch
          %2423 = sbr.rel (%p2421) target = $region164
        $region163: #{tpu_custom_call.1} parent=111 // pred_region
          %s2425 = ssub.s32 128, 128
          %2426 = vsyncadd %s2417, %s2425
          %s2427 = smul.addr %s48, 128
          %s2428 = scalar_lea.hbm %s23, %s2427
          %s2430 = sshll.u32 %s2420, 4
          %s2431 = int_to_ptr.vmem [resolvable:$true] %s2430
          %2433 = dma.vmem_to_hbm [thread:$0]  %s2431, 128, %s2428, %s2417
        $region164: #{tpu_custom_call.1} parent=111 // pred_fallthru
          _
      $region112: #{tpu_custom_call.1} parent=5 // pred_fallthru
        _
      %p2434 = scmp.le.s32.totalorder 2, %s39
      // Predicated region
      $region165: #{tpu_custom_call.1} parent=5 // pred_check
        %p2435 = pneg %p2434
      $region166: #{tpu_custom_call.1} parent=5 // pred_check_branch
        %2437 = sbr.rel (%p2435) target = $region168
      $region167: #{tpu_custom_call.1} parent=5 // pred_region
        %s2438 = ssub.s32 %s39, 2
        // Predicated region
        $region169: #{tpu_custom_call.1} parent=167 // pred_check
          %p2439 = pneg %p568
        $region170: #{tpu_custom_call.1} parent=167 // pred_check_branch
          %2441 = sbr.rel (%p2439) target = $region172
        $region171: #{tpu_custom_call.1} parent=167 // pred_region
          %s2442 = sand.u32 %s553, 1
          %s2443 = scalar_lea.sflag [#allocation7], %s2442
          %s2444 = sand.u32 %s553, 1
          %s2445 = smul.addr %s2444, 8
          %s2446 = scalar_lea.vmem [#allocation22], %s2445
          %2447 = dma.done %s2443, 128
        $region172: #{tpu_custom_call.1} parent=167 // pred_fallthru
          _
      $region168: #{tpu_custom_call.1} parent=5 // pred_fallthru
        _
    $region6: #{tpu_custom_call.1} parent=1 // loop_footer
      %s43 = sadd.s32 1, %s39
    $region7: #{tpu_custom_call.1} parent=1 // loop_footer_branch
      %38 = sbr.rel target = $region3
    $region8: #{tpu_custom_call.1} parent=1 // loop_exit
      _
    %2448 = vsyncpa [#allocation6], 1
    %s2449 = scalar_lea.sflag [#allocation6], 1
    %2450 = vsyncpa %s2449, 1
    %2451 = vsyncpa [#allocation9], 1
    %2452 = vsyncpa [#allocation12], 1
    %2453 = vsyncpa [#allocation15], 1
    %2454 = vsyncpa [#allocation18], 1
    %2455 = vsyncpa [#allocation21], 1
    %2456 = vsyncpa [#allocation7], 1
    %s2457 = scalar_lea.sflag [#allocation7], 1
    %2458 = vsyncpa %s2457, 1

</llo_original>
